<compile_context>
chip_gen: v5e
topology: v5e:2x2
jax: 0.10.0
libtpu: 0.0.40
codegen_flags: <defaults>
</compile_context>

<pallas_src>
import jax
import jax.numpy as jnp
from jax import lax
from jax.experimental import pallas as pl
from jax.experimental.pallas import tpu as pltpu


def _sigmoid(x):
    # sigmoid(x) == 0.5 * (1 + tanh(x/2)): one EUP push (tanh) instead of
    # exp + reciprocal; the extra mul/add rides in spare VALU slots.
    return 0.5 * (1.0 + jnp.tanh(0.5 * x))


# ------------------------- Pallas bidirectional LSTM kernel ------------------
def bilstm_kernel(emb_ref, wih_ref, whh_ref, bias_ref,
                  out_ref, hN_ref, cN_ref, h_sc, c_sc):
    """One grid step = one direction (d) x one block of Tb timesteps.

    emb_ref : (Tb, B, E)  bf16 embedded tokens for this time block
    wih_ref : (E, 4H)     bf16 input-projection weight for this direction
    whh_ref : (H, 4H)     bf16 recurrent weight for this direction
    bias_ref: (1, 4H)     f32  (b_ih + b_hh), gate order i,f,g,o
    out_ref : (Tb, B, H)  this direction's half of the (T, B, 2H) output
    hN/cN   : (B, H)      this direction's half of the final (B, 2H) state
    h_sc/c_sc: (B, H)     f32 VMEM-carried recurrent state
    """
    d = pl.program_id(0)        # 0 = forward, 1 = backward
    tb = pl.program_id(1)       # time-block index (sequential, "arbitrary")
    Tb = out_ref.shape[0]
    H = out_ref.shape[-1]

    # initHidden -> zeros at the start of each direction's time sweep.
    @pl.when(tb == 0)
    def _init():
        h_sc[...] = jnp.zeros_like(h_sc)
        c_sc[...] = jnp.zeros_like(c_sc)

    # Hoisted per-grid-step loads (constant across the unrolled time loop).
    wih = wih_ref[...]          # bf16
    whh = whh_ref[...]          # bf16
    bias = bias_ref[...]        # f32, (1, 4H)

    def _sweep(reverse):
        # Statically-indexed unrolled sweep: no per-step dynamic index /
        # scalar-slot address math for the backward direction.
        # TODO(synk): sweep partial unroll (2/4) at production B,H to avoid
        # inflating live ranges into a spill-bound regime.
        h = h_sc[...]
        c = c_sc[...]
        ts = range(Tb - 1, -1, -1) if reverse else range(Tb)
        for t in ts:
            # Fused input projection: x_t @ W_ih^T + b computed on the MXU here
            # (replaces streaming a precomputed f32 (T,B,4H) gx from HBM).
            # It has no dependence on h, so it overlaps the recurrent chain.
            gates = (jnp.dot(emb_ref[t], wih,
                             preferred_element_type=jnp.float32)
                     + bias
                     + jnp.dot(h.astype(whh.dtype), whh,
                               preferred_element_type=jnp.float32))
            # H % 128 == 0 -> lane-aligned gate slices (no XLU shuffles).
            i_g = _sigmoid(gates[:, 0 * H:1 * H])
            f_g = _sigmoid(gates[:, 1 * H:2 * H])
            g_g = jnp.tanh(gates[:, 2 * H:3 * H])
            o_g = _sigmoid(gates[:, 3 * H:4 * H])
            c = f_g * c + i_g * g_g
            h = o_g * jnp.tanh(c)
            out_ref[t] = h
        h_sc[...] = h
        c_sc[...] = c

    @pl.when(d == 0)
    def _forward():
        _sweep(False)

    @pl.when(d == 1)
    def _backward():
        _sweep(True)

    # Write final (h, c) only once, at the last time block of this direction.
    # (Resident accumulator: hN/cN block index is constant over the tb axis.)
    @pl.when(tb == pl.num_programs(1) - 1)
    def _finalize():
        hN_ref[...] = h_sc[...]
        cN_ref[...] = c_sc[...]


def _choose_time_block(T, B, E, H, vmem_limit_bytes, max_tb=8):
    """Largest divisor of T that fits the VMEM budget (and <= max_tb)."""
    # Per-timestep VMEM: double-buffered bf16 emb block + f32 out block.
    bytes_per_t = 2 * (B * E * 2 + B * H * 4)
    # Tb-independent: double-buffered bf16 weights + f32 bias, f32 carries,
    # and headroom for in-flight gate temps.
    fixed = (2 * (E * 4 * H * 2 + H * 4 * H * 2 + 4 * H * 4)
             + 2 * B * H * 4 + 8 * B * 4 * H * 4)
    budget = max(vmem_limit_bytes // 2 - fixed, bytes_per_t)
    cap = max(1, min(T, max_tb, budget // bytes_per_t))
    tb = 1
    for cand in range(1, cap + 1):
        if T % cand == 0:
            tb = cand
    return tb


def run_bilstm(emb, w_ih_stack, w_hh_stack, bias_stack, *,
               time_block=None, core_parallel_directions=False,
               vmem_limit_bytes=48 * 1024 * 1024):
    """emb: (T, B, E) bf16; weights: (2, E, 4H) / (2, H, 4H) bf16; bias (2,1,4H) f32.

    Returns (outputs (T,B,2H) f32, hN (B,2H) f32, cN (B,2H) f32) directly in the
    concatenated fwd||bwd layout (no XLA concatenate pass).
    """
    T, B, E = emb.shape
    H = w_hh_stack.shape[1]
    assert H % 128 == 0, (
        "per-direction hidden size must be a multiple of 128 (lane-aligned "
        "gate slices and H-wide blocks over the 2H output axis)")
    Tb = (_choose_time_block(T, B, E, H, vmem_limit_bytes)
          if time_block is None else time_block)
    assert T % Tb == 0
    nT = T // Tb

    def t_blk(d, tb):
        # Forward reads time blocks 0..nT-1; backward reads nT-1..0.
        # Reversal via index_map is free (no HBM [::-1] pass).
        return (1 - d) * tb + d * (nT - 1 - tb)

    if core_parallel_directions:
        # v7x: genuinely shard the two independent recurrences across the 2 TCs.
        dim_sem = (pltpu.CORE_PARALLEL, pltpu.ARBITRARY)
    else:
        dim_sem = ("parallel", "arbitrary")
    # TODO(synk): on single-TC chips (v5e/v6e) interleave the fwd step at t
    # with the bwd step at T-1-t in one sweep to hide MXU/EUP latency.

    out_shape = (
        jax.ShapeDtypeStruct((T, B, 2 * H), jnp.float32),   # outputs (fwd||bwd)
        jax.ShapeDtypeStruct((B, 2 * H), jnp.float32),      # final h (fwd||bwd)
        jax.ShapeDtypeStruct((B, 2 * H), jnp.float32),      # final c (fwd||bwd)
    )
    # TODO(synk): pipeline_mode=pl.Buffered(1) on the weight/bias specs would
    # reclaim their double-buffer VMEM (their block index is constant in tb).
    return pl.pallas_call(
        bilstm_kernel,
        out_shape=out_shape,
        grid_spec=pltpu.PrefetchScalarGridSpec(
            num_scalar_prefetch=0,
            grid=(2, nT),
            in_specs=[
                # bf16 embeddings: block of Tb timesteps per grid step.
                pl.BlockSpec((Tb, B, E), lambda d, tb: (t_blk(d, tb), 0, 0)),
                # per-direction weights / bias (constant over the time axis).
                pl.BlockSpec((None, E, 4 * H), lambda d, tb: (d, 0, 0)),
                pl.BlockSpec((None, H, 4 * H), lambda d, tb: (d, 0, 0)),
                pl.BlockSpec((None, 1, 4 * H), lambda d, tb: (d, 0, 0)),
            ],
            out_specs=[
                # Direct concatenated layout: direction d writes the H-wide
                # column block d of the (T, B, 2H) output.
                pl.BlockSpec((Tb, B, H), lambda d, tb: (t_blk(d, tb), 0, d)),
                # Resident accumulators: constant block index over the
                # "arbitrary" tb axis (required for correctness -- do not
                # change these index_maps without revisiting _finalize).
                pl.BlockSpec((B, H), lambda d, tb: (0, d)),
                pl.BlockSpec((B, H), lambda d, tb: (0, d)),
            ],
            scratch_shapes=[
                pltpu.VMEM((B, H), jnp.float32),   # h carry
                pltpu.VMEM((B, H), jnp.float32),   # c carry
            ],
        ),
        compiler_params=pltpu.CompilerParams(
            dimension_semantics=dim_sem,
            vmem_limit_bytes=vmem_limit_bytes),
    )(emb, w_ih_stack, w_hh_stack, bias_stack)


# ----------------------------- Parameter setup --------------------------------
def xavier_normal(key, shape):
    fan_out, fan_in = shape[0], shape[1]
    std = jnp.sqrt(2.0 / (fan_in + fan_out))
    return std * jax.random.normal(key, shape, dtype=jnp.float32)


def init_encoder_params(key, num_embeddings, embedding_dim, hidden_size):
    """Mirrors Encoder.__init__ / init_parameters (bidirectional LSTM, 1 layer)."""
    H = hidden_size // 2            # per-direction hidden size
    E = embedding_dim
    keys = jax.random.split(key, 5)
    # PyTorch weight_{ih,hh}_l0{,_reverse}: xavier_normal_; biases: constant_(0)
    w_ih = jnp.stack([xavier_normal(keys[1], (4 * H, E)),
                      xavier_normal(keys[3], (4 * H, E))])        # (2, 4H, E)
    w_hh = jnp.stack([xavier_normal(keys[2], (4 * H, H)),
                      xavier_normal(keys[4], (4 * H, H))])        # (2, 4H, H)
    return {
        # nn.Embedding default init N(0,1) (copied from given `embedding`)
        "embedding": jax.random.normal(keys[0], (num_embeddings, E), jnp.float32),
        # bf16 weight storage (halves HBM/VMEM traffic); f32 accumulation and
        # f32 gate elementwise math are kept inside the kernel.
        "w_ih_stack": jnp.transpose(w_ih, (0, 2, 1)).astype(jnp.bfloat16),  # (2,E,4H)
        "w_hh_stack": jnp.transpose(w_hh, (0, 2, 1)).astype(jnp.bfloat16),  # (2,H,4H)
        "bias_stack": jnp.zeros((2, 1, 4 * H), jnp.float32),     # b_ih + b_hh
    }


# ----------------------------- Encoder forward --------------------------------
def encoder_forward(params, src_seqs, *, core_parallel_directions=False):
    """src_seqs: (T, B) int32.  Returns (outputs, (h, c)) like Encoder.forward."""
    # Embedding lookup (gather; stays in plain JAX).
    # TODO(synk): fuse the gather into the kernel via scalar-prefetched token
    # ids to avoid materializing (T, B, E) in HBM.
    emb = jnp.take(params["embedding"], src_seqs, axis=0)          # (T, B, E) f32
    emb = emb.astype(jnp.bfloat16)                                 # bf16 stream

    outputs, hN, cN = run_bilstm(
        emb, params["w_ih_stack"], params["w_hh_stack"], params["bias_stack"],
        core_parallel_directions=core_parallel_directions)

    # outputs already (T, B, 2H) with fwd||bwd; hN/cN already (B, 2H).
    # _cat_directions is therefore just adding the layer axis.
    # nn.LSTM applies no dropout when num_layers == 1.
    return outputs, (hN[None], cN[None])


# ----------------------------- pure-JAX reference ------------------------------
def _lstm_ref_direction(emb_bf16, w_ih, w_hh, bias, reverse):
    B = emb_bf16.shape[1]
    H = w_hh.shape[0]
    xs = emb_bf16[::-1] if reverse else emb_bf16

    def step(carry, x):
        h, c = carry
        gates = (jnp.dot(x, w_ih, preferred_element_type=jnp.float32) + bias
                 + jnp.dot(h.astype(jnp.bfloat16), w_hh,
                           preferred_element_type=jnp.float32))
        i_g = _sigmoid(gates[:, 0 * H:1 * H])
        f_g = _sigmoid(gates[:, 1 * H:2 * H])
        g_g = jnp.tanh(gates[:, 2 * H:3 * H])
        o_g = _sigmoid(gates[:, 3 * H:4 * H])
        c_new = f_g * c + i_g * g_g
        h_new = o_g * jnp.tanh(c_new)
        return (h_new, c_new), h_new

    init = (jnp.zeros((B, H), jnp.float32), jnp.zeros((B, H), jnp.float32))
    (hN, cN), out = lax.scan(step, init, xs)
    if reverse:
        out = out[::-1]
    return out, hN, cN


def encoder_forward_ref(params, src_seqs):
    emb = jnp.take(params["embedding"], src_seqs, axis=0).astype(jnp.bfloat16)
    outs, hs, cs = [], [], []
    for d in range(2):
        o, h, c = _lstm_ref_direction(
            emb, params["w_ih_stack"][d], params["w_hh_stack"][d],
            params["bias_stack"][d], reverse=(d == 1))
        outs.append(o); hs.append(h); cs.append(c)
    outputs = jnp.concatenate(outs, axis=-1)
    h = jnp.concatenate(hs, axis=-1)[None]
    c = jnp.concatenate(cs, axis=-1)[None]
    return outputs, (h, c)


# ----------------------------------- main --------------------------------------
if __name__ == "__main__":
    # Small shapes consistent with the module defaults:
    # hidden_size=256 -> per-direction H=128 (lane-aligned), B=8 (sublane).
    T, B = 8, 8                 # seq_len, batch
    VOCAB, E = 50, 32           # num_embeddings, embedding_dim
    HIDDEN = 256                # Encoder hidden_size (per-direction = 128)

    key = jax.random.PRNGKey(0)
    k_params, k_tokens = jax.random.split(key)
    params = init_encoder_params(k_params, VOCAB, E, HIDDEN)

    src_seqs = jax.random.randint(k_tokens, (T, B), 0, VOCAB, dtype=jnp.int32)

    outputs, (h, c) = jax.jit(encoder_forward)(params, src_seqs)
    jax.block_until_ready((outputs, h, c))

    assert outputs.shape == (T, B, HIDDEN)
    assert h.shape == (1, B, HIDDEN)
    assert c.shape == (1, B, HIDDEN)

    # Correctness check against a pure-JAX reference LSTM (same bf16 inputs,
    # same f32 accumulation and gate math).
    ref_out, (ref_h, ref_c) = jax.jit(encoder_forward_ref)(params, src_seqs)
    assert jnp.allclose(outputs, ref_out, atol=5e-3, rtol=5e-3)
    assert jnp.allclose(h, ref_h, atol=5e-3, rtol=5e-3)
    assert jnp.allclose(c, ref_c, atol=5e-3, rtol=5e-3)

    print("KERNEL_OK")
</pallas_src>

<mosaic_0001>
module attributes {stable_mosaic.version = 11 : i64} {
  func.func @bilstm_kernel(%arg0: i32, %arg1: i32, %arg2: memref<8x8x32xbf16, #tpu.memory_space<vmem>>, %arg3: memref<1x32x512xbf16, #tpu.memory_space<vmem>>, %arg4: memref<1x128x512xbf16, #tpu.memory_space<vmem>>, %arg5: memref<1x1x512xf32, #tpu.memory_space<vmem>>, %arg6: memref<8x8x128xf32, #tpu.memory_space<vmem>>, %arg7: memref<8x128xf32, #tpu.memory_space<vmem>>, %arg8: memref<8x128xf32, #tpu.memory_space<vmem>>, %arg9: memref<8x128xf32, #tpu.memory_space<vmem>>, %arg10: memref<8x128xf32, #tpu.memory_space<vmem>>) attributes {dimension_semantics = [#tpu.dimension_semantics<parallel>, #tpu.dimension_semantics<arbitrary>], iteration_bounds = array<i64: 2, 1>, scalar_prefetch = 0 : i64, scratch_operands = 2 : i64, tpu.core_type = #tpu.core_type<tc>, window_params = [{transform_indices = @transform_0, window_bounds = array<i64: 8, 8, 32>}, {transform_indices = @transform_1, window_bounds = array<i64: 1, 32, 512>}, {transform_indices = @transform_2, window_bounds = array<i64: 1, 128, 512>}, {transform_indices = @transform_3, window_bounds = array<i64: 1, 1, 512>}, {transform_indices = @transform_4, window_bounds = array<i64: 8, 8, 128>}, {transform_indices = @transform_5, window_bounds = array<i64: 8, 128>}, {transform_indices = @transform_6, window_bounds = array<i64: 8, 128>}]} {
    %c0_i32 = arith.constant 0 : i32
    %0 = arith.cmpi eq, %arg1, %c0_i32 : i32
    %1 = arith.extui %0 : i1 to i32
    %c0_i32_0 = arith.constant 0 : i32
    %2 = arith.cmpi ne, %1, %c0_i32_0 : i32
    scf.if %2 {
      %cst = arith.constant 0.000000e+00 : f32
      %18 = vector.broadcast %cst : f32 to vector<8x128xf32>
      %c0_14 = arith.constant 0 : index
      %c0_15 = arith.constant 0 : index
      %19 = vector.load %arg9[%c0_14, %c0_15] : memref<8x128xf32, #tpu.memory_space<vmem>>, vector<8x128xf32>
      tpu.vector_store %arg9[%c0_14, %c0_15], %18 {strides = array<i32>} : memref<8x128xf32, #tpu.memory_space<vmem>>, vector<8x128xf32>,
      %cst_16 = arith.constant 0.000000e+00 : f32
      %20 = vector.broadcast %cst_16 : f32 to vector<8x128xf32>
      %c0_17 = arith.constant 0 : index
      %c0_18 = arith.constant 0 : index
      %21 = vector.load %arg10[%c0_17, %c0_18] : memref<8x128xf32, #tpu.memory_space<vmem>>, vector<8x128xf32>
      tpu.vector_store %arg10[%c0_17, %c0_18], %20 {strides = array<i32>} : memref<8x128xf32, #tpu.memory_space<vmem>>, vector<8x128xf32>,
    } else {
    }
    %c0 = arith.constant 0 : index
    %c0_1 = arith.constant 0 : index
    %c0_2 = arith.constant 0 : index
    %3 = vector.load %arg3[%c0, %c0_1, %c0_2] : memref<1x32x512xbf16, #tpu.memory_space<vmem>>, vector<1x32x512xbf16>
    %4 = vector.shape_cast %3 : vector<1x32x512xbf16> to vector<32x512xbf16>
    %c0_3 = arith.constant 0 : index
    %c0_4 = arith.constant 0 : index
    %c0_5 = arith.constant 0 : index
    %5 = vector.load %arg4[%c0_3, %c0_4, %c0_5] : memref<1x128x512xbf16, #tpu.memory_space<vmem>>, vector<1x128x512xbf16>
    %6 = vector.shape_cast %5 : vector<1x128x512xbf16> to vector<128x512xbf16>
    %c0_6 = arith.constant 0 : index
    %c0_7 = arith.constant 0 : index
    %c0_8 = arith.constant 0 : index
    %7 = vector.load %arg5[%c0_6, %c0_7, %c0_8] : memref<1x1x512xf32, #tpu.memory_space<vmem>>, vector<1x1x512xf32>
    %8 = vector.shape_cast %7 : vector<1x1x512xf32> to vector<1x512xf32>
    %c0_i32_9 = arith.constant 0 : i32
    %9 = arith.cmpi eq, %arg0, %c0_i32_9 : i32
    %10 = arith.extui %9 : i1 to i32
    %c0_i32_10 = arith.constant 0 : i32
    %11 = arith.cmpi ne, %10, %c0_i32_10 : i32
    scf.if %11 {
      %c0_14 = arith.constant 0 : index
      %c0_15 = arith.constant 0 : index
      %18 = vector.load %arg9[%c0_14, %c0_15] : memref<8x128xf32, #tpu.memory_space<vmem>>, vector<8x128xf32>
      %c0_16 = arith.constant 0 : index
      %c0_17 = arith.constant 0 : index
      %19 = vector.load %arg10[%c0_16, %c0_17] : memref<8x128xf32, #tpu.memory_space<vmem>>, vector<8x128xf32>
      %c0_18 = arith.constant 0 : index
      %c0_19 = arith.constant 0 : index
      %c0_20 = arith.constant 0 : index
      %20 = vector.load %arg2[%c0_18, %c0_19, %c0_20] : memref<8x8x32xbf16, #tpu.memory_space<vmem>>, vector<1x8x32xbf16>
      %21 = vector.shape_cast %20 : vector<1x8x32xbf16> to vector<8x32xbf16>
      %cst = arith.constant dense<0.000000e+00> : vector<8x512xf32>
      %22 = tpu.matmul %21, %4, %cst {dimension_numbers = #tpu.dot_dimension_numbers<[1], [0], [0], [1], [0, 0, 1, 1], [], []>} : vector<8x32xbf16>, vector<32x512xbf16>, vector<8x512xf32> -> vector<8x512xf32>
      %23 = vector.broadcast %8 : vector<1x512xf32> to vector<8x512xf32>
      %24 = arith.addf %22, %23 : vector<8x512xf32>
      %25 = arith.truncf %18 : vector<8x128xf32> to vector<8x128xbf16>
      %cst_21 = arith.constant dense<0.000000e+00> : vector<8x512xf32>
      %26 = tpu.matmul %25, %6, %cst_21 {dimension_numbers = #tpu.dot_dimension_numbers<[1], [0], [0], [1], [0, 0, 1, 1], [], []>} : vector<8x128xbf16>, vector<128x512xbf16>, vector<8x512xf32> -> vector<8x512xf32>
      %27 = arith.addf %24, %26 : vector<8x512xf32>
      %28 = vector.extract_strided_slice %27 {offsets = [0, 0], sizes = [8, 128], strides = [1, 1]} : vector<8x512xf32> to vector<8x128xf32>
      %cst_22 = arith.constant 5.000000e-01 : f32
      %29 = vector.broadcast %cst_22 : f32 to vector<8x128xf32>
      %30 = arith.mulf %29, %28 : vector<8x128xf32>
      %31 = math.tanh %30 : vector<8x128xf32>
      %cst_23 = arith.constant 1.000000e+00 : f32
      %32 = vector.broadcast %cst_23 : f32 to vector<8x128xf32>
      %33 = arith.addf %32, %31 : vector<8x128xf32>
      %cst_24 = arith.constant 5.000000e-01 : f32
      %34 = vector.broadcast %cst_24 : f32 to vector<8x128xf32>
      %35 = arith.mulf %34, %33 : vector<8x128xf32>
      %36 = vector.extract_strided_slice %27 {offsets = [0, 128], sizes = [8, 128], strides = [1, 1]} : vector<8x512xf32> to vector<8x128xf32>
      %cst_25 = arith.constant 5.000000e-01 : f32
      %37 = vector.broadcast %cst_25 : f32 to vector<8x128xf32>
      %38 = arith.mulf %37, %36 : vector<8x128xf32>
      %39 = math.tanh %38 : vector<8x128xf32>
      %cst_26 = arith.constant 1.000000e+00 : f32
      %40 = vector.broadcast %cst_26 : f32 to vector<8x128xf32>
      %41 = arith.addf %40, %39 : vector<8x128xf32>
      %cst_27 = arith.constant 5.000000e-01 : f32
      %42 = vector.broadcast %cst_27 : f32 to vector<8x128xf32>
      %43 = arith.mulf %42, %41 : vector<8x128xf32>
      %44 = vector.extract_strided_slice %27 {offsets = [0, 256], sizes = [8, 128], strides = [1, 1]} : vector<8x512xf32> to vector<8x128xf32>
      %45 = math.tanh %44 : vector<8x128xf32>
      %46 = vector.extract_strided_slice %27 {offsets = [0, 384], sizes = [8, 128], strides = [1, 1]} : vector<8x512xf32> to vector<8x128xf32>
      %cst_28 = arith.constant 5.000000e-01 : f32
      %47 = vector.broadcast %cst_28 : f32 to vector<8x128xf32>
      %48 = arith.mulf %47, %46 : vector<8x128xf32>
      %49 = math.tanh %48 : vector<8x128xf32>
      %cst_29 = arith.constant 1.000000e+00 : f32
      %50 = vector.broadcast %cst_29 : f32 to vector<8x128xf32>
      %51 = arith.addf %50, %49 : vector<8x128xf32>
      %cst_30 = arith.constant 5.000000e-01 : f32
      %52 = vector.broadcast %cst_30 : f32 to vector<8x128xf32>
      %53 = arith.mulf %52, %51 : vector<8x128xf32>
      %54 = arith.mulf %43, %19 : vector<8x128xf32>
      %55 = arith.mulf %35, %45 : vector<8x128xf32>
      %56 = arith.addf %54, %55 : vector<8x128xf32>
      %57 = math.tanh %56 : vector<8x128xf32>
      %58 = arith.mulf %53, %57 : vector<8x128xf32>
      %c0_31 = arith.constant 0 : index
      %c0_32 = arith.constant 0 : index
      %c0_33 = arith.constant 0 : index
      %59 = vector.load %arg6[%c0_31, %c0_32, %c0_33] : memref<8x8x128xf32, #tpu.memory_space<vmem>>, vector<1x8x128xf32>
      %60 = vector.shape_cast %59 : vector<1x8x128xf32> to vector<8x128xf32>
      %61 = vector.shape_cast %58 : vector<8x128xf32> to vector<1x8x128xf32>
      tpu.vector_store %arg6[%c0_31, %c0_32, %c0_33], %61 {strides = array<i32>} : memref<8x8x128xf32, #tpu.memory_space<vmem>>, vector<1x8x128xf32>,
      %c1 = arith.constant 1 : index
      %c0_34 = arith.constant 0 : index
      %c0_35 = arith.constant 0 : index
      %62 = vector.load %arg2[%c1, %c0_34, %c0_35] : memref<8x8x32xbf16, #tpu.memory_space<vmem>>, vector<1x8x32xbf16>
      %63 = vector.shape_cast %62 : vector<1x8x32xbf16> to vector<8x32xbf16>
      %cst_36 = arith.constant dense<0.000000e+00> : vector<8x512xf32>
      %64 = tpu.matmul %63, %4, %cst_36 {dimension_numbers = #tpu.dot_dimension_numbers<[1], [0], [0], [1], [0, 0, 1, 1], [], []>} : vector<8x32xbf16>, vector<32x512xbf16>, vector<8x512xf32> -> vector<8x512xf32>
      %65 = vector.broadcast %8 : vector<1x512xf32> to vector<8x512xf32>
      %66 = arith.addf %64, %65 : vector<8x512xf32>
      %67 = arith.truncf %58 : vector<8x128xf32> to vector<8x128xbf16>
      %cst_37 = arith.constant dense<0.000000e+00> : vector<8x512xf32>
      %68 = tpu.matmul %67, %6, %cst_37 {dimension_numbers = #tpu.dot_dimension_numbers<[1], [0], [0], [1], [0, 0, 1, 1], [], []>} : vector<8x128xbf16>, vector<128x512xbf16>, vector<8x512xf32> -> vector<8x512xf32>
      %69 = arith.addf %66, %68 : vector<8x512xf32>
      %70 = vector.extract_strided_slice %69 {offsets = [0, 0], sizes = [8, 128], strides = [1, 1]} : vector<8x512xf32> to vector<8x128xf32>
      %cst_38 = arith.constant 5.000000e-01 : f32
      %71 = vector.broadcast %cst_38 : f32 to vector<8x128xf32>
      %72 = arith.mulf %71, %70 : vector<8x128xf32>
      %73 = math.tanh %72 : vector<8x128xf32>
      %cst_39 = arith.constant 1.000000e+00 : f32
      %74 = vector.broadcast %cst_39 : f32 to vector<8x128xf32>
      %75 = arith.addf %74, %73 : vector<8x128xf32>
      %cst_40 = arith.constant 5.000000e-01 : f32
      %76 = vector.broadcast %cst_40 : f32 to vector<8x128xf32>
      %77 = arith.mulf %76, %75 : vector<8x128xf32>
      %78 = vector.extract_strided_slice %69 {offsets = [0, 128], sizes = [8, 128], strides = [1, 1]} : vector<8x512xf32> to vector<8x128xf32>
      %cst_41 = arith.constant 5.000000e-01 : f32
      %79 = vector.broadcast %cst_41 : f32 to vector<8x128xf32>
      %80 = arith.mulf %79, %78 : vector<8x128xf32>
      %81 = math.tanh %80 : vector<8x128xf32>
      %cst_42 = arith.constant 1.000000e+00 : f32
      %82 = vector.broadcast %cst_42 : f32 to vector<8x128xf32>
      %83 = arith.addf %82, %81 : vector<8x128xf32>
      %cst_43 = arith.constant 5.000000e-01 : f32
      %84 = vector.broadcast %cst_43 : f32 to vector<8x128xf32>
      %85 = arith.mulf %84, %83 : vector<8x128xf32>
      %86 = vector.extract_strided_slice %69 {offsets = [0, 256], sizes = [8, 128], strides = [1, 1]} : vector<8x512xf32> to vector<8x128xf32>
      %87 = math.tanh %86 : vector<8x128xf32>
      %88 = vector.extract_strided_slice %69 {offsets = [0, 384], sizes = [8, 128], strides = [1, 1]} : vector<8x512xf32> to vector<8x128xf32>
      %cst_44 = arith.constant 5.000000e-01 : f32
      %89 = vector.broadcast %cst_44 : f32 to vector<8x128xf32>
      %90 = arith.mulf %89, %88 : vector<8x128xf32>
      %91 = math.tanh %90 : vector<8x128xf32>
      %cst_45 = arith.constant 1.000000e+00 : f32
      %92 = vector.broadcast %cst_45 : f32 to vector<8x128xf32>
      %93 = arith.addf %92, %91 : vector<8x128xf32>
      %cst_46 = arith.constant 5.000000e-01 : f32
      %94 = vector.broadcast %cst_46 : f32 to vector<8x128xf32>
      %95 = arith.mulf %94, %93 : vector<8x128xf32>
      %96 = arith.mulf %85, %56 : vector<8x128xf32>
      %97 = arith.mulf %77, %87 : vector<8x128xf32>
      %98 = arith.addf %96, %97 : vector<8x128xf32>
      %99 = math.tanh %98 : vector<8x128xf32>
      %100 = arith.mulf %95, %99 : vector<8x128xf32>
      %c1_47 = arith.constant 1 : index
      %c0_48 = arith.constant 0 : index
      %c0_49 = arith.constant 0 : index
      %101 = vector.load %arg6[%c1_47, %c0_48, %c0_49] : memref<8x8x128xf32, #tpu.memory_space<vmem>>, vector<1x8x128xf32>
      %102 = vector.shape_cast %101 : vector<1x8x128xf32> to vector<8x128xf32>
      %103 = vector.shape_cast %100 : vector<8x128xf32> to vector<1x8x128xf32>
      tpu.vector_store %arg6[%c1_47, %c0_48, %c0_49], %103 {strides = array<i32>} : memref<8x8x128xf32, #tpu.memory_space<vmem>>, vector<1x8x128xf32>,
      %c2 = arith.constant 2 : index
      %c0_50 = arith.constant 0 : index
      %c0_51 = arith.constant 0 : index
      %104 = vector.load %arg2[%c2, %c0_50, %c0_51] : memref<8x8x32xbf16, #tpu.memory_space<vmem>>, vector<1x8x32xbf16>
      %105 = vector.shape_cast %104 : vector<1x8x32xbf16> to vector<8x32xbf16>
      %cst_52 = arith.constant dense<0.000000e+00> : vector<8x512xf32>
      %106 = tpu.matmul %105, %4, %cst_52 {dimension_numbers = #tpu.dot_dimension_numbers<[1], [0], [0], [1], [0, 0, 1, 1], [], []>} : vector<8x32xbf16>, vector<32x512xbf16>, vector<8x512xf32> -> vector<8x512xf32>
      %107 = vector.broadcast %8 : vector<1x512xf32> to vector<8x512xf32>
      %108 = arith.addf %106, %107 : vector<8x512xf32>
      %109 = arith.truncf %100 : vector<8x128xf32> to vector<8x128xbf16>
      %cst_53 = arith.constant dense<0.000000e+00> : vector<8x512xf32>
      %110 = tpu.matmul %109, %6, %cst_53 {dimension_numbers = #tpu.dot_dimension_numbers<[1], [0], [0], [1], [0, 0, 1, 1], [], []>} : vector<8x128xbf16>, vector<128x512xbf16>, vector<8x512xf32> -> vector<8x512xf32>
      %111 = arith.addf %108, %110 : vector<8x512xf32>
      %112 = vector.extract_strided_slice %111 {offsets = [0, 0], sizes = [8, 128], strides = [1, 1]} : vector<8x512xf32> to vector<8x128xf32>
      %cst_54 = arith.constant 5.000000e-01 : f32
      %113 = vector.broadcast %cst_54 : f32 to vector<8x128xf32>
      %114 = arith.mulf %113, %112 : vector<8x128xf32>
      %115 = math.tanh %114 : vector<8x128xf32>
      %cst_55 = arith.constant 1.000000e+00 : f32
      %116 = vector.broadcast %cst_55 : f32 to vector<8x128xf32>
      %117 = arith.addf %116, %115 : vector<8x128xf32>
      %cst_56 = arith.constant 5.000000e-01 : f32
      %118 = vector.broadcast %cst_56 : f32 to vector<8x128xf32>
      %119 = arith.mulf %118, %117 : vector<8x128xf32>
      %120 = vector.extract_strided_slice %111 {offsets = [0, 128], sizes = [8, 128], strides = [1, 1]} : vector<8x512xf32> to vector<8x128xf32>
      %cst_57 = arith.constant 5.000000e-01 : f32
      %121 = vector.broadcast %cst_57 : f32 to vector<8x128xf32>
      %122 = arith.mulf %121, %120 : vector<8x128xf32>
      %123 = math.tanh %122 : vector<8x128xf32>
      %cst_58 = arith.constant 1.000000e+00 : f32
      %124 = vector.broadcast %cst_58 : f32 to vector<8x128xf32>
      %125 = arith.addf %124, %123 : vector<8x128xf32>
      %cst_59 = arith.constant 5.000000e-01 : f32
      %126 = vector.broadcast %cst_59 : f32 to vector<8x128xf32>
      %127 = arith.mulf %126, %125 : vector<8x128xf32>
      %128 = vector.extract_strided_slice %111 {offsets = [0, 256], sizes = [8, 128], strides = [1, 1]} : vector<8x512xf32> to vector<8x128xf32>
      %129 = math.tanh %128 : vector<8x128xf32>
      %130 = vector.extract_strided_slice %111 {offsets = [0, 384], sizes = [8, 128], strides = [1, 1]} : vector<8x512xf32> to vector<8x128xf32>
      %cst_60 = arith.constant 5.000000e-01 : f32
      %131 = vector.broadcast %cst_60 : f32 to vector<8x128xf32>
      %132 = arith.mulf %131, %130 : vector<8x128xf32>
      %133 = math.tanh %132 : vector<8x128xf32>
      %cst_61 = arith.constant 1.000000e+00 : f32
      %134 = vector.broadcast %cst_61 : f32 to vector<8x128xf32>
      %135 = arith.addf %134, %133 : vector<8x128xf32>
      %cst_62 = arith.constant 5.000000e-01 : f32
      %136 = vector.broadcast %cst_62 : f32 to vector<8x128xf32>
      %137 = arith.mulf %136, %135 : vector<8x128xf32>
      %138 = arith.mulf %127, %98 : vector<8x128xf32>
      %139 = arith.mulf %119, %129 : vector<8x128xf32>
      %140 = arith.addf %138, %139 : vector<8x128xf32>
      %141 = math.tanh %140 : vector<8x128xf32>
      %142 = arith.mulf %137, %141 : vector<8x128xf32>
      %c2_63 = arith.constant 2 : index
      %c0_64 = arith.constant 0 : index
      %c0_65 = arith.constant 0 : index
      %143 = vector.load %arg6[%c2_63, %c0_64, %c0_65] : memref<8x8x128xf32, #tpu.memory_space<vmem>>, vector<1x8x128xf32>
      %144 = vector.shape_cast %143 : vector<1x8x128xf32> to vector<8x128xf32>
      %145 = vector.shape_cast %142 : vector<8x128xf32> to vector<1x8x128xf32>
      tpu.vector_store %arg6[%c2_63, %c0_64, %c0_65], %145 {strides = array<i32>} : memref<8x8x128xf32, #tpu.memory_space<vmem>>, vector<1x8x128xf32>,
      %c3 = arith.constant 3 : index
      %c0_66 = arith.constant 0 : index
      %c0_67 = arith.constant 0 : index
      %146 = vector.load %arg2[%c3, %c0_66, %c0_67] : memref<8x8x32xbf16, #tpu.memory_space<vmem>>, vector<1x8x32xbf16>
      %147 = vector.shape_cast %146 : vector<1x8x32xbf16> to vector<8x32xbf16>
      %cst_68 = arith.constant dense<0.000000e+00> : vector<8x512xf32>
      %148 = tpu.matmul %147, %4, %cst_68 {dimension_numbers = #tpu.dot_dimension_numbers<[1], [0], [0], [1], [0, 0, 1, 1], [], []>} : vector<8x32xbf16>, vector<32x512xbf16>, vector<8x512xf32> -> vector<8x512xf32>
      %149 = vector.broadcast %8 : vector<1x512xf32> to vector<8x512xf32>
      %150 = arith.addf %148, %149 : vector<8x512xf32>
      %151 = arith.truncf %142 : vector<8x128xf32> to vector<8x128xbf16>
      %cst_69 = arith.constant dense<0.000000e+00> : vector<8x512xf32>
      %152 = tpu.matmul %151, %6, %cst_69 {dimension_numbers = #tpu.dot_dimension_numbers<[1], [0], [0], [1], [0, 0, 1, 1], [], []>} : vector<8x128xbf16>, vector<128x512xbf16>, vector<8x512xf32> -> vector<8x512xf32>
      %153 = arith.addf %150, %152 : vector<8x512xf32>
      %154 = vector.extract_strided_slice %153 {offsets = [0, 0], sizes = [8, 128], strides = [1, 1]} : vector<8x512xf32> to vector<8x128xf32>
      %cst_70 = arith.constant 5.000000e-01 : f32
      %155 = vector.broadcast %cst_70 : f32 to vector<8x128xf32>
      %156 = arith.mulf %155, %154 : vector<8x128xf32>
      %157 = math.tanh %156 : vector<8x128xf32>
      %cst_71 = arith.constant 1.000000e+00 : f32
      %158 = vector.broadcast %cst_71 : f32 to vector<8x128xf32>
      %159 = arith.addf %158, %157 : vector<8x128xf32>
      %cst_72 = arith.constant 5.000000e-01 : f32
      %160 = vector.broadcast %cst_72 : f32 to vector<8x128xf32>
      %161 = arith.mulf %160, %159 : vector<8x128xf32>
      %162 = vector.extract_strided_slice %153 {offsets = [0, 128], sizes = [8, 128], strides = [1, 1]} : vector<8x512xf32> to vector<8x128xf32>
      %cst_73 = arith.constant 5.000000e-01 : f32
      %163 = vector.broadcast %cst_73 : f32 to vector<8x128xf32>
      %164 = arith.mulf %163, %162 : vector<8x128xf32>
      %165 = math.tanh %164 : vector<8x128xf32>
      %cst_74 = arith.constant 1.000000e+00 : f32
      %166 = vector.broadcast %cst_74 : f32 to vector<8x128xf32>
      %167 = arith.addf %166, %165 : vector<8x128xf32>
      %cst_75 = arith.constant 5.000000e-01 : f32
      %168 = vector.broadcast %cst_75 : f32 to vector<8x128xf32>
      %169 = arith.mulf %168, %167 : vector<8x128xf32>
      %170 = vector.extract_strided_slice %153 {offsets = [0, 256], sizes = [8, 128], strides = [1, 1]} : vector<8x512xf32> to vector<8x128xf32>
      %171 = math.tanh %170 : vector<8x128xf32>
      %172 = vector.extract_strided_slice %153 {offsets = [0, 384], sizes = [8, 128], strides = [1, 1]} : vector<8x512xf32> to vector<8x128xf32>
      %cst_76 = arith.constant 5.000000e-01 : f32
      %173 = vector.broadcast %cst_76 : f32 to vector<8x128xf32>
      %174 = arith.mulf %173, %172 : vector<8x128xf32>
      %175 = math.tanh %174 : vector<8x128xf32>
      %cst_77 = arith.constant 1.000000e+00 : f32
      %176 = vector.broadcast %cst_77 : f32 to vector<8x128xf32>
      %177 = arith.addf %176, %175 : vector<8x128xf32>
      %cst_78 = arith.constant 5.000000e-01 : f32
      %178 = vector.broadcast %cst_78 : f32 to vector<8x128xf32>
      %179 = arith.mulf %178, %177 : vector<8x128xf32>
      %180 = arith.mulf %169, %140 : vector<8x128xf32>
      %181 = arith.mulf %161, %171 : vector<8x128xf32>
      %182 = arith.addf %180, %181 : vector<8x128xf32>
      %183 = math.tanh %182 : vector<8x128xf32>
      %184 = arith.mulf %179, %183 : vector<8x128xf32>
      %c3_79 = arith.constant 3 : index
      %c0_80 = arith.constant 0 : index
      %c0_81 = arith.constant 0 : index
      %185 = vector.load %arg6[%c3_79, %c0_80, %c0_81] : memref<8x8x128xf32, #tpu.memory_space<vmem>>, vector<1x8x128xf32>
      %186 = vector.shape_cast %185 : vector<1x8x128xf32> to vector<8x128xf32>
      %187 = vector.shape_cast %184 : vector<8x128xf32> to vector<1x8x128xf32>
      tpu.vector_store %arg6[%c3_79, %c0_80, %c0_81], %187 {strides = array<i32>} : memref<8x8x128xf32, #tpu.memory_space<vmem>>, vector<1x8x128xf32>,
      %c4 = arith.constant 4 : index
      %c0_82 = arith.constant 0 : index
      %c0_83 = arith.constant 0 : index
      %188 = vector.load %arg2[%c4, %c0_82, %c0_83] : memref<8x8x32xbf16, #tpu.memory_space<vmem>>, vector<1x8x32xbf16>
      %189 = vector.shape_cast %188 : vector<1x8x32xbf16> to vector<8x32xbf16>
      %cst_84 = arith.constant dense<0.000000e+00> : vector<8x512xf32>
      %190 = tpu.matmul %189, %4, %cst_84 {dimension_numbers = #tpu.dot_dimension_numbers<[1], [0], [0], [1], [0, 0, 1, 1], [], []>} : vector<8x32xbf16>, vector<32x512xbf16>, vector<8x512xf32> -> vector<8x512xf32>
      %191 = vector.broadcast %8 : vector<1x512xf32> to vector<8x512xf32>
      %192 = arith.addf %190, %191 : vector<8x512xf32>
      %193 = arith.truncf %184 : vector<8x128xf32> to vector<8x128xbf16>
      %cst_85 = arith.constant dense<0.000000e+00> : vector<8x512xf32>
      %194 = tpu.matmul %193, %6, %cst_85 {dimension_numbers = #tpu.dot_dimension_numbers<[1], [0], [0], [1], [0, 0, 1, 1], [], []>} : vector<8x128xbf16>, vector<128x512xbf16>, vector<8x512xf32> -> vector<8x512xf32>
      %195 = arith.addf %192, %194 : vector<8x512xf32>
      %196 = vector.extract_strided_slice %195 {offsets = [0, 0], sizes = [8, 128], strides = [1, 1]} : vector<8x512xf32> to vector<8x128xf32>
      %cst_86 = arith.constant 5.000000e-01 : f32
      %197 = vector.broadcast %cst_86 : f32 to vector<8x128xf32>
      %198 = arith.mulf %197, %196 : vector<8x128xf32>
      %199 = math.tanh %198 : vector<8x128xf32>
      %cst_87 = arith.constant 1.000000e+00 : f32
      %200 = vector.broadcast %cst_87 : f32 to vector<8x128xf32>
      %201 = arith.addf %200, %199 : vector<8x128xf32>
      %cst_88 = arith.constant 5.000000e-01 : f32
      %202 = vector.broadcast %cst_88 : f32 to vector<8x128xf32>
      %203 = arith.mulf %202, %201 : vector<8x128xf32>
      %204 = vector.extract_strided_slice %195 {offsets = [0, 128], sizes = [8, 128], strides = [1, 1]} : vector<8x512xf32> to vector<8x128xf32>
      %cst_89 = arith.constant 5.000000e-01 : f32
      %205 = vector.broadcast %cst_89 : f32 to vector<8x128xf32>
      %206 = arith.mulf %205, %204 : vector<8x128xf32>
      %207 = math.tanh %206 : vector<8x128xf32>
      %cst_90 = arith.constant 1.000000e+00 : f32
      %208 = vector.broadcast %cst_90 : f32 to vector<8x128xf32>
      %209 = arith.addf %208, %207 : vector<8x128xf32>
      %cst_91 = arith.constant 5.000000e-01 : f32
      %210 = vector.broadcast %cst_91 : f32 to vector<8x128xf32>
      %211 = arith.mulf %210, %209 : vector<8x128xf32>
      %212 = vector.extract_strided_slice %195 {offsets = [0, 256], sizes = [8, 128], strides = [1, 1]} : vector<8x512xf32> to vector<8x128xf32>
      %213 = math.tanh %212 : vector<8x128xf32>
      %214 = vector.extract_strided_slice %195 {offsets = [0, 384], sizes = [8, 128], strides = [1, 1]} : vector<8x512xf32> to vector<8x128xf32>
      %cst_92 = arith.constant 5.000000e-01 : f32
      %215 = vector.broadcast %cst_92 : f32 to vector<8x128xf32>
      %216 = arith.mulf %215, %214 : vector<8x128xf32>
      %217 = math.tanh %216 : vector<8x128xf32>
      %cst_93 = arith.constant 1.000000e+00 : f32
      %218 = vector.broadcast %cst_93 : f32 to vector<8x128xf32>
      %219 = arith.addf %218, %217 : vector<8x128xf32>
      %cst_94 = arith.constant 5.000000e-01 : f32
      %220 = vector.broadcast %cst_94 : f32 to vector<8x128xf32>
      %221 = arith.mulf %220, %219 : vector<8x128xf32>
      %222 = arith.mulf %211, %182 : vector<8x128xf32>
      %223 = arith.mulf %203, %213 : vector<8x128xf32>
      %224 = arith.addf %222, %223 : vector<8x128xf32>
      %225 = math.tanh %224 : vector<8x128xf32>
      %226 = arith.mulf %221, %225 : vector<8x128xf32>
      %c4_95 = arith.constant 4 : index
      %c0_96 = arith.constant 0 : index
      %c0_97 = arith.constant 0 : index
      %227 = vector.load %arg6[%c4_95, %c0_96, %c0_97] : memref<8x8x128xf32, #tpu.memory_space<vmem>>, vector<1x8x128xf32>
      %228 = vector.shape_cast %227 : vector<1x8x128xf32> to vector<8x128xf32>
      %229 = vector.shape_cast %226 : vector<8x128xf32> to vector<1x8x128xf32>
      tpu.vector_store %arg6[%c4_95, %c0_96, %c0_97], %229 {strides = array<i32>} : memref<8x8x128xf32, #tpu.memory_space<vmem>>, vector<1x8x128xf32>,
      %c5 = arith.constant 5 : index
      %c0_98 = arith.constant 0 : index
      %c0_99 = arith.constant 0 : index
      %230 = vector.load %arg2[%c5, %c0_98, %c0_99] : memref<8x8x32xbf16, #tpu.memory_space<vmem>>, vector<1x8x32xbf16>
      %231 = vector.shape_cast %230 : vector<1x8x32xbf16> to vector<8x32xbf16>
      %cst_100 = arith.constant dense<0.000000e+00> : vector<8x512xf32>
      %232 = tpu.matmul %231, %4, %cst_100 {dimension_numbers = #tpu.dot_dimension_numbers<[1], [0], [0], [1], [0, 0, 1, 1], [], []>} : vector<8x32xbf16>, vector<32x512xbf16>, vector<8x512xf32> -> vector<8x512xf32>
      %233 = vector.broadcast %8 : vector<1x512xf32> to vector<8x512xf32>
      %234 = arith.addf %232, %233 : vector<8x512xf32>
      %235 = arith.truncf %226 : vector<8x128xf32> to vector<8x128xbf16>
      %cst_101 = arith.constant dense<0.000000e+00> : vector<8x512xf32>
      %236 = tpu.matmul %235, %6, %cst_101 {dimension_numbers = #tpu.dot_dimension_numbers<[1], [0], [0], [1], [0, 0, 1, 1], [], []>} : vector<8x128xbf16>, vector<128x512xbf16>, vector<8x512xf32> -> vector<8x512xf32>
      %237 = arith.addf %234, %236 : vector<8x512xf32>
      %238 = vector.extract_strided_slice %237 {offsets = [0, 0], sizes = [8, 128], strides = [1, 1]} : vector<8x512xf32> to vector<8x128xf32>
      %cst_102 = arith.constant 5.000000e-01 : f32
      %239 = vector.broadcast %cst_102 : f32 to vector<8x128xf32>
      %240 = arith.mulf %239, %238 : vector<8x128xf32>
      %241 = math.tanh %240 : vector<8x128xf32>
      %cst_103 = arith.constant 1.000000e+00 : f32
      %242 = vector.broadcast %cst_103 : f32 to vector<8x128xf32>
      %243 = arith.addf %242, %241 : vector<8x128xf32>
      %cst_104 = arith.constant 5.000000e-01 : f32
      %244 = vector.broadcast %cst_104 : f32 to vector<8x128xf32>
      %245 = arith.mulf %244, %243 : vector<8x128xf32>
      %246 = vector.extract_strided_slice %237 {offsets = [0, 128], sizes = [8, 128], strides = [1, 1]} : vector<8x512xf32> to vector<8x128xf32>
      %cst_105 = arith.constant 5.000000e-01 : f32
      %247 = vector.broadcast %cst_105 : f32 to vector<8x128xf32>
      %248 = arith.mulf %247, %246 : vector<8x128xf32>
      %249 = math.tanh %248 : vector<8x128xf32>
      %cst_106 = arith.constant 1.000000e+00 : f32
      %250 = vector.broadcast %cst_106 : f32 to vector<8x128xf32>
      %251 = arith.addf %250, %249 : vector<8x128xf32>
      %cst_107 = arith.constant 5.000000e-01 : f32
      %252 = vector.broadcast %cst_107 : f32 to vector<8x128xf32>
      %253 = arith.mulf %252, %251 : vector<8x128xf32>
      %254 = vector.extract_strided_slice %237 {offsets = [0, 256], sizes = [8, 128], strides = [1, 1]} : vector<8x512xf32> to vector<8x128xf32>
      %255 = math.tanh %254 : vector<8x128xf32>
      %256 = vector.extract_strided_slice %237 {offsets = [0, 384], sizes = [8, 128], strides = [1, 1]} : vector<8x512xf32> to vector<8x128xf32>
      %cst_108 = arith.constant 5.000000e-01 : f32
      %257 = vector.broadcast %cst_108 : f32 to vector<8x128xf32>
      %258 = arith.mulf %257, %256 : vector<8x128xf32>
      %259 = math.tanh %258 : vector<8x128xf32>
      %cst_109 = arith.constant 1.000000e+00 : f32
      %260 = vector.broadcast %cst_109 : f32 to vector<8x128xf32>
      %261 = arith.addf %260, %259 : vector<8x128xf32>
      %cst_110 = arith.constant 5.000000e-01 : f32
      %262 = vector.broadcast %cst_110 : f32 to vector<8x128xf32>
      %263 = arith.mulf %262, %261 : vector<8x128xf32>
      %264 = arith.mulf %253, %224 : vector<8x128xf32>
      %265 = arith.mulf %245, %255 : vector<8x128xf32>
      %266 = arith.addf %264, %265 : vector<8x128xf32>
      %267 = math.tanh %266 : vector<8x128xf32>
      %268 = arith.mulf %263, %267 : vector<8x128xf32>
      %c5_111 = arith.constant 5 : index
      %c0_112 = arith.constant 0 : index
      %c0_113 = arith.constant 0 : index
      %269 = vector.load %arg6[%c5_111, %c0_112, %c0_113] : memref<8x8x128xf32, #tpu.memory_space<vmem>>, vector<1x8x128xf32>
      %270 = vector.shape_cast %269 : vector<1x8x128xf32> to vector<8x128xf32>
      %271 = vector.shape_cast %268 : vector<8x128xf32> to vector<1x8x128xf32>
      tpu.vector_store %arg6[%c5_111, %c0_112, %c0_113], %271 {strides = array<i32>} : memref<8x8x128xf32, #tpu.memory_space<vmem>>, vector<1x8x128xf32>,
      %c6 = arith.constant 6 : index
      %c0_114 = arith.constant 0 : index
      %c0_115 = arith.constant 0 : index
      %272 = vector.load %arg2[%c6, %c0_114, %c0_115] : memref<8x8x32xbf16, #tpu.memory_space<vmem>>, vector<1x8x32xbf16>
      %273 = vector.shape_cast %272 : vector<1x8x32xbf16> to vector<8x32xbf16>
      %cst_116 = arith.constant dense<0.000000e+00> : vector<8x512xf32>
      %274 = tpu.matmul %273, %4, %cst_116 {dimension_numbers = #tpu.dot_dimension_numbers<[1], [0], [0], [1], [0, 0, 1, 1], [], []>} : vector<8x32xbf16>, vector<32x512xbf16>, vector<8x512xf32> -> vector<8x512xf32>
      %275 = vector.broadcast %8 : vector<1x512xf32> to vector<8x512xf32>
      %276 = arith.addf %274, %275 : vector<8x512xf32>
      %277 = arith.truncf %268 : vector<8x128xf32> to vector<8x128xbf16>
      %cst_117 = arith.constant dense<0.000000e+00> : vector<8x512xf32>
      %278 = tpu.matmul %277, %6, %cst_117 {dimension_numbers = #tpu.dot_dimension_numbers<[1], [0], [0], [1], [0, 0, 1, 1], [], []>} : vector<8x128xbf16>, vector<128x512xbf16>, vector<8x512xf32> -> vector<8x512xf32>
      %279 = arith.addf %276, %278 : vector<8x512xf32>
      %280 = vector.extract_strided_slice %279 {offsets = [0, 0], sizes = [8, 128], strides = [1, 1]} : vector<8x512xf32> to vector<8x128xf32>
      %cst_118 = arith.constant 5.000000e-01 : f32
      %281 = vector.broadcast %cst_118 : f32 to vector<8x128xf32>
      %282 = arith.mulf %281, %280 : vector<8x128xf32>
      %283 = math.tanh %282 : vector<8x128xf32>
      %cst_119 = arith.constant 1.000000e+00 : f32
      %284 = vector.broadcast %cst_119 : f32 to vector<8x128xf32>
      %285 = arith.addf %284, %283 : vector<8x128xf32>
      %cst_120 = arith.constant 5.000000e-01 : f32
      %286 = vector.broadcast %cst_120 : f32 to vector<8x128xf32>
      %287 = arith.mulf %286, %285 : vector<8x128xf32>
      %288 = vector.extract_strided_slice %279 {offsets = [0, 128], sizes = [8, 128], strides = [1, 1]} : vector<8x512xf32> to vector<8x128xf32>
      %cst_121 = arith.constant 5.000000e-01 : f32
      %289 = vector.broadcast %cst_121 : f32 to vector<8x128xf32>
      %290 = arith.mulf %289, %288 : vector<8x128xf32>
      %291 = math.tanh %290 : vector<8x128xf32>
      %cst_122 = arith.constant 1.000000e+00 : f32
      %292 = vector.broadcast %cst_122 : f32 to vector<8x128xf32>
      %293 = arith.addf %292, %291 : vector<8x128xf32>
      %cst_123 = arith.constant 5.000000e-01 : f32
      %294 = vector.broadcast %cst_123 : f32 to vector<8x128xf32>
      %295 = arith.mulf %294, %293 : vector<8x128xf32>
      %296 = vector.extract_strided_slice %279 {offsets = [0, 256], sizes = [8, 128], strides = [1, 1]} : vector<8x512xf32> to vector<8x128xf32>
      %297 = math.tanh %296 : vector<8x128xf32>
      %298 = vector.extract_strided_slice %279 {offsets = [0, 384], sizes = [8, 128], strides = [1, 1]} : vector<8x512xf32> to vector<8x128xf32>
      %cst_124 = arith.constant 5.000000e-01 : f32
      %299 = vector.broadcast %cst_124 : f32 to vector<8x128xf32>
      %300 = arith.mulf %299, %298 : vector<8x128xf32>
      %301 = math.tanh %300 : vector<8x128xf32>
      %cst_125 = arith.constant 1.000000e+00 : f32
      %302 = vector.broadcast %cst_125 : f32 to vector<8x128xf32>
      %303 = arith.addf %302, %301 : vector<8x128xf32>
      %cst_126 = arith.constant 5.000000e-01 : f32
      %304 = vector.broadcast %cst_126 : f32 to vector<8x128xf32>
      %305 = arith.mulf %304, %303 : vector<8x128xf32>
      %306 = arith.mulf %295, %266 : vector<8x128xf32>
      %307 = arith.mulf %287, %297 : vector<8x128xf32>
      %308 = arith.addf %306, %307 : vector<8x128xf32>
      %309 = math.tanh %308 : vector<8x128xf32>
      %310 = arith.mulf %305, %309 : vector<8x128xf32>
      %c6_127 = arith.constant 6 : index
      %c0_128 = arith.constant 0 : index
      %c0_129 = arith.constant 0 : index
      %311 = vector.load %arg6[%c6_127, %c0_128, %c0_129] : memref<8x8x128xf32, #tpu.memory_space<vmem>>, vector<1x8x128xf32>
      %312 = vector.shape_cast %311 : vector<1x8x128xf32> to vector<8x128xf32>
      %313 = vector.shape_cast %310 : vector<8x128xf32> to vector<1x8x128xf32>
      tpu.vector_store %arg6[%c6_127, %c0_128, %c0_129], %313 {strides = array<i32>} : memref<8x8x128xf32, #tpu.memory_space<vmem>>, vector<1x8x128xf32>,
      %c7 = arith.constant 7 : index
      %c0_130 = arith.constant 0 : index
      %c0_131 = arith.constant 0 : index
      %314 = vector.load %arg2[%c7, %c0_130, %c0_131] : memref<8x8x32xbf16, #tpu.memory_space<vmem>>, vector<1x8x32xbf16>
      %315 = vector.shape_cast %314 : vector<1x8x32xbf16> to vector<8x32xbf16>
      %cst_132 = arith.constant dense<0.000000e+00> : vector<8x512xf32>
      %316 = tpu.matmul %315, %4, %cst_132 {dimension_numbers = #tpu.dot_dimension_numbers<[1], [0], [0], [1], [0, 0, 1, 1], [], []>} : vector<8x32xbf16>, vector<32x512xbf16>, vector<8x512xf32> -> vector<8x512xf32>
      %317 = vector.broadcast %8 : vector<1x512xf32> to vector<8x512xf32>
      %318 = arith.addf %316, %317 : vector<8x512xf32>
      %319 = arith.truncf %310 : vector<8x128xf32> to vector<8x128xbf16>
      %cst_133 = arith.constant dense<0.000000e+00> : vector<8x512xf32>
      %320 = tpu.matmul %319, %6, %cst_133 {dimension_numbers = #tpu.dot_dimension_numbers<[1], [0], [0], [1], [0, 0, 1, 1], [], []>} : vector<8x128xbf16>, vector<128x512xbf16>, vector<8x512xf32> -> vector<8x512xf32>
      %321 = arith.addf %318, %320 : vector<8x512xf32>
      %322 = vector.extract_strided_slice %321 {offsets = [0, 0], sizes = [8, 128], strides = [1, 1]} : vector<8x512xf32> to vector<8x128xf32>
      %cst_134 = arith.constant 5.000000e-01 : f32
      %323 = vector.broadcast %cst_134 : f32 to vector<8x128xf32>
      %324 = arith.mulf %323, %322 : vector<8x128xf32>
      %325 = math.tanh %324 : vector<8x128xf32>
      %cst_135 = arith.constant 1.000000e+00 : f32
      %326 = vector.broadcast %cst_135 : f32 to vector<8x128xf32>
      %327 = arith.addf %326, %325 : vector<8x128xf32>
      %cst_136 = arith.constant 5.000000e-01 : f32
      %328 = vector.broadcast %cst_136 : f32 to vector<8x128xf32>
      %329 = arith.mulf %328, %327 : vector<8x128xf32>
      %330 = vector.extract_strided_slice %321 {offsets = [0, 128], sizes = [8, 128], strides = [1, 1]} : vector<8x512xf32> to vector<8x128xf32>
      %cst_137 = arith.constant 5.000000e-01 : f32
      %331 = vector.broadcast %cst_137 : f32 to vector<8x128xf32>
      %332 = arith.mulf %331, %330 : vector<8x128xf32>
      %333 = math.tanh %332 : vector<8x128xf32>
      %cst_138 = arith.constant 1.000000e+00 : f32
      %334 = vector.broadcast %cst_138 : f32 to vector<8x128xf32>
      %335 = arith.addf %334, %333 : vector<8x128xf32>
      %cst_139 = arith.constant 5.000000e-01 : f32
      %336 = vector.broadcast %cst_139 : f32 to vector<8x128xf32>
      %337 = arith.mulf %336, %335 : vector<8x128xf32>
      %338 = vector.extract_strided_slice %321 {offsets = [0, 256], sizes = [8, 128], strides = [1, 1]} : vector<8x512xf32> to vector<8x128xf32>
      %339 = math.tanh %338 : vector<8x128xf32>
      %340 = vector.extract_strided_slice %321 {offsets = [0, 384], sizes = [8, 128], strides = [1, 1]} : vector<8x512xf32> to vector<8x128xf32>
      %cst_140 = arith.constant 5.000000e-01 : f32
      %341 = vector.broadcast %cst_140 : f32 to vector<8x128xf32>
      %342 = arith.mulf %341, %340 : vector<8x128xf32>
      %343 = math.tanh %342 : vector<8x128xf32>
      %cst_141 = arith.constant 1.000000e+00 : f32
      %344 = vector.broadcast %cst_141 : f32 to vector<8x128xf32>
      %345 = arith.addf %344, %343 : vector<8x128xf32>
      %cst_142 = arith.constant 5.000000e-01 : f32
      %346 = vector.broadcast %cst_142 : f32 to vector<8x128xf32>
      %347 = arith.mulf %346, %345 : vector<8x128xf32>
      %348 = arith.mulf %337, %308 : vector<8x128xf32>
      %349 = arith.mulf %329, %339 : vector<8x128xf32>
      %350 = arith.addf %348, %349 : vector<8x128xf32>
      %351 = math.tanh %350 : vector<8x128xf32>
      %352 = arith.mulf %347, %351 : vector<8x128xf32>
      %c7_143 = arith.constant 7 : index
      %c0_144 = arith.constant 0 : index
      %c0_145 = arith.constant 0 : index
      %353 = vector.load %arg6[%c7_143, %c0_144, %c0_145] : memref<8x8x128xf32, #tpu.memory_space<vmem>>, vector<1x8x128xf32>
      %354 = vector.shape_cast %353 : vector<1x8x128xf32> to vector<8x128xf32>
      %355 = vector.shape_cast %352 : vector<8x128xf32> to vector<1x8x128xf32>
      tpu.vector_store %arg6[%c7_143, %c0_144, %c0_145], %355 {strides = array<i32>} : memref<8x8x128xf32, #tpu.memory_space<vmem>>, vector<1x8x128xf32>,
      %c0_146 = arith.constant 0 : index
      %c0_147 = arith.constant 0 : index
      %356 = vector.load %arg9[%c0_146, %c0_147] : memref<8x128xf32, #tpu.memory_space<vmem>>, vector<8x128xf32>
      tpu.vector_store %arg9[%c0_146, %c0_147], %352 {strides = array<i32>} : memref<8x128xf32, #tpu.memory_space<vmem>>, vector<8x128xf32>,
      %c0_148 = arith.constant 0 : index
      %c0_149 = arith.constant 0 : index
      %357 = vector.load %arg10[%c0_148, %c0_149] : memref<8x128xf32, #tpu.memory_space<vmem>>, vector<8x128xf32>
      tpu.vector_store %arg10[%c0_148, %c0_149], %350 {strides = array<i32>} : memref<8x128xf32, #tpu.memory_space<vmem>>, vector<8x128xf32>,
    } else {
    }
    %c1_i32 = arith.constant 1 : i32
    %12 = arith.cmpi eq, %arg0, %c1_i32 : i32
    %13 = arith.extui %12 : i1 to i32
    %c0_i32_11 = arith.constant 0 : i32
    %14 = arith.cmpi ne, %13, %c0_i32_11 : i32
    scf.if %14 {
      %c0_14 = arith.constant 0 : index
      %c0_15 = arith.constant 0 : index
      %18 = vector.load %arg9[%c0_14, %c0_15] : memref<8x128xf32, #tpu.memory_space<vmem>>, vector<8x128xf32>
      %c0_16 = arith.constant 0 : index
      %c0_17 = arith.constant 0 : index
      %19 = vector.load %arg10[%c0_16, %c0_17] : memref<8x128xf32, #tpu.memory_space<vmem>>, vector<8x128xf32>
      %c7 = arith.constant 7 : index
      %c0_18 = arith.constant 0 : index
      %c0_19 = arith.constant 0 : index
      %20 = vector.load %arg2[%c7, %c0_18, %c0_19] : memref<8x8x32xbf16, #tpu.memory_space<vmem>>, vector<1x8x32xbf16>
      %21 = vector.shape_cast %20 : vector<1x8x32xbf16> to vector<8x32xbf16>
      %cst = arith.constant dense<0.000000e+00> : vector<8x512xf32>
      %22 = tpu.matmul %21, %4, %cst {dimension_numbers = #tpu.dot_dimension_numbers<[1], [0], [0], [1], [0, 0, 1, 1], [], []>} : vector<8x32xbf16>, vector<32x512xbf16>, vector<8x512xf32> -> vector<8x512xf32>
      %23 = vector.broadcast %8 : vector<1x512xf32> to vector<8x512xf32>
      %24 = arith.addf %22, %23 : vector<8x512xf32>
      %25 = arith.truncf %18 : vector<8x128xf32> to vector<8x128xbf16>
      %cst_20 = arith.constant dense<0.000000e+00> : vector<8x512xf32>
      %26 = tpu.matmul %25, %6, %cst_20 {dimension_numbers = #tpu.dot_dimension_numbers<[1], [0], [0], [1], [0, 0, 1, 1], [], []>} : vector<8x128xbf16>, vector<128x512xbf16>, vector<8x512xf32> -> vector<8x512xf32>
      %27 = arith.addf %24, %26 : vector<8x512xf32>
      %28 = vector.extract_strided_slice %27 {offsets = [0, 0], sizes = [8, 128], strides = [1, 1]} : vector<8x512xf32> to vector<8x128xf32>
      %cst_21 = arith.constant 5.000000e-01 : f32
      %29 = vector.broadcast %cst_21 : f32 to vector<8x128xf32>
      %30 = arith.mulf %29, %28 : vector<8x128xf32>
      %31 = math.tanh %30 : vector<8x128xf32>
      %cst_22 = arith.constant 1.000000e+00 : f32
      %32 = vector.broadcast %cst_22 : f32 to vector<8x128xf32>
      %33 = arith.addf %32, %31 : vector<8x128xf32>
      %cst_23 = arith.constant 5.000000e-01 : f32
      %34 = vector.broadcast %cst_23 : f32 to vector<8x128xf32>
      %35 = arith.mulf %34, %33 : vector<8x128xf32>
      %36 = vector.extract_strided_slice %27 {offsets = [0, 128], sizes = [8, 128], strides = [1, 1]} : vector<8x512xf32> to vector<8x128xf32>
      %cst_24 = arith.constant 5.000000e-01 : f32
      %37 = vector.broadcast %cst_24 : f32 to vector<8x128xf32>
      %38 = arith.mulf %37, %36 : vector<8x128xf32>
      %39 = math.tanh %38 : vector<8x128xf32>
      %cst_25 = arith.constant 1.000000e+00 : f32
      %40 = vector.broadcast %cst_25 : f32 to vector<8x128xf32>
      %41 = arith.addf %40, %39 : vector<8x128xf32>
      %cst_26 = arith.constant 5.000000e-01 : f32
      %42 = vector.broadcast %cst_26 : f32 to vector<8x128xf32>
      %43 = arith.mulf %42, %41 : vector<8x128xf32>
      %44 = vector.extract_strided_slice %27 {offsets = [0, 256], sizes = [8, 128], strides = [1, 1]} : vector<8x512xf32> to vector<8x128xf32>
      %45 = math.tanh %44 : vector<8x128xf32>
      %46 = vector.extract_strided_slice %27 {offsets = [0, 384], sizes = [8, 128], strides = [1, 1]} : vector<8x512xf32> to vector<8x128xf32>
      %cst_27 = arith.constant 5.000000e-01 : f32
      %47 = vector.broadcast %cst_27 : f32 to vector<8x128xf32>
      %48 = arith.mulf %47, %46 : vector<8x128xf32>
      %49 = math.tanh %48 : vector<8x128xf32>
      %cst_28 = arith.constant 1.000000e+00 : f32
      %50 = vector.broadcast %cst_28 : f32 to vector<8x128xf32>
      %51 = arith.addf %50, %49 : vector<8x128xf32>
      %cst_29 = arith.constant 5.000000e-01 : f32
      %52 = vector.broadcast %cst_29 : f32 to vector<8x128xf32>
      %53 = arith.mulf %52, %51 : vector<8x128xf32>
      %54 = arith.mulf %43, %19 : vector<8x128xf32>
      %55 = arith.mulf %35, %45 : vector<8x128xf32>
      %56 = arith.addf %54, %55 : vector<8x128xf32>
      %57 = math.tanh %56 : vector<8x128xf32>
      %58 = arith.mulf %53, %57 : vector<8x128xf32>
      %c7_30 = arith.constant 7 : index
      %c0_31 = arith.constant 0 : index
      %c0_32 = arith.constant 0 : index
      %59 = vector.load %arg6[%c7_30, %c0_31, %c0_32] : memref<8x8x128xf32, #tpu.memory_space<vmem>>, vector<1x8x128xf32>
      %60 = vector.shape_cast %59 : vector<1x8x128xf32> to vector<8x128xf32>
      %61 = vector.shape_cast %58 : vector<8x128xf32> to vector<1x8x128xf32>
      tpu.vector_store %arg6[%c7_30, %c0_31, %c0_32], %61 {strides = array<i32>} : memref<8x8x128xf32, #tpu.memory_space<vmem>>, vector<1x8x128xf32>,
      %c6 = arith.constant 6 : index
      %c0_33 = arith.constant 0 : index
      %c0_34 = arith.constant 0 : index
      %62 = vector.load %arg2[%c6, %c0_33, %c0_34] : memref<8x8x32xbf16, #tpu.memory_space<vmem>>, vector<1x8x32xbf16>
      %63 = vector.shape_cast %62 : vector<1x8x32xbf16> to vector<8x32xbf16>
      %cst_35 = arith.constant dense<0.000000e+00> : vector<8x512xf32>
      %64 = tpu.matmul %63, %4, %cst_35 {dimension_numbers = #tpu.dot_dimension_numbers<[1], [0], [0], [1], [0, 0, 1, 1], [], []>} : vector<8x32xbf16>, vector<32x512xbf16>, vector<8x512xf32> -> vector<8x512xf32>
      %65 = vector.broadcast %8 : vector<1x512xf32> to vector<8x512xf32>
      %66 = arith.addf %64, %65 : vector<8x512xf32>
      %67 = arith.truncf %58 : vector<8x128xf32> to vector<8x128xbf16>
      %cst_36 = arith.constant dense<0.000000e+00> : vector<8x512xf32>
      %68 = tpu.matmul %67, %6, %cst_36 {dimension_numbers = #tpu.dot_dimension_numbers<[1], [0], [0], [1], [0, 0, 1, 1], [], []>} : vector<8x128xbf16>, vector<128x512xbf16>, vector<8x512xf32> -> vector<8x512xf32>
      %69 = arith.addf %66, %68 : vector<8x512xf32>
      %70 = vector.extract_strided_slice %69 {offsets = [0, 0], sizes = [8, 128], strides = [1, 1]} : vector<8x512xf32> to vector<8x128xf32>
      %cst_37 = arith.constant 5.000000e-01 : f32
      %71 = vector.broadcast %cst_37 : f32 to vector<8x128xf32>
      %72 = arith.mulf %71, %70 : vector<8x128xf32>
      %73 = math.tanh %72 : vector<8x128xf32>
      %cst_38 = arith.constant 1.000000e+00 : f32
      %74 = vector.broadcast %cst_38 : f32 to vector<8x128xf32>
      %75 = arith.addf %74, %73 : vector<8x128xf32>
      %cst_39 = arith.constant 5.000000e-01 : f32
      %76 = vector.broadcast %cst_39 : f32 to vector<8x128xf32>
      %77 = arith.mulf %76, %75 : vector<8x128xf32>
      %78 = vector.extract_strided_slice %69 {offsets = [0, 128], sizes = [8, 128], strides = [1, 1]} : vector<8x512xf32> to vector<8x128xf32>
      %cst_40 = arith.constant 5.000000e-01 : f32
      %79 = vector.broadcast %cst_40 : f32 to vector<8x128xf32>
      %80 = arith.mulf %79, %78 : vector<8x128xf32>
      %81 = math.tanh %80 : vector<8x128xf32>
      %cst_41 = arith.constant 1.000000e+00 : f32
      %82 = vector.broadcast %cst_41 : f32 to vector<8x128xf32>
      %83 = arith.addf %82, %81 : vector<8x128xf32>
      %cst_42 = arith.constant 5.000000e-01 : f32
      %84 = vector.broadcast %cst_42 : f32 to vector<8x128xf32>
      %85 = arith.mulf %84, %83 : vector<8x128xf32>
      %86 = vector.extract_strided_slice %69 {offsets = [0, 256], sizes = [8, 128], strides = [1, 1]} : vector<8x512xf32> to vector<8x128xf32>
      %87 = math.tanh %86 : vector<8x128xf32>
      %88 = vector.extract_strided_slice %69 {offsets = [0, 384], sizes = [8, 128], strides = [1, 1]} : vector<8x512xf32> to vector<8x128xf32>
      %cst_43 = arith.constant 5.000000e-01 : f32
      %89 = vector.broadcast %cst_43 : f32 to vector<8x128xf32>
      %90 = arith.mulf %89, %88 : vector<8x128xf32>
      %91 = math.tanh %90 : vector<8x128xf32>
      %cst_44 = arith.constant 1.000000e+00 : f32
      %92 = vector.broadcast %cst_44 : f32 to vector<8x128xf32>
      %93 = arith.addf %92, %91 : vector<8x128xf32>
      %cst_45 = arith.constant 5.000000e-01 : f32
      %94 = vector.broadcast %cst_45 : f32 to vector<8x128xf32>
      %95 = arith.mulf %94, %93 : vector<8x128xf32>
      %96 = arith.mulf %85, %56 : vector<8x128xf32>
      %97 = arith.mulf %77, %87 : vector<8x128xf32>
      %98 = arith.addf %96, %97 : vector<8x128xf32>
      %99 = math.tanh %98 : vector<8x128xf32>
      %100 = arith.mulf %95, %99 : vector<8x128xf32>
      %c6_46 = arith.constant 6 : index
      %c0_47 = arith.constant 0 : index
      %c0_48 = arith.constant 0 : index
      %101 = vector.load %arg6[%c6_46, %c0_47, %c0_48] : memref<8x8x128xf32, #tpu.memory_space<vmem>>, vector<1x8x128xf32>
      %102 = vector.shape_cast %101 : vector<1x8x128xf32> to vector<8x128xf32>
      %103 = vector.shape_cast %100 : vector<8x128xf32> to vector<1x8x128xf32>
      tpu.vector_store %arg6[%c6_46, %c0_47, %c0_48], %103 {strides = array<i32>} : memref<8x8x128xf32, #tpu.memory_space<vmem>>, vector<1x8x128xf32>,
      %c5 = arith.constant 5 : index
      %c0_49 = arith.constant 0 : index
      %c0_50 = arith.constant 0 : index
      %104 = vector.load %arg2[%c5, %c0_49, %c0_50] : memref<8x8x32xbf16, #tpu.memory_space<vmem>>, vector<1x8x32xbf16>
      %105 = vector.shape_cast %104 : vector<1x8x32xbf16> to vector<8x32xbf16>
      %cst_51 = arith.constant dense<0.000000e+00> : vector<8x512xf32>
      %106 = tpu.matmul %105, %4, %cst_51 {dimension_numbers = #tpu.dot_dimension_numbers<[1], [0], [0], [1], [0, 0, 1, 1], [], []>} : vector<8x32xbf16>, vector<32x512xbf16>, vector<8x512xf32> -> vector<8x512xf32>
      %107 = vector.broadcast %8 : vector<1x512xf32> to vector<8x512xf32>
      %108 = arith.addf %106, %107 : vector<8x512xf32>
      %109 = arith.truncf %100 : vector<8x128xf32> to vector<8x128xbf16>
      %cst_52 = arith.constant dense<0.000000e+00> : vector<8x512xf32>
      %110 = tpu.matmul %109, %6, %cst_52 {dimension_numbers = #tpu.dot_dimension_numbers<[1], [0], [0], [1], [0, 0, 1, 1], [], []>} : vector<8x128xbf16>, vector<128x512xbf16>, vector<8x512xf32> -> vector<8x512xf32>
      %111 = arith.addf %108, %110 : vector<8x512xf32>
      %112 = vector.extract_strided_slice %111 {offsets = [0, 0], sizes = [8, 128], strides = [1, 1]} : vector<8x512xf32> to vector<8x128xf32>
      %cst_53 = arith.constant 5.000000e-01 : f32
      %113 = vector.broadcast %cst_53 : f32 to vector<8x128xf32>
      %114 = arith.mulf %113, %112 : vector<8x128xf32>
      %115 = math.tanh %114 : vector<8x128xf32>
      %cst_54 = arith.constant 1.000000e+00 : f32
      %116 = vector.broadcast %cst_54 : f32 to vector<8x128xf32>
      %117 = arith.addf %116, %115 : vector<8x128xf32>
      %cst_55 = arith.constant 5.000000e-01 : f32
      %118 = vector.broadcast %cst_55 : f32 to vector<8x128xf32>
      %119 = arith.mulf %118, %117 : vector<8x128xf32>
      %120 = vector.extract_strided_slice %111 {offsets = [0, 128], sizes = [8, 128], strides = [1, 1]} : vector<8x512xf32> to vector<8x128xf32>
      %cst_56 = arith.constant 5.000000e-01 : f32
      %121 = vector.broadcast %cst_56 : f32 to vector<8x128xf32>
      %122 = arith.mulf %121, %120 : vector<8x128xf32>
      %123 = math.tanh %122 : vector<8x128xf32>
      %cst_57 = arith.constant 1.000000e+00 : f32
      %124 = vector.broadcast %cst_57 : f32 to vector<8x128xf32>
      %125 = arith.addf %124, %123 : vector<8x128xf32>
      %cst_58 = arith.constant 5.000000e-01 : f32
      %126 = vector.broadcast %cst_58 : f32 to vector<8x128xf32>
      %127 = arith.mulf %126, %125 : vector<8x128xf32>
      %128 = vector.extract_strided_slice %111 {offsets = [0, 256], sizes = [8, 128], strides = [1, 1]} : vector<8x512xf32> to vector<8x128xf32>
      %129 = math.tanh %128 : vector<8x128xf32>
      %130 = vector.extract_strided_slice %111 {offsets = [0, 384], sizes = [8, 128], strides = [1, 1]} : vector<8x512xf32> to vector<8x128xf32>
      %cst_59 = arith.constant 5.000000e-01 : f32
      %131 = vector.broadcast %cst_59 : f32 to vector<8x128xf32>
      %132 = arith.mulf %131, %130 : vector<8x128xf32>
      %133 = math.tanh %132 : vector<8x128xf32>
      %cst_60 = arith.constant 1.000000e+00 : f32
      %134 = vector.broadcast %cst_60 : f32 to vector<8x128xf32>
      %135 = arith.addf %134, %133 : vector<8x128xf32>
      %cst_61 = arith.constant 5.000000e-01 : f32
      %136 = vector.broadcast %cst_61 : f32 to vector<8x128xf32>
      %137 = arith.mulf %136, %135 : vector<8x128xf32>
      %138 = arith.mulf %127, %98 : vector<8x128xf32>
      %139 = arith.mulf %119, %129 : vector<8x128xf32>
      %140 = arith.addf %138, %139 : vector<8x128xf32>
      %141 = math.tanh %140 : vector<8x128xf32>
      %142 = arith.mulf %137, %141 : vector<8x128xf32>
      %c5_62 = arith.constant 5 : index
      %c0_63 = arith.constant 0 : index
      %c0_64 = arith.constant 0 : index
      %143 = vector.load %arg6[%c5_62, %c0_63, %c0_64] : memref<8x8x128xf32, #tpu.memory_space<vmem>>, vector<1x8x128xf32>
      %144 = vector.shape_cast %143 : vector<1x8x128xf32> to vector<8x128xf32>
      %145 = vector.shape_cast %142 : vector<8x128xf32> to vector<1x8x128xf32>
      tpu.vector_store %arg6[%c5_62, %c0_63, %c0_64], %145 {strides = array<i32>} : memref<8x8x128xf32, #tpu.memory_space<vmem>>, vector<1x8x128xf32>,
      %c4 = arith.constant 4 : index
      %c0_65 = arith.constant 0 : index
      %c0_66 = arith.constant 0 : index
      %146 = vector.load %arg2[%c4, %c0_65, %c0_66] : memref<8x8x32xbf16, #tpu.memory_space<vmem>>, vector<1x8x32xbf16>
      %147 = vector.shape_cast %146 : vector<1x8x32xbf16> to vector<8x32xbf16>
      %cst_67 = arith.constant dense<0.000000e+00> : vector<8x512xf32>
      %148 = tpu.matmul %147, %4, %cst_67 {dimension_numbers = #tpu.dot_dimension_numbers<[1], [0], [0], [1], [0, 0, 1, 1], [], []>} : vector<8x32xbf16>, vector<32x512xbf16>, vector<8x512xf32> -> vector<8x512xf32>
      %149 = vector.broadcast %8 : vector<1x512xf32> to vector<8x512xf32>
      %150 = arith.addf %148, %149 : vector<8x512xf32>
      %151 = arith.truncf %142 : vector<8x128xf32> to vector<8x128xbf16>
      %cst_68 = arith.constant dense<0.000000e+00> : vector<8x512xf32>
      %152 = tpu.matmul %151, %6, %cst_68 {dimension_numbers = #tpu.dot_dimension_numbers<[1], [0], [0], [1], [0, 0, 1, 1], [], []>} : vector<8x128xbf16>, vector<128x512xbf16>, vector<8x512xf32> -> vector<8x512xf32>
      %153 = arith.addf %150, %152 : vector<8x512xf32>
      %154 = vector.extract_strided_slice %153 {offsets = [0, 0], sizes = [8, 128], strides = [1, 1]} : vector<8x512xf32> to vector<8x128xf32>
      %cst_69 = arith.constant 5.000000e-01 : f32
      %155 = vector.broadcast %cst_69 : f32 to vector<8x128xf32>
      %156 = arith.mulf %155, %154 : vector<8x128xf32>
      %157 = math.tanh %156 : vector<8x128xf32>
      %cst_70 = arith.constant 1.000000e+00 : f32
      %158 = vector.broadcast %cst_70 : f32 to vector<8x128xf32>
      %159 = arith.addf %158, %157 : vector<8x128xf32>
      %cst_71 = arith.constant 5.000000e-01 : f32
      %160 = vector.broadcast %cst_71 : f32 to vector<8x128xf32>
      %161 = arith.mulf %160, %159 : vector<8x128xf32>
      %162 = vector.extract_strided_slice %153 {offsets = [0, 128], sizes = [8, 128], strides = [1, 1]} : vector<8x512xf32> to vector<8x128xf32>
      %cst_72 = arith.constant 5.000000e-01 : f32
      %163 = vector.broadcast %cst_72 : f32 to vector<8x128xf32>
      %164 = arith.mulf %163, %162 : vector<8x128xf32>
      %165 = math.tanh %164 : vector<8x128xf32>
      %cst_73 = arith.constant 1.000000e+00 : f32
      %166 = vector.broadcast %cst_73 : f32 to vector<8x128xf32>
      %167 = arith.addf %166, %165 : vector<8x128xf32>
      %cst_74 = arith.constant 5.000000e-01 : f32
      %168 = vector.broadcast %cst_74 : f32 to vector<8x128xf32>
      %169 = arith.mulf %168, %167 : vector<8x128xf32>
      %170 = vector.extract_strided_slice %153 {offsets = [0, 256], sizes = [8, 128], strides = [1, 1]} : vector<8x512xf32> to vector<8x128xf32>
      %171 = math.tanh %170 : vector<8x128xf32>
      %172 = vector.extract_strided_slice %153 {offsets = [0, 384], sizes = [8, 128], strides = [1, 1]} : vector<8x512xf32> to vector<8x128xf32>
      %cst_75 = arith.constant 5.000000e-01 : f32
      %173 = vector.broadcast %cst_75 : f32 to vector<8x128xf32>
      %174 = arith.mulf %173, %172 : vector<8x128xf32>
      %175 = math.tanh %174 : vector<8x128xf32>
      %cst_76 = arith.constant 1.000000e+00 : f32
      %176 = vector.broadcast %cst_76 : f32 to vector<8x128xf32>
      %177 = arith.addf %176, %175 : vector<8x128xf32>
      %cst_77 = arith.constant 5.000000e-01 : f32
      %178 = vector.broadcast %cst_77 : f32 to vector<8x128xf32>
      %179 = arith.mulf %178, %177 : vector<8x128xf32>
      %180 = arith.mulf %169, %140 : vector<8x128xf32>
      %181 = arith.mulf %161, %171 : vector<8x128xf32>
      %182 = arith.addf %180, %181 : vector<8x128xf32>
      %183 = math.tanh %182 : vector<8x128xf32>
      %184 = arith.mulf %179, %183 : vector<8x128xf32>
      %c4_78 = arith.constant 4 : index
      %c0_79 = arith.constant 0 : index
      %c0_80 = arith.constant 0 : index
      %185 = vector.load %arg6[%c4_78, %c0_79, %c0_80] : memref<8x8x128xf32, #tpu.memory_space<vmem>>, vector<1x8x128xf32>
      %186 = vector.shape_cast %185 : vector<1x8x128xf32> to vector<8x128xf32>
      %187 = vector.shape_cast %184 : vector<8x128xf32> to vector<1x8x128xf32>
      tpu.vector_store %arg6[%c4_78, %c0_79, %c0_80], %187 {strides = array<i32>} : memref<8x8x128xf32, #tpu.memory_space<vmem>>, vector<1x8x128xf32>,
      %c3 = arith.constant 3 : index
      %c0_81 = arith.constant 0 : index
      %c0_82 = arith.constant 0 : index
      %188 = vector.load %arg2[%c3, %c0_81, %c0_82] : memref<8x8x32xbf16, #tpu.memory_space<vmem>>, vector<1x8x32xbf16>
      %189 = vector.shape_cast %188 : vector<1x8x32xbf16> to vector<8x32xbf16>
      %cst_83 = arith.constant dense<0.000000e+00> : vector<8x512xf32>
      %190 = tpu.matmul %189, %4, %cst_83 {dimension_numbers = #tpu.dot_dimension_numbers<[1], [0], [0], [1], [0, 0, 1, 1], [], []>} : vector<8x32xbf16>, vector<32x512xbf16>, vector<8x512xf32> -> vector<8x512xf32>
      %191 = vector.broadcast %8 : vector<1x512xf32> to vector<8x512xf32>
      %192 = arith.addf %190, %191 : vector<8x512xf32>
      %193 = arith.truncf %184 : vector<8x128xf32> to vector<8x128xbf16>
      %cst_84 = arith.constant dense<0.000000e+00> : vector<8x512xf32>
      %194 = tpu.matmul %193, %6, %cst_84 {dimension_numbers = #tpu.dot_dimension_numbers<[1], [0], [0], [1], [0, 0, 1, 1], [], []>} : vector<8x128xbf16>, vector<128x512xbf16>, vector<8x512xf32> -> vector<8x512xf32>
      %195 = arith.addf %192, %194 : vector<8x512xf32>
      %196 = vector.extract_strided_slice %195 {offsets = [0, 0], sizes = [8, 128], strides = [1, 1]} : vector<8x512xf32> to vector<8x128xf32>
      %cst_85 = arith.constant 5.000000e-01 : f32
      %197 = vector.broadcast %cst_85 : f32 to vector<8x128xf32>
      %198 = arith.mulf %197, %196 : vector<8x128xf32>
      %199 = math.tanh %198 : vector<8x128xf32>
      %cst_86 = arith.constant 1.000000e+00 : f32
      %200 = vector.broadcast %cst_86 : f32 to vector<8x128xf32>
      %201 = arith.addf %200, %199 : vector<8x128xf32>
      %cst_87 = arith.constant 5.000000e-01 : f32
      %202 = vector.broadcast %cst_87 : f32 to vector<8x128xf32>
      %203 = arith.mulf %202, %201 : vector<8x128xf32>
      %204 = vector.extract_strided_slice %195 {offsets = [0, 128], sizes = [8, 128], strides = [1, 1]} : vector<8x512xf32> to vector<8x128xf32>
      %cst_88 = arith.constant 5.000000e-01 : f32
      %205 = vector.broadcast %cst_88 : f32 to vector<8x128xf32>
      %206 = arith.mulf %205, %204 : vector<8x128xf32>
      %207 = math.tanh %206 : vector<8x128xf32>
      %cst_89 = arith.constant 1.000000e+00 : f32
      %208 = vector.broadcast %cst_89 : f32 to vector<8x128xf32>
      %209 = arith.addf %208, %207 : vector<8x128xf32>
      %cst_90 = arith.constant 5.000000e-01 : f32
      %210 = vector.broadcast %cst_90 : f32 to vector<8x128xf32>
      %211 = arith.mulf %210, %209 : vector<8x128xf32>
      %212 = vector.extract_strided_slice %195 {offsets = [0, 256], sizes = [8, 128], strides = [1, 1]} : vector<8x512xf32> to vector<8x128xf32>
      %213 = math.tanh %212 : vector<8x128xf32>
      %214 = vector.extract_strided_slice %195 {offsets = [0, 384], sizes = [8, 128], strides = [1, 1]} : vector<8x512xf32> to vector<8x128xf32>
      %cst_91 = arith.constant 5.000000e-01 : f32
      %215 = vector.broadcast %cst_91 : f32 to vector<8x128xf32>
      %216 = arith.mulf %215, %214 : vector<8x128xf32>
      %217 = math.tanh %216 : vector<8x128xf32>
      %cst_92 = arith.constant 1.000000e+00 : f32
      %218 = vector.broadcast %cst_92 : f32 to vector<8x128xf32>
      %219 = arith.addf %218, %217 : vector<8x128xf32>
      %cst_93 = arith.constant 5.000000e-01 : f32
      %220 = vector.broadcast %cst_93 : f32 to vector<8x128xf32>
      %221 = arith.mulf %220, %219 : vector<8x128xf32>
      %222 = arith.mulf %211, %182 : vector<8x128xf32>
      %223 = arith.mulf %203, %213 : vector<8x128xf32>
      %224 = arith.addf %222, %223 : vector<8x128xf32>
      %225 = math.tanh %224 : vector<8x128xf32>
      %226 = arith.mulf %221, %225 : vector<8x128xf32>
      %c3_94 = arith.constant 3 : index
      %c0_95 = arith.constant 0 : index
      %c0_96 = arith.constant 0 : index
      %227 = vector.load %arg6[%c3_94, %c0_95, %c0_96] : memref<8x8x128xf32, #tpu.memory_space<vmem>>, vector<1x8x128xf32>
      %228 = vector.shape_cast %227 : vector<1x8x128xf32> to vector<8x128xf32>
      %229 = vector.shape_cast %226 : vector<8x128xf32> to vector<1x8x128xf32>
      tpu.vector_store %arg6[%c3_94, %c0_95, %c0_96], %229 {strides = array<i32>} : memref<8x8x128xf32, #tpu.memory_space<vmem>>, vector<1x8x128xf32>,
      %c2 = arith.constant 2 : index
      %c0_97 = arith.constant 0 : index
      %c0_98 = arith.constant 0 : index
      %230 = vector.load %arg2[%c2, %c0_97, %c0_98] : memref<8x8x32xbf16, #tpu.memory_space<vmem>>, vector<1x8x32xbf16>
      %231 = vector.shape_cast %230 : vector<1x8x32xbf16> to vector<8x32xbf16>
      %cst_99 = arith.constant dense<0.000000e+00> : vector<8x512xf32>
      %232 = tpu.matmul %231, %4, %cst_99 {dimension_numbers = #tpu.dot_dimension_numbers<[1], [0], [0], [1], [0, 0, 1, 1], [], []>} : vector<8x32xbf16>, vector<32x512xbf16>, vector<8x512xf32> -> vector<8x512xf32>
      %233 = vector.broadcast %8 : vector<1x512xf32> to vector<8x512xf32>
      %234 = arith.addf %232, %233 : vector<8x512xf32>
      %235 = arith.truncf %226 : vector<8x128xf32> to vector<8x128xbf16>
      %cst_100 = arith.constant dense<0.000000e+00> : vector<8x512xf32>
      %236 = tpu.matmul %235, %6, %cst_100 {dimension_numbers = #tpu.dot_dimension_numbers<[1], [0], [0], [1], [0, 0, 1, 1], [], []>} : vector<8x128xbf16>, vector<128x512xbf16>, vector<8x512xf32> -> vector<8x512xf32>
      %237 = arith.addf %234, %236 : vector<8x512xf32>
      %238 = vector.extract_strided_slice %237 {offsets = [0, 0], sizes = [8, 128], strides = [1, 1]} : vector<8x512xf32> to vector<8x128xf32>
      %cst_101 = arith.constant 5.000000e-01 : f32
      %239 = vector.broadcast %cst_101 : f32 to vector<8x128xf32>
      %240 = arith.mulf %239, %238 : vector<8x128xf32>
      %241 = math.tanh %240 : vector<8x128xf32>
      %cst_102 = arith.constant 1.000000e+00 : f32
      %242 = vector.broadcast %cst_102 : f32 to vector<8x128xf32>
      %243 = arith.addf %242, %241 : vector<8x128xf32>
      %cst_103 = arith.constant 5.000000e-01 : f32
      %244 = vector.broadcast %cst_103 : f32 to vector<8x128xf32>
      %245 = arith.mulf %244, %243 : vector<8x128xf32>
      %246 = vector.extract_strided_slice %237 {offsets = [0, 128], sizes = [8, 128], strides = [1, 1]} : vector<8x512xf32> to vector<8x128xf32>
      %cst_104 = arith.constant 5.000000e-01 : f32
      %247 = vector.broadcast %cst_104 : f32 to vector<8x128xf32>
      %248 = arith.mulf %247, %246 : vector<8x128xf32>
      %249 = math.tanh %248 : vector<8x128xf32>
      %cst_105 = arith.constant 1.000000e+00 : f32
      %250 = vector.broadcast %cst_105 : f32 to vector<8x128xf32>
      %251 = arith.addf %250, %249 : vector<8x128xf32>
      %cst_106 = arith.constant 5.000000e-01 : f32
      %252 = vector.broadcast %cst_106 : f32 to vector<8x128xf32>
      %253 = arith.mulf %252, %251 : vector<8x128xf32>
      %254 = vector.extract_strided_slice %237 {offsets = [0, 256], sizes = [8, 128], strides = [1, 1]} : vector<8x512xf32> to vector<8x128xf32>
      %255 = math.tanh %254 : vector<8x128xf32>
      %256 = vector.extract_strided_slice %237 {offsets = [0, 384], sizes = [8, 128], strides = [1, 1]} : vector<8x512xf32> to vector<8x128xf32>
      %cst_107 = arith.constant 5.000000e-01 : f32
      %257 = vector.broadcast %cst_107 : f32 to vector<8x128xf32>
      %258 = arith.mulf %257, %256 : vector<8x128xf32>
      %259 = math.tanh %258 : vector<8x128xf32>
      %cst_108 = arith.constant 1.000000e+00 : f32
      %260 = vector.broadcast %cst_108 : f32 to vector<8x128xf32>
      %261 = arith.addf %260, %259 : vector<8x128xf32>
      %cst_109 = arith.constant 5.000000e-01 : f32
      %262 = vector.broadcast %cst_109 : f32 to vector<8x128xf32>
      %263 = arith.mulf %262, %261 : vector<8x128xf32>
      %264 = arith.mulf %253, %224 : vector<8x128xf32>
      %265 = arith.mulf %245, %255 : vector<8x128xf32>
      %266 = arith.addf %264, %265 : vector<8x128xf32>
      %267 = math.tanh %266 : vector<8x128xf32>
      %268 = arith.mulf %263, %267 : vector<8x128xf32>
      %c2_110 = arith.constant 2 : index
      %c0_111 = arith.constant 0 : index
      %c0_112 = arith.constant 0 : index
      %269 = vector.load %arg6[%c2_110, %c0_111, %c0_112] : memref<8x8x128xf32, #tpu.memory_space<vmem>>, vector<1x8x128xf32>
      %270 = vector.shape_cast %269 : vector<1x8x128xf32> to vector<8x128xf32>
      %271 = vector.shape_cast %268 : vector<8x128xf32> to vector<1x8x128xf32>
      tpu.vector_store %arg6[%c2_110, %c0_111, %c0_112], %271 {strides = array<i32>} : memref<8x8x128xf32, #tpu.memory_space<vmem>>, vector<1x8x128xf32>,
      %c1 = arith.constant 1 : index
      %c0_113 = arith.constant 0 : index
      %c0_114 = arith.constant 0 : index
      %272 = vector.load %arg2[%c1, %c0_113, %c0_114] : memref<8x8x32xbf16, #tpu.memory_space<vmem>>, vector<1x8x32xbf16>
      %273 = vector.shape_cast %272 : vector<1x8x32xbf16> to vector<8x32xbf16>
      %cst_115 = arith.constant dense<0.000000e+00> : vector<8x512xf32>
      %274 = tpu.matmul %273, %4, %cst_115 {dimension_numbers = #tpu.dot_dimension_numbers<[1], [0], [0], [1], [0, 0, 1, 1], [], []>} : vector<8x32xbf16>, vector<32x512xbf16>, vector<8x512xf32> -> vector<8x512xf32>
      %275 = vector.broadcast %8 : vector<1x512xf32> to vector<8x512xf32>
      %276 = arith.addf %274, %275 : vector<8x512xf32>
      %277 = arith.truncf %268 : vector<8x128xf32> to vector<8x128xbf16>
      %cst_116 = arith.constant dense<0.000000e+00> : vector<8x512xf32>
      %278 = tpu.matmul %277, %6, %cst_116 {dimension_numbers = #tpu.dot_dimension_numbers<[1], [0], [0], [1], [0, 0, 1, 1], [], []>} : vector<8x128xbf16>, vector<128x512xbf16>, vector<8x512xf32> -> vector<8x512xf32>
      %279 = arith.addf %276, %278 : vector<8x512xf32>
      %280 = vector.extract_strided_slice %279 {offsets = [0, 0], sizes = [8, 128], strides = [1, 1]} : vector<8x512xf32> to vector<8x128xf32>
      %cst_117 = arith.constant 5.000000e-01 : f32
      %281 = vector.broadcast %cst_117 : f32 to vector<8x128xf32>
      %282 = arith.mulf %281, %280 : vector<8x128xf32>
      %283 = math.tanh %282 : vector<8x128xf32>
      %cst_118 = arith.constant 1.000000e+00 : f32
      %284 = vector.broadcast %cst_118 : f32 to vector<8x128xf32>
      %285 = arith.addf %284, %283 : vector<8x128xf32>
      %cst_119 = arith.constant 5.000000e-01 : f32
      %286 = vector.broadcast %cst_119 : f32 to vector<8x128xf32>
      %287 = arith.mulf %286, %285 : vector<8x128xf32>
      %288 = vector.extract_strided_slice %279 {offsets = [0, 128], sizes = [8, 128], strides = [1, 1]} : vector<8x512xf32> to vector<8x128xf32>
      %cst_120 = arith.constant 5.000000e-01 : f32
      %289 = vector.broadcast %cst_120 : f32 to vector<8x128xf32>
      %290 = arith.mulf %289, %288 : vector<8x128xf32>
      %291 = math.tanh %290 : vector<8x128xf32>
      %cst_121 = arith.constant 1.000000e+00 : f32
      %292 = vector.broadcast %cst_121 : f32 to vector<8x128xf32>
      %293 = arith.addf %292, %291 : vector<8x128xf32>
      %cst_122 = arith.constant 5.000000e-01 : f32
      %294 = vector.broadcast %cst_122 : f32 to vector<8x128xf32>
      %295 = arith.mulf %294, %293 : vector<8x128xf32>
      %296 = vector.extract_strided_slice %279 {offsets = [0, 256], sizes = [8, 128], strides = [1, 1]} : vector<8x512xf32> to vector<8x128xf32>
      %297 = math.tanh %296 : vector<8x128xf32>
      %298 = vector.extract_strided_slice %279 {offsets = [0, 384], sizes = [8, 128], strides = [1, 1]} : vector<8x512xf32> to vector<8x128xf32>
      %cst_123 = arith.constant 5.000000e-01 : f32
      %299 = vector.broadcast %cst_123 : f32 to vector<8x128xf32>
      %300 = arith.mulf %299, %298 : vector<8x128xf32>
      %301 = math.tanh %300 : vector<8x128xf32>
      %cst_124 = arith.constant 1.000000e+00 : f32
      %302 = vector.broadcast %cst_124 : f32 to vector<8x128xf32>
      %303 = arith.addf %302, %301 : vector<8x128xf32>
      %cst_125 = arith.constant 5.000000e-01 : f32
      %304 = vector.broadcast %cst_125 : f32 to vector<8x128xf32>
      %305 = arith.mulf %304, %303 : vector<8x128xf32>
      %306 = arith.mulf %295, %266 : vector<8x128xf32>
      %307 = arith.mulf %287, %297 : vector<8x128xf32>
      %308 = arith.addf %306, %307 : vector<8x128xf32>
      %309 = math.tanh %308 : vector<8x128xf32>
      %310 = arith.mulf %305, %309 : vector<8x128xf32>
      %c1_126 = arith.constant 1 : index
      %c0_127 = arith.constant 0 : index
      %c0_128 = arith.constant 0 : index
      %311 = vector.load %arg6[%c1_126, %c0_127, %c0_128] : memref<8x8x128xf32, #tpu.memory_space<vmem>>, vector<1x8x128xf32>
      %312 = vector.shape_cast %311 : vector<1x8x128xf32> to vector<8x128xf32>
      %313 = vector.shape_cast %310 : vector<8x128xf32> to vector<1x8x128xf32>
      tpu.vector_store %arg6[%c1_126, %c0_127, %c0_128], %313 {strides = array<i32>} : memref<8x8x128xf32, #tpu.memory_space<vmem>>, vector<1x8x128xf32>,
      %c0_129 = arith.constant 0 : index
      %c0_130 = arith.constant 0 : index
      %c0_131 = arith.constant 0 : index
      %314 = vector.load %arg2[%c0_129, %c0_130, %c0_131] : memref<8x8x32xbf16, #tpu.memory_space<vmem>>, vector<1x8x32xbf16>
      %315 = vector.shape_cast %314 : vector<1x8x32xbf16> to vector<8x32xbf16>
      %cst_132 = arith.constant dense<0.000000e+00> : vector<8x512xf32>
      %316 = tpu.matmul %315, %4, %cst_132 {dimension_numbers = #tpu.dot_dimension_numbers<[1], [0], [0], [1], [0, 0, 1, 1], [], []>} : vector<8x32xbf16>, vector<32x512xbf16>, vector<8x512xf32> -> vector<8x512xf32>
      %317 = vector.broadcast %8 : vector<1x512xf32> to vector<8x512xf32>
      %318 = arith.addf %316, %317 : vector<8x512xf32>
      %319 = arith.truncf %310 : vector<8x128xf32> to vector<8x128xbf16>
      %cst_133 = arith.constant dense<0.000000e+00> : vector<8x512xf32>
      %320 = tpu.matmul %319, %6, %cst_133 {dimension_numbers = #tpu.dot_dimension_numbers<[1], [0], [0], [1], [0, 0, 1, 1], [], []>} : vector<8x128xbf16>, vector<128x512xbf16>, vector<8x512xf32> -> vector<8x512xf32>
      %321 = arith.addf %318, %320 : vector<8x512xf32>
      %322 = vector.extract_strided_slice %321 {offsets = [0, 0], sizes = [8, 128], strides = [1, 1]} : vector<8x512xf32> to vector<8x128xf32>
      %cst_134 = arith.constant 5.000000e-01 : f32
      %323 = vector.broadcast %cst_134 : f32 to vector<8x128xf32>
      %324 = arith.mulf %323, %322 : vector<8x128xf32>
      %325 = math.tanh %324 : vector<8x128xf32>
      %cst_135 = arith.constant 1.000000e+00 : f32
      %326 = vector.broadcast %cst_135 : f32 to vector<8x128xf32>
      %327 = arith.addf %326, %325 : vector<8x128xf32>
      %cst_136 = arith.constant 5.000000e-01 : f32
      %328 = vector.broadcast %cst_136 : f32 to vector<8x128xf32>
      %329 = arith.mulf %328, %327 : vector<8x128xf32>
      %330 = vector.extract_strided_slice %321 {offsets = [0, 128], sizes = [8, 128], strides = [1, 1]} : vector<8x512xf32> to vector<8x128xf32>
      %cst_137 = arith.constant 5.000000e-01 : f32
      %331 = vector.broadcast %cst_137 : f32 to vector<8x128xf32>
      %332 = arith.mulf %331, %330 : vector<8x128xf32>
      %333 = math.tanh %332 : vector<8x128xf32>
      %cst_138 = arith.constant 1.000000e+00 : f32
      %334 = vector.broadcast %cst_138 : f32 to vector<8x128xf32>
      %335 = arith.addf %334, %333 : vector<8x128xf32>
      %cst_139 = arith.constant 5.000000e-01 : f32
      %336 = vector.broadcast %cst_139 : f32 to vector<8x128xf32>
      %337 = arith.mulf %336, %335 : vector<8x128xf32>
      %338 = vector.extract_strided_slice %321 {offsets = [0, 256], sizes = [8, 128], strides = [1, 1]} : vector<8x512xf32> to vector<8x128xf32>
      %339 = math.tanh %338 : vector<8x128xf32>
      %340 = vector.extract_strided_slice %321 {offsets = [0, 384], sizes = [8, 128], strides = [1, 1]} : vector<8x512xf32> to vector<8x128xf32>
      %cst_140 = arith.constant 5.000000e-01 : f32
      %341 = vector.broadcast %cst_140 : f32 to vector<8x128xf32>
      %342 = arith.mulf %341, %340 : vector<8x128xf32>
      %343 = math.tanh %342 : vector<8x128xf32>
      %cst_141 = arith.constant 1.000000e+00 : f32
      %344 = vector.broadcast %cst_141 : f32 to vector<8x128xf32>
      %345 = arith.addf %344, %343 : vector<8x128xf32>
      %cst_142 = arith.constant 5.000000e-01 : f32
      %346 = vector.broadcast %cst_142 : f32 to vector<8x128xf32>
      %347 = arith.mulf %346, %345 : vector<8x128xf32>
      %348 = arith.mulf %337, %308 : vector<8x128xf32>
      %349 = arith.mulf %329, %339 : vector<8x128xf32>
      %350 = arith.addf %348, %349 : vector<8x128xf32>
      %351 = math.tanh %350 : vector<8x128xf32>
      %352 = arith.mulf %347, %351 : vector<8x128xf32>
      %c0_143 = arith.constant 0 : index
      %c0_144 = arith.constant 0 : index
      %c0_145 = arith.constant 0 : index
      %353 = vector.load %arg6[%c0_143, %c0_144, %c0_145] : memref<8x8x128xf32, #tpu.memory_space<vmem>>, vector<1x8x128xf32>
      %354 = vector.shape_cast %353 : vector<1x8x128xf32> to vector<8x128xf32>
      %355 = vector.shape_cast %352 : vector<8x128xf32> to vector<1x8x128xf32>
      tpu.vector_store %arg6[%c0_143, %c0_144, %c0_145], %355 {strides = array<i32>} : memref<8x8x128xf32, #tpu.memory_space<vmem>>, vector<1x8x128xf32>,
      %c0_146 = arith.constant 0 : index
      %c0_147 = arith.constant 0 : index
      %356 = vector.load %arg9[%c0_146, %c0_147] : memref<8x128xf32, #tpu.memory_space<vmem>>, vector<8x128xf32>
      tpu.vector_store %arg9[%c0_146, %c0_147], %352 {strides = array<i32>} : memref<8x128xf32, #tpu.memory_space<vmem>>, vector<8x128xf32>,
      %c0_148 = arith.constant 0 : index
      %c0_149 = arith.constant 0 : index
      %357 = vector.load %arg10[%c0_148, %c0_149] : memref<8x128xf32, #tpu.memory_space<vmem>>, vector<8x128xf32>
      tpu.vector_store %arg10[%c0_148, %c0_149], %350 {strides = array<i32>} : memref<8x128xf32, #tpu.memory_space<vmem>>, vector<8x128xf32>,
    } else {
    }
    %c0_i32_12 = arith.constant 0 : i32
    %15 = arith.cmpi eq, %arg1, %c0_i32_12 : i32
    %16 = arith.extui %15 : i1 to i32
    %c0_i32_13 = arith.constant 0 : i32
    %17 = arith.cmpi ne, %16, %c0_i32_13 : i32
    scf.if %17 {
      %c0_14 = arith.constant 0 : index
      %c0_15 = arith.constant 0 : index
      %18 = vector.load %arg9[%c0_14, %c0_15] : memref<8x128xf32, #tpu.memory_space<vmem>>, vector<8x128xf32>
      %c0_16 = arith.constant 0 : index
      %c0_17 = arith.constant 0 : index
      %19 = vector.load %arg7[%c0_16, %c0_17] : memref<8x128xf32, #tpu.memory_space<vmem>>, vector<8x128xf32>
      tpu.vector_store %arg7[%c0_16, %c0_17], %18 {strides = array<i32>} : memref<8x128xf32, #tpu.memory_space<vmem>>, vector<8x128xf32>,
      %c0_18 = arith.constant 0 : index
      %c0_19 = arith.constant 0 : index
      %20 = vector.load %arg10[%c0_18, %c0_19] : memref<8x128xf32, #tpu.memory_space<vmem>>, vector<8x128xf32>
      %c0_20 = arith.constant 0 : index
      %c0_21 = arith.constant 0 : index
      %21 = vector.load %arg8[%c0_20, %c0_21] : memref<8x128xf32, #tpu.memory_space<vmem>>, vector<8x128xf32>
      tpu.vector_store %arg8[%c0_20, %c0_21], %20 {strides = array<i32>} : memref<8x128xf32, #tpu.memory_space<vmem>>, vector<8x128xf32>,
    } else {
    }
    return
  }
  func.func @transform_0(%arg0: i32, %arg1: i32) -> (i32, i32, i32) {
    %c1_i32 = arith.constant 1 : i32
    %0 = arith.subi %c1_i32, %arg0 : i32
    %1 = arith.muli %0, %arg1 : i32
    %c0_i32 = arith.constant 0 : i32
    %2 = arith.subi %c0_i32, %arg1 : i32
    %3 = arith.muli %arg0, %2 : i32
    %4 = arith.addi %1, %3 : i32
    %c0_i32_0 = arith.constant 0 : i32
    %c0_i32_1 = arith.constant 0 : i32
    %c0_i32_2 = arith.constant 0 : i32
    return %4, %c0_i32_0, %c0_i32_1 : i32, i32, i32
  }
  func.func @transform_1(%arg0: i32, %arg1: i32) -> (i32, i32, i32) {
    %c0_i32 = arith.constant 0 : i32
    %c0_i32_0 = arith.constant 0 : i32
    %c0_i32_1 = arith.constant 0 : i32
    return %arg0, %c0_i32, %c0_i32_0 : i32, i32, i32
  }
  func.func @transform_2(%arg0: i32, %arg1: i32) -> (i32, i32, i32) {
    %c0_i32 = arith.constant 0 : i32
    %c0_i32_0 = arith.constant 0 : i32
    %c0_i32_1 = arith.constant 0 : i32
    return %arg0, %c0_i32, %c0_i32_0 : i32, i32, i32
  }
  func.func @transform_3(%arg0: i32, %arg1: i32) -> (i32, i32, i32) {
    %c0_i32 = arith.constant 0 : i32
    %c0_i32_0 = arith.constant 0 : i32
    %c0_i32_1 = arith.constant 0 : i32
    return %arg0, %c0_i32, %c0_i32_0 : i32, i32, i32
  }
  func.func @transform_4(%arg0: i32, %arg1: i32) -> (i32, i32, i32) {
    %c1_i32 = arith.constant 1 : i32
    %0 = arith.subi %c1_i32, %arg0 : i32
    %1 = arith.muli %0, %arg1 : i32
    %c0_i32 = arith.constant 0 : i32
    %2 = arith.subi %c0_i32, %arg1 : i32
    %3 = arith.muli %arg0, %2 : i32
    %4 = arith.addi %1, %3 : i32
    %c0_i32_0 = arith.constant 0 : i32
    %c0_i32_1 = arith.constant 0 : i32
    return %4, %c0_i32_0, %arg0 : i32, i32, i32
  }
  func.func @transform_5(%arg0: i32, %arg1: i32) -> (i32, i32) {
    %c0_i32 = arith.constant 0 : i32
    %c0_i32_0 = arith.constant 0 : i32
    return %c0_i32, %arg0 : i32, i32
  }
  func.func @transform_6(%arg0: i32, %arg1: i32) -> (i32, i32) {
    %c0_i32 = arith.constant 0 : i32
    %c0_i32_0 = arith.constant 0 : i32
    return %c0_i32, %arg0 : i32, i32
  }
}

</mosaic_0001>

<llo_original>
// kernel: encoder_forward.1
$region0: #{encoder_forward.1}
  #allocation0 [shape = 'u32[]', space=smem, size = 0x4, offset = 0x4, fixed_abs, tag = 'smem constant byte address 0x4 - core index']
  #allocation1 [shape = 'u32[72,128]{1,0:T(1,128)}', space=vmem, size = 0x9000, scoped, tag = 'internal scratch']
  #allocation2 [shape = 'f32[8,128]{1,0:T(8,128)}', space=vmem, size = 0x1000, scoped, tag = 'scratch operand']
  #allocation3 [shape = 'f32[8,128]{1,0:T(8,128)}', space=vmem, size = 0x1000, scoped, tag = 'scratch operand']
  %s0 = inlined_call_operand.vmem [shape: bf16[8,8,32], index: 0, kind: input, shape index: {}]
  %s1 = inlined_call_operand.vmem [shape: bf16[2,32,512], index: 1, kind: input, shape index: {}]
  %s2 = inlined_call_operand.hbm [shape: bf16[2,128,512], index: 2, kind: input, shape index: {}]
  %s3 = inlined_call_operand.vmem [shape: f32[2,1,512], index: 3, kind: input, shape index: {}]
  %s4 = inlined_call_operand.hbm [shape: f32[8,8,256], index: 4, kind: output, shape index: {0}]
  %s5 = inlined_call_operand.hbm [shape: f32[8,256], index: 5, kind: output, shape index: {1}]
  %s6 = inlined_call_operand.hbm [shape: f32[8,256], index: 6, kind: output, shape index: {2}]
  %7 = xla_tuple %s4, %s5, %s6
  %s8 = sld [smem:[#allocation0]]
  $region85: #{encoder_forward.1} parent=0
    _
  %s10 = ssub.s32 1, %s8
  %s11 = scalar_select 0, %s10, %s8
  $region1: #{encoder_forward.1} parent=0
    #allocation4 [shape = 'u8[262144]{0}', space=vmem, size = 0x40000, scoped, tag = 'input window, operand 2']
    #allocation5 [shape = 's32[2]{0}', space=sflag, size = 0x8, scoped, tag = 'scoped memory for encoder_forward.1']
    #allocation6 [shape = 's32[2]{0}', space=sflag, size = 0x8, scoped, tag = 'scoped memory for encoder_forward.1']
    #allocation7 [shape = 'u8[65536]{0}', space=vmem, size = 0x10000, scoped, tag = 'output window, operand 0']
    #allocation8 [shape = 'u8[8192]{0}', space=vmem, size = 0x2000, scoped, tag = 'output window, operand 1']
    #allocation9 [shape = 's32[2]{0}', space=sflag, size = 0x8, scoped, tag = 'scoped memory for encoder_forward.1']
    #allocation10 [shape = 'u8[8192]{0}', space=vmem, size = 0x2000, scoped, tag = 'output window, operand 2']
    %12 = vsyncpa [#allocation5], 0
    %s13 = scalar_lea.sflag [#allocation5], 1
    %14 = vsyncpa %s13, 0
    %15 = vsyncpa [#allocation6], 0
    %s16 = scalar_lea.sflag [#allocation6], 1
    %17 = vsyncpa %s16, 0
    %18 = vsyncpa [#allocation9], 0
    %s19 = scalar_lea.sflag [#allocation9], 1
    %20 = vsyncpa %s19, 0
    loop: start=0, step=1, limit=4
    $region2: #{encoder_forward.1} parent=1 // loop_pre_header
      _
    $region3: #{encoder_forward.1} parent=1 // loop_header
      %s22 = sphi 0, %s26
      %p23 = scmp.ge.s32.totalorder %s22, 4
      %s29 = sphi 0, %s41
      %s30 = sphi 0, %s37
      %s31 = sphi 0, %s29
      %s32 = sphi 0, %s30
      %s33 = sphi 0, %s31
      %s34 = sphi 0, %s32
      %s54 = sphi 0, %s56
      %s57 = sphi 0, %s54
      %s58 = sphi 0, %s57
      %s74 = sphi 0, %s58
      %s80 = sphi 0, %s82
      %s83 = sphi 0, %s80
      %s84 = sphi 0, %s83
      %s100 = sphi 0, %s84
      %s106 = sphi 0, %s108
      %s109 = sphi 0, %s106
      %s110 = sphi 0, %s109
      %s126 = sphi 0, %s110
      %s132 = sphi 0, %s134
      %s135 = sphi 0, %s132
      %s136 = sphi 0, %s135
      %s152 = sphi 0, %s136
      %s170 = sphi 0, %s172
      %s173 = sphi 0, %s170
      %s174 = sphi 0, %s173
      %s190 = sphi 0, %s174
      %s196 = sphi 0, %s198
      %s199 = sphi 0, %s196
      %s200 = sphi 0, %s199
      %s216 = sphi 0, %s200
      %s222 = sphi 0, %s224
      %s225 = sphi 0, %s222
      %s226 = sphi 0, %s225
      %s242 = sphi 0, %s226
    $region4: #{encoder_forward.1} parent=1 // loop_header_branch
      %25 = sbr.rel (%p23) target = $region8
    $region5: #{encoder_forward.1} parent=1 // loop_body
      %s27 = ssub.s32 %s22, 1
      %s28 = ssub.s32 %s22, 2
      %s35 = sadd.s32 1, %s30
      %p36 = scmp.ge.s32.totalorder %s35, 1
      %s37 = scalar_select %p36, 0, %s35
      %s38 = sadd.s32 1, %s29
      %s39 = scalar_select %p36, %s38, %s29
      %p40 = scmp.ge.s32.totalorder %s39, 2
      %s41 = scalar_select %p40, 0, %s39
      %s42 = ssub.s32 1, %s29
      %s43 = smul.u32 %s42, %s30
      %s44 = ssub.s32 0, %s30
      %s45 = smul.u32 %s29, %s44
      %s46 = sadd.s32 %s43, %s45
      %s47 = ssub.s32 1, %s41
      %s48 = smul.u32 %s47, %s37
      %s49 = ssub.s32 0, %s37
      %s50 = smul.u32 %s41, %s49
      %s51 = sadd.s32 %s48, %s50
      %s52 = ssub.s32 %s46, %s51
      %p53 = scmp.eq.s32.totalorder %s52, 0
      %s55 = sadd.s32 %s54, 1
      %s56 = scalar_select %p53, %s54, %s55
      %p59 = pneg %p53
      %p60 = scmp.eq.s32.totalorder %s22, 1
      %p61 = por %p59, %p60
      %p62 = scmp.ne.s32.totalorder %s54, %s57
      %p63 = scmp.eq.s32.totalorder %s22, 0
      %p64 = por %p62, %p63
      %p65 = scmp.ne.s32.totalorder %s54, %s57
      %p66 = scmp.eq.s32.totalorder %s27, 1
      %p67 = por %p65, %p66
      %p68 = scmp.ne.s32.totalorder %s57, %s58
      %p69 = scmp.eq.s32.totalorder %s27, 0
      %p70 = por %p68, %p69
      %p71 = scmp.ne.s32.totalorder %s57, %s58
      %p72 = scmp.eq.s32.totalorder %s28, 1
      %p73 = por %p71, %p72
      %p75 = scmp.ne.s32.totalorder %s58, %s74
      %p76 = scmp.eq.s32.totalorder %s28, 0
      %p77 = por %p75, %p76
      %s78 = ssub.s32 %s29, %s41
      %p79 = scmp.eq.s32.totalorder %s78, 0
      %s81 = sadd.s32 %s80, 1
      %s82 = scalar_select %p79, %s80, %s81
      %p85 = pneg %p79
      %p86 = scmp.eq.s32.totalorder %s22, 1
      %p87 = por %p85, %p86
      %p88 = scmp.ne.s32.totalorder %s80, %s83
      %p89 = scmp.eq.s32.totalorder %s22, 0
      %p90 = por %p88, %p89
      %p91 = scmp.ne.s32.totalorder %s80, %s83
      %p92 = scmp.eq.s32.totalorder %s27, 1
      %p93 = por %p91, %p92
      %p94 = scmp.ne.s32.totalorder %s83, %s84
      %p95 = scmp.eq.s32.totalorder %s27, 0
      %p96 = por %p94, %p95
      %p97 = scmp.ne.s32.totalorder %s83, %s84
      %p98 = scmp.eq.s32.totalorder %s28, 1
      %p99 = por %p97, %p98
      %p101 = scmp.ne.s32.totalorder %s84, %s100
      %p102 = scmp.eq.s32.totalorder %s28, 0
      %p103 = por %p101, %p102
      %s104 = ssub.s32 %s29, %s41
      %p105 = scmp.eq.s32.totalorder %s104, 0
      %s107 = sadd.s32 %s106, 1
      %s108 = scalar_select %p105, %s106, %s107
      %p111 = pneg %p105
      %p112 = scmp.eq.s32.totalorder %s22, 1
      %p113 = por %p111, %p112
      %p114 = scmp.ne.s32.totalorder %s106, %s109
      %p115 = scmp.eq.s32.totalorder %s22, 0
      %p116 = por %p114, %p115
      %p117 = scmp.ne.s32.totalorder %s106, %s109
      %p118 = scmp.eq.s32.totalorder %s27, 1
      %p119 = por %p117, %p118
      %p120 = scmp.ne.s32.totalorder %s109, %s110
      %p121 = scmp.eq.s32.totalorder %s27, 0
      %p122 = por %p120, %p121
      %p123 = scmp.ne.s32.totalorder %s109, %s110
      %p124 = scmp.eq.s32.totalorder %s28, 1
      %p125 = por %p123, %p124
      %p127 = scmp.ne.s32.totalorder %s110, %s126
      %p128 = scmp.eq.s32.totalorder %s28, 0
      %p129 = por %p127, %p128
      %s130 = ssub.s32 %s29, %s41
      %p131 = scmp.eq.s32.totalorder %s130, 0
      %s133 = sadd.s32 %s132, 1
      %s134 = scalar_select %p131, %s132, %s133
      %p137 = pneg %p131
      %p138 = scmp.eq.s32.totalorder %s22, 1
      %p139 = por %p137, %p138
      %p140 = scmp.ne.s32.totalorder %s132, %s135
      %p141 = scmp.eq.s32.totalorder %s22, 0
      %p142 = por %p140, %p141
      %p143 = scmp.ne.s32.totalorder %s132, %s135
      %p144 = scmp.eq.s32.totalorder %s27, 1
      %p145 = por %p143, %p144
      %p146 = scmp.ne.s32.totalorder %s135, %s136
      %p147 = scmp.eq.s32.totalorder %s27, 0
      %p148 = por %p146, %p147
      %p149 = scmp.ne.s32.totalorder %s135, %s136
      %p150 = scmp.eq.s32.totalorder %s28, 1
      %p151 = por %p149, %p150
      %p153 = scmp.ne.s32.totalorder %s136, %s152
      %p154 = scmp.eq.s32.totalorder %s28, 0
      %p155 = por %p153, %p154
      %s156 = ssub.s32 1, %s29
      %s157 = smul.u32 %s156, %s30
      %s158 = ssub.s32 0, %s30
      %s159 = smul.u32 %s29, %s158
      %s160 = sadd.s32 %s157, %s159
      %s161 = ssub.s32 1, %s41
      %s162 = smul.u32 %s161, %s37
      %s163 = ssub.s32 0, %s37
      %s164 = smul.u32 %s41, %s163
      %s165 = sadd.s32 %s162, %s164
      %s166 = ssub.s32 %s160, %s165
      %s167 = ssub.s32 %s29, %s41
      %s168 = sor.u32 %s166, %s167
      %p169 = scmp.eq.s32.totalorder %s168, 0
      %s171 = sadd.s32 %s170, 1
      %s172 = scalar_select %p169, %s170, %s171
      %p175 = pneg %p169
      %p176 = scmp.eq.s32.totalorder %s22, 1
      %p177 = por %p175, %p176
      %p178 = scmp.ne.s32.totalorder %s170, %s173
      %p179 = scmp.eq.s32.totalorder %s22, 0
      %p180 = por %p178, %p179
      %p181 = scmp.ne.s32.totalorder %s170, %s173
      %p182 = scmp.eq.s32.totalorder %s27, 1
      %p183 = por %p181, %p182
      %p184 = scmp.ne.s32.totalorder %s173, %s174
      %p185 = scmp.eq.s32.totalorder %s27, 0
      %p186 = por %p184, %p185
      %p187 = scmp.ne.s32.totalorder %s173, %s174
      %p188 = scmp.eq.s32.totalorder %s28, 1
      %p189 = por %p187, %p188
      %p191 = scmp.ne.s32.totalorder %s174, %s190
      %p192 = scmp.eq.s32.totalorder %s28, 0
      %p193 = por %p191, %p192
      %s194 = ssub.s32 %s29, %s41
      %p195 = scmp.eq.s32.totalorder %s194, 0
      %s197 = sadd.s32 %s196, 1
      %s198 = scalar_select %p195, %s196, %s197
      %p201 = pneg %p195
      %p202 = scmp.eq.s32.totalorder %s22, 1
      %p203 = por %p201, %p202
      %p204 = scmp.ne.s32.totalorder %s196, %s199
      %p205 = scmp.eq.s32.totalorder %s22, 0
      %p206 = por %p204, %p205
      %p207 = scmp.ne.s32.totalorder %s196, %s199
      %p208 = scmp.eq.s32.totalorder %s27, 1
      %p209 = por %p207, %p208
      %p210 = scmp.ne.s32.totalorder %s199, %s200
      %p211 = scmp.eq.s32.totalorder %s27, 0
      %p212 = por %p210, %p211
      %p213 = scmp.ne.s32.totalorder %s199, %s200
      %p214 = scmp.eq.s32.totalorder %s28, 1
      %p215 = por %p213, %p214
      %p217 = scmp.ne.s32.totalorder %s200, %s216
      %p218 = scmp.eq.s32.totalorder %s28, 0
      %p219 = por %p217, %p218
      %s220 = ssub.s32 %s29, %s41
      %p221 = scmp.eq.s32.totalorder %s220, 0
      %s223 = sadd.s32 %s222, 1
      %s224 = scalar_select %p221, %s222, %s223
      %p227 = pneg %p221
      %p228 = scmp.eq.s32.totalorder %s22, 1
      %p229 = por %p227, %p228
      %p230 = scmp.ne.s32.totalorder %s222, %s225
      %p231 = scmp.eq.s32.totalorder %s22, 0
      %p232 = por %p230, %p231
      %p233 = scmp.ne.s32.totalorder %s222, %s225
      %p234 = scmp.eq.s32.totalorder %s27, 1
      %p235 = por %p233, %p234
      %p236 = scmp.ne.s32.totalorder %s225, %s226
      %p237 = scmp.eq.s32.totalorder %s27, 0
      %p238 = por %p236, %p237
      %p239 = scmp.ne.s32.totalorder %s225, %s226
      %p240 = scmp.eq.s32.totalorder %s28, 1
      %p241 = por %p239, %p240
      %p243 = scmp.ne.s32.totalorder %s226, %s242
      %p244 = scmp.eq.s32.totalorder %s28, 0
      %p245 = por %p243, %p244
      %p246 = scmp.le.s32.totalorder 1, %s22
      %p247 = scmp.lt.s32.totalorder %s22, 3
      %p248 = pnand %p246, %p247
      %p249 = pneg %p248
      // Predicated region
      $region9: #{encoder_forward.1} parent=5 // pred_check
        _
      $region10: #{encoder_forward.1} parent=5 // pred_check_branch
        %251 = sbr.rel (%p248) target = $region12
      $region11: #{encoder_forward.1} parent=5 // pred_region
        %s252 = ssub.s32 %s22, 1
      $region12: #{encoder_forward.1} parent=5 // pred_fallthru
        _
      %p253 = scmp.lt.s32.totalorder %s22, 2
      // Predicated region
      $region13: #{encoder_forward.1} parent=5 // pred_check
        %p254 = pneg %p253
      $region14: #{encoder_forward.1} parent=5 // pred_check_branch
        %256 = sbr.rel (%p254) target = $region16
      $region15: #{encoder_forward.1} parent=5 // pred_region
        // Predicated region
        $region17: #{encoder_forward.1} parent=15 // pred_check
          %p257 = pneg %p64
        $region18: #{encoder_forward.1} parent=15 // pred_check_branch
          %259 = sbr.rel (%p257) target = $region20
        $region19: #{encoder_forward.1} parent=15 // pred_region
          %s260 = ssub.s32 1, %s29
          %s261 = smul.u32 %s260, %s30
          %s262 = ssub.s32 0, %s30
          %s263 = smul.u32 %s29, %s262
          %s264 = sadd.s32 %s261, %s263
          %s265 = smul.u32 8, %s264
          %p266 = scmp.lt.s32.totalorder %s265, 7
          %s267 = scalar_select %p266, %s265, 7
          %s268 = smul.addr %s267, 4
          %s269 = scalar_lea.vmem %s0, %s268
          %s270 = ssub.s32 1, %s29
          %s271 = smul.u32 %s270, %s30
          %s272 = ssub.s32 0, %s30
          %s273 = smul.u32 %s29, %s272
          %s274 = sadd.s32 %s271, %s273
          %s275 = smul.u32 8, %s274
        $region20: #{encoder_forward.1} parent=15 // pred_fallthru
          _
        // Predicated region
        $region21: #{encoder_forward.1} parent=15 // pred_check
          %p276 = pneg %p90
        $region22: #{encoder_forward.1} parent=15 // pred_check_branch
          %278 = sbr.rel (%p276) target = $region24
        $region23: #{encoder_forward.1} parent=15 // pred_region
          %p279 = scmp.lt.s32.totalorder %s29, 1
          %s280 = scalar_select %p279, %s29, 1
          %s281 = smul.addr %s280, 16
          %s282 = smul.addr %s281, 4
          %s283 = scalar_lea.vmem %s1, %s282
        $region24: #{encoder_forward.1} parent=15 // pred_fallthru
          _
        // Predicated region
        $region25: #{encoder_forward.1} parent=15 // pred_check
          %p284 = pneg %p116
        $region26: #{encoder_forward.1} parent=15 // pred_check_branch
          %286 = sbr.rel (%p284) target = $region28
        $region27: #{encoder_forward.1} parent=15 // pred_region
          %s287 = sand.u32 %s106, 1
          %s288 = scalar_lea.sflag [#allocation5], %s287
          %s289 = sand.u32 %s106, 1
          %s290 = smul.addr %s289, 256
          %s291 = scalar_lea.vmem [#allocation4], %s290
          %293 = vsyncadd %s288, 0
          %s294 = smul.addr %s29, 64
          %s295 = smul.addr %s294, 4
          %s296 = scalar_lea.hbm %s2, %s295
          %s297 = sshll.u32 %s296, 4
          %s298 = int_to_ptr.hbm [resolvable:$true] %s297
          %s299 = sshll.u32 %s291, 4
          %s300 = int_to_ptr.vmem [resolvable:$true] %s299
          %305 = dma.hbm_to_vmem [thread:$0]  %s298, 4096, %s300, %s288, 256, 256, 16
        $region28: #{encoder_forward.1} parent=15 // pred_fallthru
          _
        // Predicated region
        $region29: #{encoder_forward.1} parent=15 // pred_check
          %p306 = pneg %p142
        $region30: #{encoder_forward.1} parent=15 // pred_check_branch
          %308 = sbr.rel (%p306) target = $region32
        $region31: #{encoder_forward.1} parent=15 // pred_region
          %p309 = scmp.lt.s32.totalorder %s29, 1
          %s310 = scalar_select %p309, %s29, 1
          %s311 = smul.addr %s310, 4
          %s312 = scalar_lea.vmem %s3, %s311
        $region32: #{encoder_forward.1} parent=15 // pred_fallthru
          _
      $region16: #{encoder_forward.1} parent=5 // pred_fallthru
        _
      %p313 = scmp.le.s32.totalorder 1, %s22
      %p314 = scmp.lt.s32.totalorder %s22, 3
      %p315 = pnand %p313, %p314
      %p316 = pneg %p315
      // Predicated region
      $region33: #{encoder_forward.1} parent=5 // pred_check
        _
      $region34: #{encoder_forward.1} parent=5 // pred_check_branch
        %318 = sbr.rel (%p315) target = $region36
      $region35: #{encoder_forward.1} parent=5 // pred_region
        %s319 = ssub.s32 %s22, 1
        %s320 = sand.u32 %s109, 1
        %s321 = scalar_lea.sflag [#allocation5], %s320
        %s322 = sand.u32 %s109, 1
        %s323 = smul.addr %s322, 256
        %s324 = scalar_lea.vmem [#allocation4], %s323
        // Predicated region
        $region37: #{encoder_forward.1} parent=35 // pred_check
          %p325 = pneg %p122
        $region38: #{encoder_forward.1} parent=35 // pred_check_branch
          %327 = sbr.rel (%p325) target = $region40
        $region39: #{encoder_forward.1} parent=35 // pred_region
          %329 = dma.done %s321, 4096
        $region40: #{encoder_forward.1} parent=35 // pred_fallthru
          _
        %s330 = ssub.s32 1, %s31
        %s331 = smul.u32 %s330, %s32
        %s332 = ssub.s32 0, %s32
        %s333 = smul.u32 %s31, %s332
        %s334 = sadd.s32 %s331, %s333
        %s335 = smul.u32 8, %s334
        %p336 = scmp.lt.s32.totalorder %s335, 7
        %s337 = scalar_select %p336, %s335, 7
        %s338 = smul.addr %s337, 4
        %s339 = scalar_lea.vmem %s0, %s338
        %p340 = pneg %p70
        %p341 = pneg %p67
        %p342 = scmp.lt.s32.totalorder %s31, 1
        %s343 = scalar_select %p342, %s31, 1
        %s344 = smul.addr %s343, 16
        %s345 = smul.addr %s344, 4
        %s346 = scalar_lea.vmem %s1, %s345
        %p347 = pneg %p96
        %p348 = pneg %p93
        %s349 = sand.u32 %s109, 1
        %s350 = scalar_lea.sflag [#allocation5], %s349
        %s351 = sand.u32 %s109, 1
        %s352 = smul.addr %s351, 256
        %s353 = scalar_lea.vmem [#allocation4], %s352
        %p354 = pneg %p122
        %p355 = pneg %p119
        %p356 = scmp.lt.s32.totalorder %s31, 1
        %s357 = scalar_select %p356, %s31, 1
        %s358 = smul.addr %s357, 4
        %s359 = scalar_lea.vmem %s3, %s358
        %p360 = pneg %p148
        %p361 = pneg %p145
        %p362 = pneg %p186
        %p363 = pneg %p183
        %s364 = sand.u32 %s173, 1
        %s365 = scalar_lea.sflag [#allocation6], %s364
        %s366 = sand.u32 %s173, 1
        %s367 = smul.addr %s366, 64
        %s368 = scalar_lea.vmem [#allocation7], %s367
        %p369 = pneg %p212
        %p370 = pneg %p209
        %s371 = sand.u32 %s27, 1
        %s372 = scalar_lea.sflag [#allocation9], %s371
        %s373 = sand.u32 %s199, 1
        %s374 = smul.addr %s373, 8
        %s375 = scalar_lea.vmem [#allocation8], %s374
        %p376 = pneg %p238
        %p377 = pneg %p235
        %s378 = sand.u32 %s27, 1
        %s379 = scalar_lea.sflag [#allocation9], %s378
        %s380 = sand.u32 %s225, 1
        %s381 = smul.addr %s380, 8
        %s382 = scalar_lea.vmem [#allocation10], %s381
        %s383 = ssub.s32 1, %s31
        %s384 = smul.u32 %s383, %s32
        %s385 = ssub.s32 0, %s32
        %s386 = smul.u32 %s31, %s385
        %s387 = sadd.s32 %s384, %s386
        %s388 = smul.u32 8, %s387
        %p389 = scmp.lt.s32.totalorder %s388, 7
        %s390 = scalar_select %p389, %s388, 7
        %s391 = smul.addr %s390, 4
        %s392 = scalar_lea.vmem %s0, %s391
        %s393 = ssub.s32 1, %s31
        %s394 = smul.u32 %s393, %s32
        %s395 = ssub.s32 0, %s32
        %s396 = smul.u32 %s31, %s395
        %s397 = sadd.s32 %s394, %s396
        %s398 = smul.u32 8, %s397
        %p399 = scmp.lt.s32.totalorder %s31, 1
        %s400 = scalar_select %p399, %s31, 1
        %s401 = smul.addr %s400, 16
        %s402 = smul.addr %s401, 4
        %s403 = scalar_lea.vmem %s1, %s402
        %p404 = scmp.lt.s32.totalorder %s31, 1
        %s405 = scalar_select %p404, %s31, 1
        %s406 = smul.addr %s405, 4
        %s407 = scalar_lea.vmem %s3, %s406
        %s408 = ssub.s32 1, %s31
        %s409 = smul.u32 %s408, %s32
        %s410 = ssub.s32 0, %s32
        %s411 = smul.u32 %s31, %s410
        %s412 = sadd.s32 %s409, %s411
        %s413 = smul.u32 8, %s412
        %p415 = scmp.eq.s32.totalorder %s32, 0
        // Predicated region
        $region41: #{encoder_forward.1} parent=35 // pred_check
          %p416 = pneg %p415
        $region42: #{encoder_forward.1} parent=35 // pred_check_branch
          %418 = sbr.rel (%p416) target = $region44
        $region43: #{encoder_forward.1} parent=35 // pred_region
          %419 = vst [vmem:[#allocation2] sm:$0xff] 0.0
          %420 = vst [vmem:[#allocation3] sm:$0xff] 0.0
        $region44: #{encoder_forward.1} parent=35 // pred_fallthru
          _
        %v421 = vld [vmem:[%s403] sm:$0xff]
        %v422 = vld [vmem:[%s403 + $0x8] sm:$0xff]
        %v423 = vld [vmem:[%s403 + $0x10] sm:$0xff]
        %v424 = vld [vmem:[%s403 + $0x18] sm:$0xff]
        %v425 = vld [vmem:[%s403 + $0x20] sm:$0xff]
        %v426 = vld [vmem:[%s403 + $0x28] sm:$0xff]
        %v427 = vld [vmem:[%s403 + $0x30] sm:$0xff]
        %v428 = vld [vmem:[%s403 + $0x38] sm:$0xff]
        %v429 = vld [vmem:[%s324] sm:$0xff]
        %v430 = vld [vmem:[%s324 + $0x8] sm:$0xff]
        %v431 = vld [vmem:[%s324 + $0x10] sm:$0xff]
        %v432 = vld [vmem:[%s324 + $0x18] sm:$0xff]
        %v433 = vld [vmem:[%s324 + $0x20] sm:$0xff]
        %v434 = vld [vmem:[%s324 + $0x28] sm:$0xff]
        %v435 = vld [vmem:[%s324 + $0x30] sm:$0xff]
        %v436 = vld [vmem:[%s324 + $0x38] sm:$0xff]
        %v437 = vld [vmem:[%s324 + $0x40] sm:$0xff]
        %v438 = vld [vmem:[%s324 + $0x48] sm:$0xff]
        %v439 = vld [vmem:[%s324 + $0x50] sm:$0xff]
        %v440 = vld [vmem:[%s324 + $0x58] sm:$0xff]
        %v441 = vld [vmem:[%s324 + $0x60] sm:$0xff]
        %v442 = vld [vmem:[%s324 + $0x68] sm:$0xff]
        %v443 = vld [vmem:[%s324 + $0x70] sm:$0xff]
        %v444 = vld [vmem:[%s324 + $0x78] sm:$0xff]
        %v445 = vld [vmem:[%s324 + $0x80] sm:$0xff]
        %v446 = vld [vmem:[%s324 + $0x88] sm:$0xff]
        %v447 = vld [vmem:[%s324 + $0x90] sm:$0xff]
        %v448 = vld [vmem:[%s324 + $0x98] sm:$0xff]
        %v449 = vld [vmem:[%s324 + $0xa0] sm:$0xff]
        %v450 = vld [vmem:[%s324 + $0xa8] sm:$0xff]
        %v451 = vld [vmem:[%s324 + $0xb0] sm:$0xff]
        %v452 = vld [vmem:[%s324 + $0xb8] sm:$0xff]
        %v453 = vld [vmem:[%s324 + $0xc0] sm:$0xff]
        %v454 = vld [vmem:[%s324 + $0xc8] sm:$0xff]
        %v455 = vld [vmem:[%s324 + $0xd0] sm:$0xff]
        %v456 = vld [vmem:[%s324 + $0xd8] sm:$0xff]
        %v457 = vld [vmem:[%s324 + $0xe0] sm:$0xff]
        %v458 = vld [vmem:[%s324 + $0xe8] sm:$0xff]
        %v459 = vld [vmem:[%s324 + $0xf0] sm:$0xff]
        %v460 = vld [vmem:[%s324 + $0xf8] sm:$0xff]
        %v461 = vld [vmem:[%s407] sm:$0xf]
        %p462 = scmp.eq.s32.totalorder %s31, 0
        // Predicated region
        $region45: #{encoder_forward.1} parent=35 // pred_check
          %p463 = pneg %p462
        $region46: #{encoder_forward.1} parent=35 // pred_check_branch
          %465 = sbr.rel (%p463) target = $region48
        $region47: #{encoder_forward.1} parent=35 // pred_region
          %v466 = vld [vmem:[#allocation2] sm:$0xff]
          %v467 = vld [vmem:[#allocation3] sm:$0xff]
          %v468 = vld [vmem:[%s392] sm:$0xf]
          %v470 = vperm.slane %v461, 0
          %v471 = vperm.slane %v461, 1
          %v472 = vperm.slane %v461, 2
          %v473 = vperm.slane %v461, 3
          %v486 = vunpack.c.l.b16 %v421
          %v487 = vunpack.c.h.b16 %v421
          %v488 = vunpack.c.l.b16 %v422
          %v489 = vunpack.c.h.b16 %v422
          %v490 = vunpack.c.l.b16 %v423
          %v491 = vunpack.c.h.b16 %v423
          %v492 = vunpack.c.l.b16 %v424
          %v493 = vunpack.c.h.b16 %v424
          %v494 = vunpack.c.l.b16 %v425
          %v495 = vunpack.c.h.b16 %v425
          %v496 = vunpack.c.l.b16 %v426
          %v497 = vunpack.c.h.b16 %v426
          %v498 = vunpack.c.l.b16 %v427
          %v499 = vunpack.c.h.b16 %v427
          %v500 = vunpack.c.l.b16 %v428
          %v501 = vunpack.c.h.b16 %v428
          %v502 = vpack.c.b16 %v490, %v486
          %v503 = vpack.c.b16 %v491, %v487
          %v504 = vpack.c.b16 %v492, %v488
          %v505 = vpack.c.b16 %v493, %v489
          %v506 = vpack.c.b16 %v498, %v494
          %v507 = vpack.c.b16 %v499, %v495
          %v508 = vpack.c.b16 %v500, %v496
          %v509 = vpack.c.b16 %v501, %v497
          %vm518 = vcmask 261120
          %v520 = vsel %vm518, %v468, 0
          %522 = vmatpush.bf16.msra.mxu0 0
          %523 = vmatpush.bf16.msra.mxu0 0
          %524 = vmatpush.bf16.msra.mxu0 0
          %525 = vmatpush.bf16.msra.mxu0 0
          %526 = vmatpush.bf16.msra.mxu0 0
          %527 = vmatpush.bf16.msra.mxu0 0
          %528 = vmatpush.bf16.msra.mxu0 %v506
          %529 = vmatpush.bf16.msra.mxu0 %v502
          %530 = vmatmul.bf16.gmra.mxu0 %v520
          %v531 = vpop.f32.mrf.mxu0
          %v532 = vadd.f32 %v470, %v531
          %v533 = vpop.f32.mrf.mxu0
          %534 = vdwg.mxu0
          %535 = vmatpush.bf16.msra.mxu0 0
          %536 = vmatpush.bf16.msra.mxu0 0
          %537 = vmatpush.bf16.msra.mxu0 0
          %538 = vmatpush.bf16.msra.mxu0 0
          %539 = vmatpush.bf16.msra.mxu0 0
          %540 = vmatpush.bf16.msra.mxu0 0
          %541 = vmatpush.bf16.msra.mxu0 %v507
          %542 = vmatpush.bf16.msra.mxu0 %v503
          %543 = vmatmul.bf16.gmra.mxu0 %v520
          %v544 = vpop.f32.mrf.mxu0
          %v545 = vadd.f32 %v471, %v544
          %v546 = vpop.f32.mrf.mxu0
          %547 = vdwg.mxu0
          %548 = vmatpush.bf16.msra.mxu0 0
          %549 = vmatpush.bf16.msra.mxu0 0
          %550 = vmatpush.bf16.msra.mxu0 0
          %551 = vmatpush.bf16.msra.mxu0 0
          %552 = vmatpush.bf16.msra.mxu0 0
          %553 = vmatpush.bf16.msra.mxu0 0
          %554 = vmatpush.bf16.msra.mxu0 %v508
          %555 = vmatpush.bf16.msra.mxu0 %v504
          %556 = vmatmul.bf16.gmra.mxu0 %v520
          %v557 = vpop.f32.mrf.mxu0
          %v558 = vadd.f32 %v472, %v557
          %v559 = vpop.f32.mrf.mxu0
          %560 = vdwg.mxu0
          %561 = vmatpush.bf16.msra.mxu0 0
          %562 = vmatpush.bf16.msra.mxu0 0
          %563 = vmatpush.bf16.msra.mxu0 0
          %564 = vmatpush.bf16.msra.mxu0 0
          %565 = vmatpush.bf16.msra.mxu0 0
          %566 = vmatpush.bf16.msra.mxu0 0
          %567 = vmatpush.bf16.msra.mxu0 %v509
          %568 = vmatpush.bf16.msra.mxu0 %v505
          %569 = vmatmul.bf16.gmra.mxu0 %v520
          %v570 = vpop.f32.mrf.mxu0
          %v571 = vadd.f32 %v473, %v570
          %v572 = vpop.f32.mrf.mxu0
          %573 = vdwg.mxu0
          %v574 = vpack.c.bf16 %v466, %v466
          %v607 = vunpack.c.l.b16 %v429
          %v608 = vunpack.c.h.b16 %v429
          %v609 = vunpack.c.l.b16 %v430
          %v610 = vunpack.c.h.b16 %v430
          %v611 = vunpack.c.l.b16 %v431
          %v612 = vunpack.c.h.b16 %v431
          %v613 = vunpack.c.l.b16 %v432
          %v614 = vunpack.c.h.b16 %v432
          %v615 = vunpack.c.l.b16 %v433
          %v616 = vunpack.c.h.b16 %v433
          %v617 = vunpack.c.l.b16 %v434
          %v618 = vunpack.c.h.b16 %v434
          %v619 = vunpack.c.l.b16 %v435
          %v620 = vunpack.c.h.b16 %v435
          %v621 = vunpack.c.l.b16 %v436
          %v622 = vunpack.c.h.b16 %v436
          %v623 = vunpack.c.l.b16 %v437
          %v624 = vunpack.c.h.b16 %v437
          %v625 = vunpack.c.l.b16 %v438
          %v626 = vunpack.c.h.b16 %v438
          %v627 = vunpack.c.l.b16 %v439
          %v628 = vunpack.c.h.b16 %v439
          %v629 = vunpack.c.l.b16 %v440
          %v630 = vunpack.c.h.b16 %v440
          %v631 = vunpack.c.l.b16 %v441
          %v632 = vunpack.c.h.b16 %v441
          %v633 = vunpack.c.l.b16 %v442
          %v634 = vunpack.c.h.b16 %v442
          %v635 = vunpack.c.l.b16 %v443
          %v636 = vunpack.c.h.b16 %v443
          %v637 = vunpack.c.l.b16 %v444
          %v638 = vunpack.c.h.b16 %v444
          %v639 = vunpack.c.l.b16 %v445
          %v640 = vunpack.c.h.b16 %v445
          %v641 = vunpack.c.l.b16 %v446
          %v642 = vunpack.c.h.b16 %v446
          %v643 = vunpack.c.l.b16 %v447
          %v644 = vunpack.c.h.b16 %v447
          %v645 = vunpack.c.l.b16 %v448
          %v646 = vunpack.c.h.b16 %v448
          %v647 = vunpack.c.l.b16 %v449
          %v648 = vunpack.c.h.b16 %v449
          %v649 = vunpack.c.l.b16 %v450
          %v650 = vunpack.c.h.b16 %v450
          %v651 = vunpack.c.l.b16 %v451
          %v652 = vunpack.c.h.b16 %v451
          %v653 = vunpack.c.l.b16 %v452
          %v654 = vunpack.c.h.b16 %v452
          %v655 = vunpack.c.l.b16 %v453
          %v656 = vunpack.c.h.b16 %v453
          %v657 = vunpack.c.l.b16 %v454
          %v658 = vunpack.c.h.b16 %v454
          %v659 = vunpack.c.l.b16 %v455
          %v660 = vunpack.c.h.b16 %v455
          %v661 = vunpack.c.l.b16 %v456
          %v662 = vunpack.c.h.b16 %v456
          %v663 = vunpack.c.l.b16 %v457
          %v664 = vunpack.c.h.b16 %v457
          %v665 = vunpack.c.l.b16 %v458
          %v666 = vunpack.c.h.b16 %v458
          %v667 = vunpack.c.l.b16 %v459
          %v668 = vunpack.c.h.b16 %v459
          %v669 = vunpack.c.l.b16 %v460
          %v670 = vunpack.c.h.b16 %v460
          %v671 = vpack.c.b16 %v611, %v607
          %v672 = vpack.c.b16 %v612, %v608
          %v673 = vpack.c.b16 %v613, %v609
          %v674 = vpack.c.b16 %v614, %v610
          %v675 = vpack.c.b16 %v619, %v615
          %v676 = vpack.c.b16 %v620, %v616
          %v677 = vpack.c.b16 %v621, %v617
          %v678 = vpack.c.b16 %v622, %v618
          %v679 = vpack.c.b16 %v627, %v623
          %v680 = vpack.c.b16 %v628, %v624
          %v681 = vpack.c.b16 %v629, %v625
          %v682 = vpack.c.b16 %v630, %v626
          %v683 = vpack.c.b16 %v635, %v631
          %v684 = vpack.c.b16 %v636, %v632
          %v685 = vpack.c.b16 %v637, %v633
          %v686 = vpack.c.b16 %v638, %v634
          %v687 = vpack.c.b16 %v643, %v639
          %v688 = vpack.c.b16 %v644, %v640
          %v689 = vpack.c.b16 %v645, %v641
          %v690 = vpack.c.b16 %v646, %v642
          %v691 = vpack.c.b16 %v651, %v647
          %v692 = vpack.c.b16 %v652, %v648
          %v693 = vpack.c.b16 %v653, %v649
          %v694 = vpack.c.b16 %v654, %v650
          %v695 = vpack.c.b16 %v659, %v655
          %v696 = vpack.c.b16 %v660, %v656
          %v697 = vpack.c.b16 %v661, %v657
          %v698 = vpack.c.b16 %v662, %v658
          %v699 = vpack.c.b16 %v667, %v663
          %v700 = vpack.c.b16 %v668, %v664
          %v701 = vpack.c.b16 %v669, %v665
          %v702 = vpack.c.b16 %v670, %v666
          %735 = vmatpush.bf16.msra.mxu0 %v699
          %736 = vmatpush.bf16.msra.mxu0 %v695
          %737 = vmatpush.bf16.msra.mxu0 %v691
          %738 = vmatpush.bf16.msra.mxu0 %v687
          %739 = vmatpush.bf16.msra.mxu0 %v683
          %740 = vmatpush.bf16.msra.mxu0 %v679
          %741 = vmatpush.bf16.msra.mxu0 %v675
          %742 = vmatpush.bf16.msra.mxu0 %v671
          %743 = vmatmul.bf16.gmra.mxu0 %v574
          %v744 = vpop.f32.mrf.mxu0
          %v745 = vadd.f32 0.0, %v744
          %v746 = vpop.f32.mrf.mxu0
          %747 = vdwg.mxu0
          %748 = vmatpush.bf16.msra.mxu0 %v700
          %749 = vmatpush.bf16.msra.mxu0 %v696
          %750 = vmatpush.bf16.msra.mxu0 %v692
          %751 = vmatpush.bf16.msra.mxu0 %v688
          %752 = vmatpush.bf16.msra.mxu0 %v684
          %753 = vmatpush.bf16.msra.mxu0 %v680
          %754 = vmatpush.bf16.msra.mxu0 %v676
          %755 = vmatpush.bf16.msra.mxu0 %v672
          %756 = vmatmul.bf16.gmra.mxu0 %v574
          %v757 = vpop.f32.mrf.mxu0
          %v758 = vadd.f32 0.0, %v757
          %v759 = vpop.f32.mrf.mxu0
          %760 = vdwg.mxu0
          %761 = vmatpush.bf16.msra.mxu0 %v701
          %762 = vmatpush.bf16.msra.mxu0 %v697
          %763 = vmatpush.bf16.msra.mxu0 %v693
          %764 = vmatpush.bf16.msra.mxu0 %v689
          %765 = vmatpush.bf16.msra.mxu0 %v685
          %766 = vmatpush.bf16.msra.mxu0 %v681
          %767 = vmatpush.bf16.msra.mxu0 %v677
          %768 = vmatpush.bf16.msra.mxu0 %v673
          %769 = vmatmul.bf16.gmra.mxu0 %v574
          %v770 = vpop.f32.mrf.mxu0
          %v771 = vadd.f32 0.0, %v770
          %v772 = vpop.f32.mrf.mxu0
          %773 = vdwg.mxu0
          %774 = vmatpush.bf16.msra.mxu0 %v702
          %775 = vmatpush.bf16.msra.mxu0 %v698
          %776 = vmatpush.bf16.msra.mxu0 %v694
          %777 = vmatpush.bf16.msra.mxu0 %v690
          %778 = vmatpush.bf16.msra.mxu0 %v686
          %779 = vmatpush.bf16.msra.mxu0 %v682
          %780 = vmatpush.bf16.msra.mxu0 %v678
          %781 = vmatpush.bf16.msra.mxu0 %v674
          %782 = vmatmul.bf16.gmra.mxu0 %v574
          %v783 = vpop.f32.mrf.mxu0
          %v784 = vadd.f32 0.0, %v783
          %v785 = vpop.f32.mrf.mxu0
          %786 = vdwg.mxu0
          %v787 = vadd.f32 %v532, %v745
          %v788 = vadd.f32 %v545, %v758
          %v789 = vadd.f32 %v558, %v771
          %v790 = vadd.f32 %v571, %v784
          %v791 = vmul.f32 %v787, 0.5
          %v792 = vtanh.pop %v791
          %v793 = vadd.f32 %v792, 1.0
          %v794 = vmul.f32 %v793, 0.5
          %v795 = vmul.f32 %v788, 0.5
          %v796 = vtanh.pop %v795
          %v797 = vadd.f32 %v796, 1.0
          %v798 = vmul.f32 %v797, 0.5
          %v799 = vtanh.pop %v789
          %v800 = vmul.f32 %v790, 0.5
          %v801 = vtanh.pop %v800
          %v802 = vadd.f32 %v801, 1.0
          %v803 = vmul.f32 %v802, 0.5
          %v804 = vmul.f32 %v798, %v467
          %v805 = vmul.f32 %v794, %v799
          %v806 = vadd.f32 %v804, %v805
          %v807 = vtanh.pop %v806
          %v808 = vmul.f32 %v803, %v807
          %809 = vst [vmem:[%s368] sm:$0xff] %v808
          %s810 = scalar_lea.vmem %s392, 4
          %v811 = vld [vmem:[%s810] sm:$0xf]
          %v813 = vsel %vm518, %v811, 0
          %815 = vmatpush.bf16.msra.mxu0 0
          %816 = vmatpush.bf16.msra.mxu0 0
          %817 = vmatpush.bf16.msra.mxu0 0
          %818 = vmatpush.bf16.msra.mxu0 0
          %819 = vmatpush.bf16.msra.mxu0 0
          %820 = vmatpush.bf16.msra.mxu0 0
          %821 = vmatpush.bf16.msra.mxu0 %v506
          %822 = vmatpush.bf16.msra.mxu0 %v502
          %823 = vmatmul.bf16.gmra.mxu0 %v813
          %v824 = vpop.f32.mrf.mxu0
          %v825 = vadd.f32 %v470, %v824
          %v826 = vpop.f32.mrf.mxu0
          %827 = vdwg.mxu0
          %828 = vmatpush.bf16.msra.mxu0 0
          %829 = vmatpush.bf16.msra.mxu0 0
          %830 = vmatpush.bf16.msra.mxu0 0
          %831 = vmatpush.bf16.msra.mxu0 0
          %832 = vmatpush.bf16.msra.mxu0 0
          %833 = vmatpush.bf16.msra.mxu0 0
          %834 = vmatpush.bf16.msra.mxu0 %v507
          %835 = vmatpush.bf16.msra.mxu0 %v503
          %836 = vmatmul.bf16.gmra.mxu0 %v813
          %v837 = vpop.f32.mrf.mxu0
          %v838 = vadd.f32 %v471, %v837
          %v839 = vpop.f32.mrf.mxu0
          %840 = vdwg.mxu0
          %841 = vmatpush.bf16.msra.mxu0 0
          %842 = vmatpush.bf16.msra.mxu0 0
          %843 = vmatpush.bf16.msra.mxu0 0
          %844 = vmatpush.bf16.msra.mxu0 0
          %845 = vmatpush.bf16.msra.mxu0 0
          %846 = vmatpush.bf16.msra.mxu0 0
          %847 = vmatpush.bf16.msra.mxu0 %v508
          %848 = vmatpush.bf16.msra.mxu0 %v504
          %849 = vmatmul.bf16.gmra.mxu0 %v813
          %v850 = vpop.f32.mrf.mxu0
          %v851 = vadd.f32 %v472, %v850
          %v852 = vpop.f32.mrf.mxu0
          %853 = vdwg.mxu0
          %854 = vmatpush.bf16.msra.mxu0 0
          %855 = vmatpush.bf16.msra.mxu0 0
          %856 = vmatpush.bf16.msra.mxu0 0
          %857 = vmatpush.bf16.msra.mxu0 0
          %858 = vmatpush.bf16.msra.mxu0 0
          %859 = vmatpush.bf16.msra.mxu0 0
          %860 = vmatpush.bf16.msra.mxu0 %v509
          %861 = vmatpush.bf16.msra.mxu0 %v505
          %862 = vmatmul.bf16.gmra.mxu0 %v813
          %v863 = vpop.f32.mrf.mxu0
          %v864 = vadd.f32 %v473, %v863
          %v865 = vpop.f32.mrf.mxu0
          %866 = vdwg.mxu0
          %v867 = vpack.c.bf16 %v808, %v808
          %868 = vmatpush.bf16.msra.mxu0 %v699
          %869 = vmatpush.bf16.msra.mxu0 %v695
          %870 = vmatpush.bf16.msra.mxu0 %v691
          %871 = vmatpush.bf16.msra.mxu0 %v687
          %872 = vmatpush.bf16.msra.mxu0 %v683
          %873 = vmatpush.bf16.msra.mxu0 %v679
          %874 = vmatpush.bf16.msra.mxu0 %v675
          %875 = vmatpush.bf16.msra.mxu0 %v671
          %876 = vmatmul.bf16.gmra.mxu0 %v867
          %v877 = vpop.f32.mrf.mxu0
          %v878 = vadd.f32 0.0, %v877
          %v879 = vpop.f32.mrf.mxu0
          %880 = vdwg.mxu0
          %881 = vmatpush.bf16.msra.mxu0 %v700
          %882 = vmatpush.bf16.msra.mxu0 %v696
          %883 = vmatpush.bf16.msra.mxu0 %v692
          %884 = vmatpush.bf16.msra.mxu0 %v688
          %885 = vmatpush.bf16.msra.mxu0 %v684
          %886 = vmatpush.bf16.msra.mxu0 %v680
          %887 = vmatpush.bf16.msra.mxu0 %v676
          %888 = vmatpush.bf16.msra.mxu0 %v672
          %889 = vmatmul.bf16.gmra.mxu0 %v867
          %v890 = vpop.f32.mrf.mxu0
          %v891 = vadd.f32 0.0, %v890
          %v892 = vpop.f32.mrf.mxu0
          %893 = vdwg.mxu0
          %894 = vmatpush.bf16.msra.mxu0 %v701
          %895 = vmatpush.bf16.msra.mxu0 %v697
          %896 = vmatpush.bf16.msra.mxu0 %v693
          %897 = vmatpush.bf16.msra.mxu0 %v689
          %898 = vmatpush.bf16.msra.mxu0 %v685
          %899 = vmatpush.bf16.msra.mxu0 %v681
          %900 = vmatpush.bf16.msra.mxu0 %v677
          %901 = vmatpush.bf16.msra.mxu0 %v673
          %902 = vmatmul.bf16.gmra.mxu0 %v867
          %v903 = vpop.f32.mrf.mxu0
          %v904 = vadd.f32 0.0, %v903
          %v905 = vpop.f32.mrf.mxu0
          %906 = vdwg.mxu0
          %907 = vmatpush.bf16.msra.mxu0 %v702
          %908 = vmatpush.bf16.msra.mxu0 %v698
          %909 = vmatpush.bf16.msra.mxu0 %v694
          %910 = vmatpush.bf16.msra.mxu0 %v690
          %911 = vmatpush.bf16.msra.mxu0 %v686
          %912 = vmatpush.bf16.msra.mxu0 %v682
          %913 = vmatpush.bf16.msra.mxu0 %v678
          %914 = vmatpush.bf16.msra.mxu0 %v674
          %915 = vmatmul.bf16.gmra.mxu0 %v867
          %v916 = vpop.f32.mrf.mxu0
          %v917 = vadd.f32 0.0, %v916
          %v918 = vpop.f32.mrf.mxu0
          %919 = vdwg.mxu0
          %v920 = vadd.f32 %v825, %v878
          %v921 = vadd.f32 %v838, %v891
          %v922 = vadd.f32 %v851, %v904
          %v923 = vadd.f32 %v864, %v917
          %v924 = vmul.f32 %v920, 0.5
          %v925 = vtanh.pop %v924
          %v926 = vadd.f32 %v925, 1.0
          %v927 = vmul.f32 %v926, 0.5
          %v928 = vmul.f32 %v921, 0.5
          %v929 = vtanh.pop %v928
          %v930 = vadd.f32 %v929, 1.0
          %v931 = vmul.f32 %v930, 0.5
          %v932 = vtanh.pop %v922
          %v933 = vmul.f32 %v923, 0.5
          %v934 = vtanh.pop %v933
          %v935 = vadd.f32 %v934, 1.0
          %v936 = vmul.f32 %v935, 0.5
          %v937 = vmul.f32 %v931, %v806
          %v938 = vmul.f32 %v927, %v932
          %v939 = vadd.f32 %v937, %v938
          %v940 = vtanh.pop %v939
          %v941 = vmul.f32 %v936, %v940
          %s942 = scalar_lea.vmem %s368, 8 [#allocation7]
          %943 = vst [vmem:[%s942] sm:$0xff] %v941
          %s944 = scalar_lea.vmem %s392, 8
          %v945 = vld [vmem:[%s944] sm:$0xf]
          %v947 = vsel %vm518, %v945, 0
          %949 = vmatpush.bf16.msra.mxu0 0
          %950 = vmatpush.bf16.msra.mxu0 0
          %951 = vmatpush.bf16.msra.mxu0 0
          %952 = vmatpush.bf16.msra.mxu0 0
          %953 = vmatpush.bf16.msra.mxu0 0
          %954 = vmatpush.bf16.msra.mxu0 0
          %955 = vmatpush.bf16.msra.mxu0 %v506
          %956 = vmatpush.bf16.msra.mxu0 %v502
          %957 = vmatmul.bf16.gmra.mxu0 %v947
          %v958 = vpop.f32.mrf.mxu0
          %v959 = vadd.f32 %v470, %v958
          %v960 = vpop.f32.mrf.mxu0
          %961 = vdwg.mxu0
          %962 = vmatpush.bf16.msra.mxu0 0
          %963 = vmatpush.bf16.msra.mxu0 0
          %964 = vmatpush.bf16.msra.mxu0 0
          %965 = vmatpush.bf16.msra.mxu0 0
          %966 = vmatpush.bf16.msra.mxu0 0
          %967 = vmatpush.bf16.msra.mxu0 0
          %968 = vmatpush.bf16.msra.mxu0 %v507
          %969 = vmatpush.bf16.msra.mxu0 %v503
          %970 = vmatmul.bf16.gmra.mxu0 %v947
          %v971 = vpop.f32.mrf.mxu0
          %v972 = vadd.f32 %v471, %v971
          %v973 = vpop.f32.mrf.mxu0
          %974 = vdwg.mxu0
          %975 = vmatpush.bf16.msra.mxu0 0
          %976 = vmatpush.bf16.msra.mxu0 0
          %977 = vmatpush.bf16.msra.mxu0 0
          %978 = vmatpush.bf16.msra.mxu0 0
          %979 = vmatpush.bf16.msra.mxu0 0
          %980 = vmatpush.bf16.msra.mxu0 0
          %981 = vmatpush.bf16.msra.mxu0 %v508
          %982 = vmatpush.bf16.msra.mxu0 %v504
          %983 = vmatmul.bf16.gmra.mxu0 %v947
          %v984 = vpop.f32.mrf.mxu0
          %v985 = vadd.f32 %v472, %v984
          %v986 = vpop.f32.mrf.mxu0
          %987 = vdwg.mxu0
          %988 = vmatpush.bf16.msra.mxu0 0
          %989 = vmatpush.bf16.msra.mxu0 0
          %990 = vmatpush.bf16.msra.mxu0 0
          %991 = vmatpush.bf16.msra.mxu0 0
          %992 = vmatpush.bf16.msra.mxu0 0
          %993 = vmatpush.bf16.msra.mxu0 0
          %994 = vmatpush.bf16.msra.mxu0 %v509
          %995 = vmatpush.bf16.msra.mxu0 %v505
          %996 = vmatmul.bf16.gmra.mxu0 %v947
          %v997 = vpop.f32.mrf.mxu0
          %v998 = vadd.f32 %v473, %v997
          %v999 = vpop.f32.mrf.mxu0
          %1000 = vdwg.mxu0
          %v1001 = vpack.c.bf16 %v941, %v941
          %1002 = vmatpush.bf16.msra.mxu0 %v699
          %1003 = vmatpush.bf16.msra.mxu0 %v695
          %1004 = vmatpush.bf16.msra.mxu0 %v691
          %1005 = vmatpush.bf16.msra.mxu0 %v687
          %1006 = vmatpush.bf16.msra.mxu0 %v683
          %1007 = vmatpush.bf16.msra.mxu0 %v679
          %1008 = vmatpush.bf16.msra.mxu0 %v675
          %1009 = vmatpush.bf16.msra.mxu0 %v671
          %1010 = vmatmul.bf16.gmra.mxu0 %v1001
          %v1011 = vpop.f32.mrf.mxu0
          %v1012 = vadd.f32 0.0, %v1011
          %v1013 = vpop.f32.mrf.mxu0
          %1014 = vdwg.mxu0
          %1015 = vmatpush.bf16.msra.mxu0 %v700
          %1016 = vmatpush.bf16.msra.mxu0 %v696
          %1017 = vmatpush.bf16.msra.mxu0 %v692
          %1018 = vmatpush.bf16.msra.mxu0 %v688
          %1019 = vmatpush.bf16.msra.mxu0 %v684
          %1020 = vmatpush.bf16.msra.mxu0 %v680
          %1021 = vmatpush.bf16.msra.mxu0 %v676
          %1022 = vmatpush.bf16.msra.mxu0 %v672
          %1023 = vmatmul.bf16.gmra.mxu0 %v1001
          %v1024 = vpop.f32.mrf.mxu0
          %v1025 = vadd.f32 0.0, %v1024
          %v1026 = vpop.f32.mrf.mxu0
          %1027 = vdwg.mxu0
          %1028 = vmatpush.bf16.msra.mxu0 %v701
          %1029 = vmatpush.bf16.msra.mxu0 %v697
          %1030 = vmatpush.bf16.msra.mxu0 %v693
          %1031 = vmatpush.bf16.msra.mxu0 %v689
          %1032 = vmatpush.bf16.msra.mxu0 %v685
          %1033 = vmatpush.bf16.msra.mxu0 %v681
          %1034 = vmatpush.bf16.msra.mxu0 %v677
          %1035 = vmatpush.bf16.msra.mxu0 %v673
          %1036 = vmatmul.bf16.gmra.mxu0 %v1001
          %v1037 = vpop.f32.mrf.mxu0
          %v1038 = vadd.f32 0.0, %v1037
          %v1039 = vpop.f32.mrf.mxu0
          %1040 = vdwg.mxu0
          %1041 = vmatpush.bf16.msra.mxu0 %v702
          %1042 = vmatpush.bf16.msra.mxu0 %v698
          %1043 = vmatpush.bf16.msra.mxu0 %v694
          %1044 = vmatpush.bf16.msra.mxu0 %v690
          %1045 = vmatpush.bf16.msra.mxu0 %v686
          %1046 = vmatpush.bf16.msra.mxu0 %v682
          %1047 = vmatpush.bf16.msra.mxu0 %v678
          %1048 = vmatpush.bf16.msra.mxu0 %v674
          %1049 = vmatmul.bf16.gmra.mxu0 %v1001
          %v1050 = vpop.f32.mrf.mxu0
          %v1051 = vadd.f32 0.0, %v1050
          %v1052 = vpop.f32.mrf.mxu0
          %1053 = vdwg.mxu0
          %v1054 = vadd.f32 %v959, %v1012
          %v1055 = vadd.f32 %v972, %v1025
          %v1056 = vadd.f32 %v985, %v1038
          %v1057 = vadd.f32 %v998, %v1051
          %v1058 = vmul.f32 %v1054, 0.5
          %v1059 = vtanh.pop %v1058
          %v1060 = vadd.f32 %v1059, 1.0
          %v1061 = vmul.f32 %v1060, 0.5
          %v1062 = vmul.f32 %v1055, 0.5
          %v1063 = vtanh.pop %v1062
          %v1064 = vadd.f32 %v1063, 1.0
          %v1065 = vmul.f32 %v1064, 0.5
          %v1066 = vtanh.pop %v1056
          %v1067 = vmul.f32 %v1057, 0.5
          %v1068 = vtanh.pop %v1067
          %v1069 = vadd.f32 %v1068, 1.0
          %v1070 = vmul.f32 %v1069, 0.5
          %v1071 = vmul.f32 %v1065, %v939
          %v1072 = vmul.f32 %v1061, %v1066
          %v1073 = vadd.f32 %v1071, %v1072
          %v1074 = vtanh.pop %v1073
          %v1075 = vmul.f32 %v1070, %v1074
          %s1076 = scalar_lea.vmem %s368, 16 [#allocation7]
          %1077 = vst [vmem:[%s1076] sm:$0xff] %v1075
          %s1078 = scalar_lea.vmem %s392, 12
          %v1079 = vld [vmem:[%s1078] sm:$0xf]
          %v1081 = vsel %vm518, %v1079, 0
          %1083 = vmatpush.bf16.msra.mxu0 0
          %1084 = vmatpush.bf16.msra.mxu0 0
          %1085 = vmatpush.bf16.msra.mxu0 0
          %1086 = vmatpush.bf16.msra.mxu0 0
          %1087 = vmatpush.bf16.msra.mxu0 0
          %1088 = vmatpush.bf16.msra.mxu0 0
          %1089 = vmatpush.bf16.msra.mxu0 %v506
          %1090 = vmatpush.bf16.msra.mxu0 %v502
          %1091 = vmatmul.bf16.gmra.mxu0 %v1081
          %v1092 = vpop.f32.mrf.mxu0
          %v1093 = vadd.f32 %v470, %v1092
          %v1094 = vpop.f32.mrf.mxu0
          %1095 = vdwg.mxu0
          %1096 = vmatpush.bf16.msra.mxu0 0
          %1097 = vmatpush.bf16.msra.mxu0 0
          %1098 = vmatpush.bf16.msra.mxu0 0
          %1099 = vmatpush.bf16.msra.mxu0 0
          %1100 = vmatpush.bf16.msra.mxu0 0
          %1101 = vmatpush.bf16.msra.mxu0 0
          %1102 = vmatpush.bf16.msra.mxu0 %v507
          %1103 = vmatpush.bf16.msra.mxu0 %v503
          %1104 = vmatmul.bf16.gmra.mxu0 %v1081
          %v1105 = vpop.f32.mrf.mxu0
          %v1106 = vadd.f32 %v471, %v1105
          %v1107 = vpop.f32.mrf.mxu0
          %1108 = vdwg.mxu0
          %1109 = vmatpush.bf16.msra.mxu0 0
          %1110 = vmatpush.bf16.msra.mxu0 0
          %1111 = vmatpush.bf16.msra.mxu0 0
          %1112 = vmatpush.bf16.msra.mxu0 0
          %1113 = vmatpush.bf16.msra.mxu0 0
          %1114 = vmatpush.bf16.msra.mxu0 0
          %1115 = vmatpush.bf16.msra.mxu0 %v508
          %1116 = vmatpush.bf16.msra.mxu0 %v504
          %1117 = vmatmul.bf16.gmra.mxu0 %v1081
          %v1118 = vpop.f32.mrf.mxu0
          %v1119 = vadd.f32 %v472, %v1118
          %v1120 = vpop.f32.mrf.mxu0
          %1121 = vdwg.mxu0
          %1122 = vmatpush.bf16.msra.mxu0 0
          %1123 = vmatpush.bf16.msra.mxu0 0
          %1124 = vmatpush.bf16.msra.mxu0 0
          %1125 = vmatpush.bf16.msra.mxu0 0
          %1126 = vmatpush.bf16.msra.mxu0 0
          %1127 = vmatpush.bf16.msra.mxu0 0
          %1128 = vmatpush.bf16.msra.mxu0 %v509
          %1129 = vmatpush.bf16.msra.mxu0 %v505
          %1130 = vmatmul.bf16.gmra.mxu0 %v1081
          %v1131 = vpop.f32.mrf.mxu0
          %v1132 = vadd.f32 %v473, %v1131
          %v1133 = vpop.f32.mrf.mxu0
          %1134 = vdwg.mxu0
          %v1135 = vpack.c.bf16 %v1075, %v1075
          %1136 = vmatpush.bf16.msra.mxu0 %v699
          %1137 = vmatpush.bf16.msra.mxu0 %v695
          %1138 = vmatpush.bf16.msra.mxu0 %v691
          %1139 = vmatpush.bf16.msra.mxu0 %v687
          %1140 = vmatpush.bf16.msra.mxu0 %v683
          %1141 = vmatpush.bf16.msra.mxu0 %v679
          %1142 = vmatpush.bf16.msra.mxu0 %v675
          %1143 = vmatpush.bf16.msra.mxu0 %v671
          %1144 = vmatmul.bf16.gmra.mxu0 %v1135
          %v1145 = vpop.f32.mrf.mxu0
          %v1146 = vadd.f32 0.0, %v1145
          %v1147 = vpop.f32.mrf.mxu0
          %1148 = vdwg.mxu0
          %1149 = vmatpush.bf16.msra.mxu0 %v700
          %1150 = vmatpush.bf16.msra.mxu0 %v696
          %1151 = vmatpush.bf16.msra.mxu0 %v692
          %1152 = vmatpush.bf16.msra.mxu0 %v688
          %1153 = vmatpush.bf16.msra.mxu0 %v684
          %1154 = vmatpush.bf16.msra.mxu0 %v680
          %1155 = vmatpush.bf16.msra.mxu0 %v676
          %1156 = vmatpush.bf16.msra.mxu0 %v672
          %1157 = vmatmul.bf16.gmra.mxu0 %v1135
          %v1158 = vpop.f32.mrf.mxu0
          %v1159 = vadd.f32 0.0, %v1158
          %v1160 = vpop.f32.mrf.mxu0
          %1161 = vdwg.mxu0
          %1162 = vmatpush.bf16.msra.mxu0 %v701
          %1163 = vmatpush.bf16.msra.mxu0 %v697
          %1164 = vmatpush.bf16.msra.mxu0 %v693
          %1165 = vmatpush.bf16.msra.mxu0 %v689
          %1166 = vmatpush.bf16.msra.mxu0 %v685
          %1167 = vmatpush.bf16.msra.mxu0 %v681
          %1168 = vmatpush.bf16.msra.mxu0 %v677
          %1169 = vmatpush.bf16.msra.mxu0 %v673
          %1170 = vmatmul.bf16.gmra.mxu0 %v1135
          %v1171 = vpop.f32.mrf.mxu0
          %v1172 = vadd.f32 0.0, %v1171
          %v1173 = vpop.f32.mrf.mxu0
          %1174 = vdwg.mxu0
          %1175 = vmatpush.bf16.msra.mxu0 %v702
          %1176 = vmatpush.bf16.msra.mxu0 %v698
          %1177 = vmatpush.bf16.msra.mxu0 %v694
          %1178 = vmatpush.bf16.msra.mxu0 %v690
          %1179 = vmatpush.bf16.msra.mxu0 %v686
          %1180 = vmatpush.bf16.msra.mxu0 %v682
          %1181 = vmatpush.bf16.msra.mxu0 %v678
          %1182 = vmatpush.bf16.msra.mxu0 %v674
          %1183 = vmatmul.bf16.gmra.mxu0 %v1135
          %v1184 = vpop.f32.mrf.mxu0
          %v1185 = vadd.f32 0.0, %v1184
          %v1186 = vpop.f32.mrf.mxu0
          %1187 = vdwg.mxu0
          %v1188 = vadd.f32 %v1093, %v1146
          %v1189 = vadd.f32 %v1106, %v1159
          %v1190 = vadd.f32 %v1119, %v1172
          %v1191 = vadd.f32 %v1132, %v1185
          %v1192 = vmul.f32 %v1188, 0.5
          %v1193 = vtanh.pop %v1192
          %v1194 = vadd.f32 %v1193, 1.0
          %v1195 = vmul.f32 %v1194, 0.5
          %v1196 = vmul.f32 %v1189, 0.5
          %v1197 = vtanh.pop %v1196
          %v1198 = vadd.f32 %v1197, 1.0
          %v1199 = vmul.f32 %v1198, 0.5
          %v1200 = vtanh.pop %v1190
          %v1201 = vmul.f32 %v1191, 0.5
          %v1202 = vtanh.pop %v1201
          %v1203 = vadd.f32 %v1202, 1.0
          %v1204 = vmul.f32 %v1203, 0.5
          %v1205 = vmul.f32 %v1199, %v1073
          %v1206 = vmul.f32 %v1195, %v1200
          %v1207 = vadd.f32 %v1205, %v1206
          %v1208 = vtanh.pop %v1207
          %v1209 = vmul.f32 %v1204, %v1208
          %s1210 = scalar_lea.vmem %s368, 24 [#allocation7]
          %1211 = vst [vmem:[%s1210] sm:$0xff] %v1209
          %s1212 = scalar_lea.vmem %s392, 16
          %v1213 = vld [vmem:[%s1212] sm:$0xf]
          %v1215 = vsel %vm518, %v1213, 0
          %1217 = vmatpush.bf16.msra.mxu0 0
          %1218 = vmatpush.bf16.msra.mxu0 0
          %1219 = vmatpush.bf16.msra.mxu0 0
          %1220 = vmatpush.bf16.msra.mxu0 0
          %1221 = vmatpush.bf16.msra.mxu0 0
          %1222 = vmatpush.bf16.msra.mxu0 0
          %1223 = vmatpush.bf16.msra.mxu0 %v506
          %1224 = vmatpush.bf16.msra.mxu0 %v502
          %1225 = vmatmul.bf16.gmra.mxu0 %v1215
          %v1226 = vpop.f32.mrf.mxu0
          %v1227 = vadd.f32 %v470, %v1226
          %v1228 = vpop.f32.mrf.mxu0
          %1229 = vdwg.mxu0
          %1230 = vmatpush.bf16.msra.mxu0 0
          %1231 = vmatpush.bf16.msra.mxu0 0
          %1232 = vmatpush.bf16.msra.mxu0 0
          %1233 = vmatpush.bf16.msra.mxu0 0
          %1234 = vmatpush.bf16.msra.mxu0 0
          %1235 = vmatpush.bf16.msra.mxu0 0
          %1236 = vmatpush.bf16.msra.mxu0 %v507
          %1237 = vmatpush.bf16.msra.mxu0 %v503
          %1238 = vmatmul.bf16.gmra.mxu0 %v1215
          %v1239 = vpop.f32.mrf.mxu0
          %v1240 = vadd.f32 %v471, %v1239
          %v1241 = vpop.f32.mrf.mxu0
          %1242 = vdwg.mxu0
          %1243 = vmatpush.bf16.msra.mxu0 0
          %1244 = vmatpush.bf16.msra.mxu0 0
          %1245 = vmatpush.bf16.msra.mxu0 0
          %1246 = vmatpush.bf16.msra.mxu0 0
          %1247 = vmatpush.bf16.msra.mxu0 0
          %1248 = vmatpush.bf16.msra.mxu0 0
          %1249 = vmatpush.bf16.msra.mxu0 %v508
          %1250 = vmatpush.bf16.msra.mxu0 %v504
          %1251 = vmatmul.bf16.gmra.mxu0 %v1215
          %v1252 = vpop.f32.mrf.mxu0
          %v1253 = vadd.f32 %v472, %v1252
          %v1254 = vpop.f32.mrf.mxu0
          %1255 = vdwg.mxu0
          %1256 = vmatpush.bf16.msra.mxu0 0
          %1257 = vmatpush.bf16.msra.mxu0 0
          %1258 = vmatpush.bf16.msra.mxu0 0
          %1259 = vmatpush.bf16.msra.mxu0 0
          %1260 = vmatpush.bf16.msra.mxu0 0
          %1261 = vmatpush.bf16.msra.mxu0 0
          %1262 = vmatpush.bf16.msra.mxu0 %v509
          %1263 = vmatpush.bf16.msra.mxu0 %v505
          %1264 = vmatmul.bf16.gmra.mxu0 %v1215
          %v1265 = vpop.f32.mrf.mxu0
          %v1266 = vadd.f32 %v473, %v1265
          %v1267 = vpop.f32.mrf.mxu0
          %1268 = vdwg.mxu0
          %v1269 = vpack.c.bf16 %v1209, %v1209
          %1270 = vmatpush.bf16.msra.mxu0 %v699
          %1271 = vmatpush.bf16.msra.mxu0 %v695
          %1272 = vmatpush.bf16.msra.mxu0 %v691
          %1273 = vmatpush.bf16.msra.mxu0 %v687
          %1274 = vmatpush.bf16.msra.mxu0 %v683
          %1275 = vmatpush.bf16.msra.mxu0 %v679
          %1276 = vmatpush.bf16.msra.mxu0 %v675
          %1277 = vmatpush.bf16.msra.mxu0 %v671
          %1278 = vmatmul.bf16.gmra.mxu0 %v1269
          %v1279 = vpop.f32.mrf.mxu0
          %v1280 = vadd.f32 0.0, %v1279
          %v1281 = vpop.f32.mrf.mxu0
          %1282 = vdwg.mxu0
          %1283 = vmatpush.bf16.msra.mxu0 %v700
          %1284 = vmatpush.bf16.msra.mxu0 %v696
          %1285 = vmatpush.bf16.msra.mxu0 %v692
          %1286 = vmatpush.bf16.msra.mxu0 %v688
          %1287 = vmatpush.bf16.msra.mxu0 %v684
          %1288 = vmatpush.bf16.msra.mxu0 %v680
          %1289 = vmatpush.bf16.msra.mxu0 %v676
          %1290 = vmatpush.bf16.msra.mxu0 %v672
          %1291 = vmatmul.bf16.gmra.mxu0 %v1269
          %v1292 = vpop.f32.mrf.mxu0
          %v1293 = vadd.f32 0.0, %v1292
          %v1294 = vpop.f32.mrf.mxu0
          %1295 = vdwg.mxu0
          %1296 = vmatpush.bf16.msra.mxu0 %v701
          %1297 = vmatpush.bf16.msra.mxu0 %v697
          %1298 = vmatpush.bf16.msra.mxu0 %v693
          %1299 = vmatpush.bf16.msra.mxu0 %v689
          %1300 = vmatpush.bf16.msra.mxu0 %v685
          %1301 = vmatpush.bf16.msra.mxu0 %v681
          %1302 = vmatpush.bf16.msra.mxu0 %v677
          %1303 = vmatpush.bf16.msra.mxu0 %v673
          %1304 = vmatmul.bf16.gmra.mxu0 %v1269
          %v1305 = vpop.f32.mrf.mxu0
          %v1306 = vadd.f32 0.0, %v1305
          %v1307 = vpop.f32.mrf.mxu0
          %1308 = vdwg.mxu0
          %1309 = vmatpush.bf16.msra.mxu0 %v702
          %1310 = vmatpush.bf16.msra.mxu0 %v698
          %1311 = vmatpush.bf16.msra.mxu0 %v694
          %1312 = vmatpush.bf16.msra.mxu0 %v690
          %1313 = vmatpush.bf16.msra.mxu0 %v686
          %1314 = vmatpush.bf16.msra.mxu0 %v682
          %1315 = vmatpush.bf16.msra.mxu0 %v678
          %1316 = vmatpush.bf16.msra.mxu0 %v674
          %1317 = vmatmul.bf16.gmra.mxu0 %v1269
          %v1318 = vpop.f32.mrf.mxu0
          %v1319 = vadd.f32 0.0, %v1318
          %v1320 = vpop.f32.mrf.mxu0
          %1321 = vdwg.mxu0
          %v1322 = vadd.f32 %v1227, %v1280
          %v1323 = vadd.f32 %v1240, %v1293
          %v1324 = vadd.f32 %v1253, %v1306
          %v1325 = vadd.f32 %v1266, %v1319
          %v1326 = vmul.f32 %v1322, 0.5
          %v1327 = vtanh.pop %v1326
          %v1328 = vadd.f32 %v1327, 1.0
          %v1329 = vmul.f32 %v1328, 0.5
          %v1330 = vmul.f32 %v1323, 0.5
          %v1331 = vtanh.pop %v1330
          %v1332 = vadd.f32 %v1331, 1.0
          %v1333 = vmul.f32 %v1332, 0.5
          %v1334 = vtanh.pop %v1324
          %v1335 = vmul.f32 %v1325, 0.5
          %v1336 = vtanh.pop %v1335
          %v1337 = vadd.f32 %v1336, 1.0
          %v1338 = vmul.f32 %v1337, 0.5
          %v1339 = vmul.f32 %v1333, %v1207
          %v1340 = vmul.f32 %v1329, %v1334
          %v1341 = vadd.f32 %v1339, %v1340
          %v1342 = vtanh.pop %v1341
          %v1343 = vmul.f32 %v1338, %v1342
          %s1344 = scalar_lea.vmem %s368, 32 [#allocation7]
          %1345 = vst [vmem:[%s1344] sm:$0xff] %v1343
          %s1346 = scalar_lea.vmem %s392, 20
          %v1347 = vld [vmem:[%s1346] sm:$0xf]
          %v1349 = vsel %vm518, %v1347, 0
          %1351 = vmatpush.bf16.msra.mxu0 0
          %1352 = vmatpush.bf16.msra.mxu0 0
          %1353 = vmatpush.bf16.msra.mxu0 0
          %1354 = vmatpush.bf16.msra.mxu0 0
          %1355 = vmatpush.bf16.msra.mxu0 0
          %1356 = vmatpush.bf16.msra.mxu0 0
          %1357 = vmatpush.bf16.msra.mxu0 %v506
          %1358 = vmatpush.bf16.msra.mxu0 %v502
          %1359 = vmatmul.bf16.gmra.mxu0 %v1349
          %v1360 = vpop.f32.mrf.mxu0
          %v1361 = vadd.f32 %v470, %v1360
          %v1362 = vpop.f32.mrf.mxu0
          %1363 = vdwg.mxu0
          %1364 = vmatpush.bf16.msra.mxu0 0
          %1365 = vmatpush.bf16.msra.mxu0 0
          %1366 = vmatpush.bf16.msra.mxu0 0
          %1367 = vmatpush.bf16.msra.mxu0 0
          %1368 = vmatpush.bf16.msra.mxu0 0
          %1369 = vmatpush.bf16.msra.mxu0 0
          %1370 = vmatpush.bf16.msra.mxu0 %v507
          %1371 = vmatpush.bf16.msra.mxu0 %v503
          %1372 = vmatmul.bf16.gmra.mxu0 %v1349
          %v1373 = vpop.f32.mrf.mxu0
          %v1374 = vadd.f32 %v471, %v1373
          %v1375 = vpop.f32.mrf.mxu0
          %1376 = vdwg.mxu0
          %1377 = vmatpush.bf16.msra.mxu0 0
          %1378 = vmatpush.bf16.msra.mxu0 0
          %1379 = vmatpush.bf16.msra.mxu0 0
          %1380 = vmatpush.bf16.msra.mxu0 0
          %1381 = vmatpush.bf16.msra.mxu0 0
          %1382 = vmatpush.bf16.msra.mxu0 0
          %1383 = vmatpush.bf16.msra.mxu0 %v508
          %1384 = vmatpush.bf16.msra.mxu0 %v504
          %1385 = vmatmul.bf16.gmra.mxu0 %v1349
          %v1386 = vpop.f32.mrf.mxu0
          %v1387 = vadd.f32 %v472, %v1386
          %v1388 = vpop.f32.mrf.mxu0
          %1389 = vdwg.mxu0
          %1390 = vmatpush.bf16.msra.mxu0 0
          %1391 = vmatpush.bf16.msra.mxu0 0
          %1392 = vmatpush.bf16.msra.mxu0 0
          %1393 = vmatpush.bf16.msra.mxu0 0
          %1394 = vmatpush.bf16.msra.mxu0 0
          %1395 = vmatpush.bf16.msra.mxu0 0
          %1396 = vmatpush.bf16.msra.mxu0 %v509
          %1397 = vmatpush.bf16.msra.mxu0 %v505
          %1398 = vmatmul.bf16.gmra.mxu0 %v1349
          %v1399 = vpop.f32.mrf.mxu0
          %v1400 = vadd.f32 %v473, %v1399
          %v1401 = vpop.f32.mrf.mxu0
          %1402 = vdwg.mxu0
          %v1403 = vpack.c.bf16 %v1343, %v1343
          %1404 = vmatpush.bf16.msra.mxu0 %v699
          %1405 = vmatpush.bf16.msra.mxu0 %v695
          %1406 = vmatpush.bf16.msra.mxu0 %v691
          %1407 = vmatpush.bf16.msra.mxu0 %v687
          %1408 = vmatpush.bf16.msra.mxu0 %v683
          %1409 = vmatpush.bf16.msra.mxu0 %v679
          %1410 = vmatpush.bf16.msra.mxu0 %v675
          %1411 = vmatpush.bf16.msra.mxu0 %v671
          %1412 = vmatmul.bf16.gmra.mxu0 %v1403
          %v1413 = vpop.f32.mrf.mxu0
          %v1414 = vadd.f32 0.0, %v1413
          %v1415 = vpop.f32.mrf.mxu0
          %1416 = vdwg.mxu0
          %1417 = vmatpush.bf16.msra.mxu0 %v700
          %1418 = vmatpush.bf16.msra.mxu0 %v696
          %1419 = vmatpush.bf16.msra.mxu0 %v692
          %1420 = vmatpush.bf16.msra.mxu0 %v688
          %1421 = vmatpush.bf16.msra.mxu0 %v684
          %1422 = vmatpush.bf16.msra.mxu0 %v680
          %1423 = vmatpush.bf16.msra.mxu0 %v676
          %1424 = vmatpush.bf16.msra.mxu0 %v672
          %1425 = vmatmul.bf16.gmra.mxu0 %v1403
          %v1426 = vpop.f32.mrf.mxu0
          %v1427 = vadd.f32 0.0, %v1426
          %v1428 = vpop.f32.mrf.mxu0
          %1429 = vdwg.mxu0
          %1430 = vmatpush.bf16.msra.mxu0 %v701
          %1431 = vmatpush.bf16.msra.mxu0 %v697
          %1432 = vmatpush.bf16.msra.mxu0 %v693
          %1433 = vmatpush.bf16.msra.mxu0 %v689
          %1434 = vmatpush.bf16.msra.mxu0 %v685
          %1435 = vmatpush.bf16.msra.mxu0 %v681
          %1436 = vmatpush.bf16.msra.mxu0 %v677
          %1437 = vmatpush.bf16.msra.mxu0 %v673
          %1438 = vmatmul.bf16.gmra.mxu0 %v1403
          %v1439 = vpop.f32.mrf.mxu0
          %v1440 = vadd.f32 0.0, %v1439
          %v1441 = vpop.f32.mrf.mxu0
          %1442 = vdwg.mxu0
          %1443 = vmatpush.bf16.msra.mxu0 %v702
          %1444 = vmatpush.bf16.msra.mxu0 %v698
          %1445 = vmatpush.bf16.msra.mxu0 %v694
          %1446 = vmatpush.bf16.msra.mxu0 %v690
          %1447 = vmatpush.bf16.msra.mxu0 %v686
          %1448 = vmatpush.bf16.msra.mxu0 %v682
          %1449 = vmatpush.bf16.msra.mxu0 %v678
          %1450 = vmatpush.bf16.msra.mxu0 %v674
          %1451 = vmatmul.bf16.gmra.mxu0 %v1403
          %v1452 = vpop.f32.mrf.mxu0
          %v1453 = vadd.f32 0.0, %v1452
          %v1454 = vpop.f32.mrf.mxu0
          %1455 = vdwg.mxu0
          %v1456 = vadd.f32 %v1361, %v1414
          %v1457 = vadd.f32 %v1374, %v1427
          %v1458 = vadd.f32 %v1387, %v1440
          %v1459 = vadd.f32 %v1400, %v1453
          %v1460 = vmul.f32 %v1456, 0.5
          %v1461 = vtanh.pop %v1460
          %v1462 = vadd.f32 %v1461, 1.0
          %v1463 = vmul.f32 %v1462, 0.5
          %v1464 = vmul.f32 %v1457, 0.5
          %v1465 = vtanh.pop %v1464
          %v1466 = vadd.f32 %v1465, 1.0
          %v1467 = vmul.f32 %v1466, 0.5
          %v1468 = vtanh.pop %v1458
          %v1469 = vmul.f32 %v1459, 0.5
          %v1470 = vtanh.pop %v1469
          %v1471 = vadd.f32 %v1470, 1.0
          %v1472 = vmul.f32 %v1471, 0.5
          %v1473 = vmul.f32 %v1467, %v1341
          %v1474 = vmul.f32 %v1463, %v1468
          %v1475 = vadd.f32 %v1473, %v1474
          %v1476 = vtanh.pop %v1475
          %v1477 = vmul.f32 %v1472, %v1476
          %s1478 = scalar_lea.vmem %s368, 40 [#allocation7]
          %1479 = vst [vmem:[%s1478] sm:$0xff] %v1477
          %s1480 = scalar_lea.vmem %s392, 24
          %v1481 = vld [vmem:[%s1480] sm:$0xf]
          %v1483 = vsel %vm518, %v1481, 0
          %1485 = vmatpush.bf16.msra.mxu0 0
          %1486 = vmatpush.bf16.msra.mxu0 0
          %1487 = vmatpush.bf16.msra.mxu0 0
          %1488 = vmatpush.bf16.msra.mxu0 0
          %1489 = vmatpush.bf16.msra.mxu0 0
          %1490 = vmatpush.bf16.msra.mxu0 0
          %1491 = vmatpush.bf16.msra.mxu0 %v506
          %1492 = vmatpush.bf16.msra.mxu0 %v502
          %1493 = vmatmul.bf16.gmra.mxu0 %v1483
          %v1494 = vpop.f32.mrf.mxu0
          %v1495 = vadd.f32 %v470, %v1494
          %v1496 = vpop.f32.mrf.mxu0
          %1497 = vdwg.mxu0
          %1498 = vmatpush.bf16.msra.mxu0 0
          %1499 = vmatpush.bf16.msra.mxu0 0
          %1500 = vmatpush.bf16.msra.mxu0 0
          %1501 = vmatpush.bf16.msra.mxu0 0
          %1502 = vmatpush.bf16.msra.mxu0 0
          %1503 = vmatpush.bf16.msra.mxu0 0
          %1504 = vmatpush.bf16.msra.mxu0 %v507
          %1505 = vmatpush.bf16.msra.mxu0 %v503
          %1506 = vmatmul.bf16.gmra.mxu0 %v1483
          %v1507 = vpop.f32.mrf.mxu0
          %v1508 = vadd.f32 %v471, %v1507
          %v1509 = vpop.f32.mrf.mxu0
          %1510 = vdwg.mxu0
          %1511 = vmatpush.bf16.msra.mxu0 0
          %1512 = vmatpush.bf16.msra.mxu0 0
          %1513 = vmatpush.bf16.msra.mxu0 0
          %1514 = vmatpush.bf16.msra.mxu0 0
          %1515 = vmatpush.bf16.msra.mxu0 0
          %1516 = vmatpush.bf16.msra.mxu0 0
          %1517 = vmatpush.bf16.msra.mxu0 %v508
          %1518 = vmatpush.bf16.msra.mxu0 %v504
          %1519 = vmatmul.bf16.gmra.mxu0 %v1483
          %v1520 = vpop.f32.mrf.mxu0
          %v1521 = vadd.f32 %v472, %v1520
          %v1522 = vpop.f32.mrf.mxu0
          %1523 = vdwg.mxu0
          %1524 = vmatpush.bf16.msra.mxu0 0
          %1525 = vmatpush.bf16.msra.mxu0 0
          %1526 = vmatpush.bf16.msra.mxu0 0
          %1527 = vmatpush.bf16.msra.mxu0 0
          %1528 = vmatpush.bf16.msra.mxu0 0
          %1529 = vmatpush.bf16.msra.mxu0 0
          %1530 = vmatpush.bf16.msra.mxu0 %v509
          %1531 = vmatpush.bf16.msra.mxu0 %v505
          %1532 = vmatmul.bf16.gmra.mxu0 %v1483
          %v1533 = vpop.f32.mrf.mxu0
          %v1534 = vadd.f32 %v473, %v1533
          %v1535 = vpop.f32.mrf.mxu0
          %1536 = vdwg.mxu0
          %v1537 = vpack.c.bf16 %v1477, %v1477
          %1538 = vmatpush.bf16.msra.mxu0 %v699
          %1539 = vmatpush.bf16.msra.mxu0 %v695
          %1540 = vmatpush.bf16.msra.mxu0 %v691
          %1541 = vmatpush.bf16.msra.mxu0 %v687
          %1542 = vmatpush.bf16.msra.mxu0 %v683
          %1543 = vmatpush.bf16.msra.mxu0 %v679
          %1544 = vmatpush.bf16.msra.mxu0 %v675
          %1545 = vmatpush.bf16.msra.mxu0 %v671
          %1546 = vmatmul.bf16.gmra.mxu0 %v1537
          %v1547 = vpop.f32.mrf.mxu0
          %v1548 = vadd.f32 0.0, %v1547
          %v1549 = vpop.f32.mrf.mxu0
          %1550 = vdwg.mxu0
          %1551 = vmatpush.bf16.msra.mxu0 %v700
          %1552 = vmatpush.bf16.msra.mxu0 %v696
          %1553 = vmatpush.bf16.msra.mxu0 %v692
          %1554 = vmatpush.bf16.msra.mxu0 %v688
          %1555 = vmatpush.bf16.msra.mxu0 %v684
          %1556 = vmatpush.bf16.msra.mxu0 %v680
          %1557 = vmatpush.bf16.msra.mxu0 %v676
          %1558 = vmatpush.bf16.msra.mxu0 %v672
          %1559 = vmatmul.bf16.gmra.mxu0 %v1537
          %v1560 = vpop.f32.mrf.mxu0
          %v1561 = vadd.f32 0.0, %v1560
          %v1562 = vpop.f32.mrf.mxu0
          %1563 = vdwg.mxu0
          %1564 = vmatpush.bf16.msra.mxu0 %v701
          %1565 = vmatpush.bf16.msra.mxu0 %v697
          %1566 = vmatpush.bf16.msra.mxu0 %v693
          %1567 = vmatpush.bf16.msra.mxu0 %v689
          %1568 = vmatpush.bf16.msra.mxu0 %v685
          %1569 = vmatpush.bf16.msra.mxu0 %v681
          %1570 = vmatpush.bf16.msra.mxu0 %v677
          %1571 = vmatpush.bf16.msra.mxu0 %v673
          %1572 = vmatmul.bf16.gmra.mxu0 %v1537
          %v1573 = vpop.f32.mrf.mxu0
          %v1574 = vadd.f32 0.0, %v1573
          %v1575 = vpop.f32.mrf.mxu0
          %1576 = vdwg.mxu0
          %1577 = vmatpush.bf16.msra.mxu0 %v702
          %1578 = vmatpush.bf16.msra.mxu0 %v698
          %1579 = vmatpush.bf16.msra.mxu0 %v694
          %1580 = vmatpush.bf16.msra.mxu0 %v690
          %1581 = vmatpush.bf16.msra.mxu0 %v686
          %1582 = vmatpush.bf16.msra.mxu0 %v682
          %1583 = vmatpush.bf16.msra.mxu0 %v678
          %1584 = vmatpush.bf16.msra.mxu0 %v674
          %1585 = vmatmul.bf16.gmra.mxu0 %v1537
          %v1586 = vpop.f32.mrf.mxu0
          %v1587 = vadd.f32 0.0, %v1586
          %v1588 = vpop.f32.mrf.mxu0
          %1589 = vdwg.mxu0
          %v1590 = vadd.f32 %v1495, %v1548
          %v1591 = vadd.f32 %v1508, %v1561
          %v1592 = vadd.f32 %v1521, %v1574
          %v1593 = vadd.f32 %v1534, %v1587
          %v1594 = vmul.f32 %v1590, 0.5
          %v1595 = vtanh.pop %v1594
          %v1596 = vadd.f32 %v1595, 1.0
          %v1597 = vmul.f32 %v1596, 0.5
          %v1598 = vmul.f32 %v1591, 0.5
          %v1599 = vtanh.pop %v1598
          %v1600 = vadd.f32 %v1599, 1.0
          %v1601 = vmul.f32 %v1600, 0.5
          %v1602 = vtanh.pop %v1592
          %v1603 = vmul.f32 %v1593, 0.5
          %v1604 = vtanh.pop %v1603
          %v1605 = vadd.f32 %v1604, 1.0
          %v1606 = vmul.f32 %v1605, 0.5
          %v1607 = vmul.f32 %v1601, %v1475
          %v1608 = vmul.f32 %v1597, %v1602
          %v1609 = vadd.f32 %v1607, %v1608
          %v1610 = vtanh.pop %v1609
          %v1611 = vmul.f32 %v1606, %v1610
          %s1612 = scalar_lea.vmem %s368, 48 [#allocation7]
          %1613 = vst [vmem:[%s1612] sm:$0xff] %v1611
          %s1614 = scalar_lea.vmem %s392, 28
          %v1615 = vld [vmem:[%s1614] sm:$0xf]
          %v1617 = vsel %vm518, %v1615, 0
          %1619 = vmatpush.bf16.msra.mxu0 0
          %1620 = vmatpush.bf16.msra.mxu0 0
          %1621 = vmatpush.bf16.msra.mxu0 0
          %1622 = vmatpush.bf16.msra.mxu0 0
          %1623 = vmatpush.bf16.msra.mxu0 0
          %1624 = vmatpush.bf16.msra.mxu0 0
          %1625 = vmatpush.bf16.msra.mxu0 %v506
          %1626 = vmatpush.bf16.msra.mxu0 %v502
          %1627 = vmatmul.bf16.gmra.mxu0 %v1617
          %v1628 = vpop.f32.mrf.mxu0
          %v1629 = vadd.f32 %v470, %v1628
          %v1630 = vpop.f32.mrf.mxu0
          %1631 = vdwg.mxu0
          %1632 = vmatpush.bf16.msra.mxu0 0
          %1633 = vmatpush.bf16.msra.mxu0 0
          %1634 = vmatpush.bf16.msra.mxu0 0
          %1635 = vmatpush.bf16.msra.mxu0 0
          %1636 = vmatpush.bf16.msra.mxu0 0
          %1637 = vmatpush.bf16.msra.mxu0 0
          %1638 = vmatpush.bf16.msra.mxu0 %v507
          %1639 = vmatpush.bf16.msra.mxu0 %v503
          %1640 = vmatmul.bf16.gmra.mxu0 %v1617
          %v1641 = vpop.f32.mrf.mxu0
          %v1642 = vadd.f32 %v471, %v1641
          %v1643 = vpop.f32.mrf.mxu0
          %1644 = vdwg.mxu0
          %1645 = vmatpush.bf16.msra.mxu0 0
          %1646 = vmatpush.bf16.msra.mxu0 0
          %1647 = vmatpush.bf16.msra.mxu0 0
          %1648 = vmatpush.bf16.msra.mxu0 0
          %1649 = vmatpush.bf16.msra.mxu0 0
          %1650 = vmatpush.bf16.msra.mxu0 0
          %1651 = vmatpush.bf16.msra.mxu0 %v508
          %1652 = vmatpush.bf16.msra.mxu0 %v504
          %1653 = vmatmul.bf16.gmra.mxu0 %v1617
          %v1654 = vpop.f32.mrf.mxu0
          %v1655 = vadd.f32 %v472, %v1654
          %v1656 = vpop.f32.mrf.mxu0
          %1657 = vdwg.mxu0
          %1658 = vmatpush.bf16.msra.mxu0 0
          %1659 = vmatpush.bf16.msra.mxu0 0
          %1660 = vmatpush.bf16.msra.mxu0 0
          %1661 = vmatpush.bf16.msra.mxu0 0
          %1662 = vmatpush.bf16.msra.mxu0 0
          %1663 = vmatpush.bf16.msra.mxu0 0
          %1664 = vmatpush.bf16.msra.mxu0 %v509
          %1665 = vmatpush.bf16.msra.mxu0 %v505
          %1666 = vmatmul.bf16.gmra.mxu0 %v1617
          %v1667 = vpop.f32.mrf.mxu0
          %v1668 = vadd.f32 %v473, %v1667
          %v1669 = vpop.f32.mrf.mxu0
          %1670 = vdwg.mxu0
          %v1671 = vpack.c.bf16 %v1611, %v1611
          %1672 = vmatpush.bf16.msra.mxu0 %v699
          %1673 = vmatpush.bf16.msra.mxu0 %v695
          %1674 = vmatpush.bf16.msra.mxu0 %v691
          %1675 = vmatpush.bf16.msra.mxu0 %v687
          %1676 = vmatpush.bf16.msra.mxu0 %v683
          %1677 = vmatpush.bf16.msra.mxu0 %v679
          %1678 = vmatpush.bf16.msra.mxu0 %v675
          %1679 = vmatpush.bf16.msra.mxu0 %v671
          %1680 = vmatmul.bf16.gmra.mxu0 %v1671
          %v1681 = vpop.f32.mrf.mxu0
          %v1682 = vadd.f32 0.0, %v1681
          %v1683 = vpop.f32.mrf.mxu0
          %1684 = vdwg.mxu0
          %1685 = vmatpush.bf16.msra.mxu0 %v700
          %1686 = vmatpush.bf16.msra.mxu0 %v696
          %1687 = vmatpush.bf16.msra.mxu0 %v692
          %1688 = vmatpush.bf16.msra.mxu0 %v688
          %1689 = vmatpush.bf16.msra.mxu0 %v684
          %1690 = vmatpush.bf16.msra.mxu0 %v680
          %1691 = vmatpush.bf16.msra.mxu0 %v676
          %1692 = vmatpush.bf16.msra.mxu0 %v672
          %1693 = vmatmul.bf16.gmra.mxu0 %v1671
          %v1694 = vpop.f32.mrf.mxu0
          %v1695 = vadd.f32 0.0, %v1694
          %v1696 = vpop.f32.mrf.mxu0
          %1697 = vdwg.mxu0
          %1698 = vmatpush.bf16.msra.mxu0 %v701
          %1699 = vmatpush.bf16.msra.mxu0 %v697
          %1700 = vmatpush.bf16.msra.mxu0 %v693
          %1701 = vmatpush.bf16.msra.mxu0 %v689
          %1702 = vmatpush.bf16.msra.mxu0 %v685
          %1703 = vmatpush.bf16.msra.mxu0 %v681
          %1704 = vmatpush.bf16.msra.mxu0 %v677
          %1705 = vmatpush.bf16.msra.mxu0 %v673
          %1706 = vmatmul.bf16.gmra.mxu0 %v1671
          %v1707 = vpop.f32.mrf.mxu0
          %v1708 = vadd.f32 0.0, %v1707
          %v1709 = vpop.f32.mrf.mxu0
          %1710 = vdwg.mxu0
          %1711 = vmatpush.bf16.msra.mxu0 %v702
          %1712 = vmatpush.bf16.msra.mxu0 %v698
          %1713 = vmatpush.bf16.msra.mxu0 %v694
          %1714 = vmatpush.bf16.msra.mxu0 %v690
          %1715 = vmatpush.bf16.msra.mxu0 %v686
          %1716 = vmatpush.bf16.msra.mxu0 %v682
          %1717 = vmatpush.bf16.msra.mxu0 %v678
          %1718 = vmatpush.bf16.msra.mxu0 %v674
          %1719 = vmatmul.bf16.gmra.mxu0 %v1671
          %v1720 = vpop.f32.mrf.mxu0
          %v1721 = vadd.f32 0.0, %v1720
          %v1722 = vpop.f32.mrf.mxu0
          %1723 = vdwg.mxu0
          %v1724 = vadd.f32 %v1629, %v1682
          %v1725 = vadd.f32 %v1642, %v1695
          %v1726 = vadd.f32 %v1655, %v1708
          %v1727 = vadd.f32 %v1668, %v1721
          %v1728 = vmul.f32 %v1724, 0.5
          %v1729 = vtanh.pop %v1728
          %v1730 = vadd.f32 %v1729, 1.0
          %v1731 = vmul.f32 %v1730, 0.5
          %v1732 = vmul.f32 %v1725, 0.5
          %v1733 = vtanh.pop %v1732
          %v1734 = vadd.f32 %v1733, 1.0
          %v1735 = vmul.f32 %v1734, 0.5
          %v1736 = vtanh.pop %v1726
          %v1737 = vmul.f32 %v1727, 0.5
          %v1738 = vtanh.pop %v1737
          %v1739 = vadd.f32 %v1738, 1.0
          %v1740 = vmul.f32 %v1739, 0.5
          %v1741 = vmul.f32 %v1735, %v1609
          %v1742 = vmul.f32 %v1731, %v1736
          %v1743 = vadd.f32 %v1741, %v1742
          %v1744 = vtanh.pop %v1743
          %v1745 = vmul.f32 %v1740, %v1744
          %s1746 = scalar_lea.vmem %s368, 56 [#allocation7]
          %1747 = vst [vmem:[%s1746] sm:$0xff] %v1745
          %1748 = vst [vmem:[#allocation2] sm:$0xff] %v1745
          %1749 = vst [vmem:[#allocation3] sm:$0xff] %v1743
        $region48: #{encoder_forward.1} parent=35 // pred_fallthru
          _
        %p1750 = scmp.eq.s32.totalorder %s31, 1
        // Predicated region
        $region49: #{encoder_forward.1} parent=35 // pred_check
          %p1751 = pneg %p1750
        $region50: #{encoder_forward.1} parent=35 // pred_check_branch
          %1753 = sbr.rel (%p1751) target = $region52
        $region51: #{encoder_forward.1} parent=35 // pred_region
          %v1754 = vld [vmem:[#allocation2] sm:$0xff]
          %v1755 = vld [vmem:[#allocation3] sm:$0xff]
          %s1756 = scalar_lea.vmem %s392, 28
          %v1757 = vld [vmem:[%s1756] sm:$0xf]
          %v1759 = vperm.slane %v461, 0
          %v1760 = vperm.slane %v461, 1
          %v1761 = vperm.slane %v461, 2
          %v1762 = vperm.slane %v461, 3
          %v1775 = vunpack.c.l.b16 %v421
          %v1776 = vunpack.c.h.b16 %v421
          %v1777 = vunpack.c.l.b16 %v422
          %v1778 = vunpack.c.h.b16 %v422
          %v1779 = vunpack.c.l.b16 %v423
          %v1780 = vunpack.c.h.b16 %v423
          %v1781 = vunpack.c.l.b16 %v424
          %v1782 = vunpack.c.h.b16 %v424
          %v1783 = vunpack.c.l.b16 %v425
          %v1784 = vunpack.c.h.b16 %v425
          %v1785 = vunpack.c.l.b16 %v426
          %v1786 = vunpack.c.h.b16 %v426
          %v1787 = vunpack.c.l.b16 %v427
          %v1788 = vunpack.c.h.b16 %v427
          %v1789 = vunpack.c.l.b16 %v428
          %v1790 = vunpack.c.h.b16 %v428
          %v1791 = vpack.c.b16 %v1779, %v1775
          %v1792 = vpack.c.b16 %v1780, %v1776
          %v1793 = vpack.c.b16 %v1781, %v1777
          %v1794 = vpack.c.b16 %v1782, %v1778
          %v1795 = vpack.c.b16 %v1787, %v1783
          %v1796 = vpack.c.b16 %v1788, %v1784
          %v1797 = vpack.c.b16 %v1789, %v1785
          %v1798 = vpack.c.b16 %v1790, %v1786
          %vm1807 = vcmask 261120
          %v1809 = vsel %vm1807, %v1757, 0
          %1811 = vmatpush.bf16.msra.mxu0 0
          %1812 = vmatpush.bf16.msra.mxu0 0
          %1813 = vmatpush.bf16.msra.mxu0 0
          %1814 = vmatpush.bf16.msra.mxu0 0
          %1815 = vmatpush.bf16.msra.mxu0 0
          %1816 = vmatpush.bf16.msra.mxu0 0
          %1817 = vmatpush.bf16.msra.mxu0 %v1795
          %1818 = vmatpush.bf16.msra.mxu0 %v1791
          %1819 = vmatmul.bf16.gmra.mxu0 %v1809
          %v1820 = vpop.f32.mrf.mxu0
          %v1821 = vadd.f32 %v1759, %v1820
          %v1822 = vpop.f32.mrf.mxu0
          %1823 = vdwg.mxu0
          %1824 = vmatpush.bf16.msra.mxu0 0
          %1825 = vmatpush.bf16.msra.mxu0 0
          %1826 = vmatpush.bf16.msra.mxu0 0
          %1827 = vmatpush.bf16.msra.mxu0 0
          %1828 = vmatpush.bf16.msra.mxu0 0
          %1829 = vmatpush.bf16.msra.mxu0 0
          %1830 = vmatpush.bf16.msra.mxu0 %v1796
          %1831 = vmatpush.bf16.msra.mxu0 %v1792
          %1832 = vmatmul.bf16.gmra.mxu0 %v1809
          %v1833 = vpop.f32.mrf.mxu0
          %v1834 = vadd.f32 %v1760, %v1833
          %v1835 = vpop.f32.mrf.mxu0
          %1836 = vdwg.mxu0
          %1837 = vmatpush.bf16.msra.mxu0 0
          %1838 = vmatpush.bf16.msra.mxu0 0
          %1839 = vmatpush.bf16.msra.mxu0 0
          %1840 = vmatpush.bf16.msra.mxu0 0
          %1841 = vmatpush.bf16.msra.mxu0 0
          %1842 = vmatpush.bf16.msra.mxu0 0
          %1843 = vmatpush.bf16.msra.mxu0 %v1797
          %1844 = vmatpush.bf16.msra.mxu0 %v1793
          %1845 = vmatmul.bf16.gmra.mxu0 %v1809
          %v1846 = vpop.f32.mrf.mxu0
          %v1847 = vadd.f32 %v1761, %v1846
          %v1848 = vpop.f32.mrf.mxu0
          %1849 = vdwg.mxu0
          %1850 = vmatpush.bf16.msra.mxu0 0
          %1851 = vmatpush.bf16.msra.mxu0 0
          %1852 = vmatpush.bf16.msra.mxu0 0
          %1853 = vmatpush.bf16.msra.mxu0 0
          %1854 = vmatpush.bf16.msra.mxu0 0
          %1855 = vmatpush.bf16.msra.mxu0 0
          %1856 = vmatpush.bf16.msra.mxu0 %v1798
          %1857 = vmatpush.bf16.msra.mxu0 %v1794
          %1858 = vmatmul.bf16.gmra.mxu0 %v1809
          %v1859 = vpop.f32.mrf.mxu0
          %v1860 = vadd.f32 %v1762, %v1859
          %v1861 = vpop.f32.mrf.mxu0
          %1862 = vdwg.mxu0
          %v1863 = vpack.c.bf16 %v1754, %v1754
          %v1896 = vunpack.c.l.b16 %v429
          %v1897 = vunpack.c.h.b16 %v429
          %v1898 = vunpack.c.l.b16 %v430
          %v1899 = vunpack.c.h.b16 %v430
          %v1900 = vunpack.c.l.b16 %v431
          %v1901 = vunpack.c.h.b16 %v431
          %v1902 = vunpack.c.l.b16 %v432
          %v1903 = vunpack.c.h.b16 %v432
          %v1904 = vunpack.c.l.b16 %v433
          %v1905 = vunpack.c.h.b16 %v433
          %v1906 = vunpack.c.l.b16 %v434
          %v1907 = vunpack.c.h.b16 %v434
          %v1908 = vunpack.c.l.b16 %v435
          %v1909 = vunpack.c.h.b16 %v435
          %v1910 = vunpack.c.l.b16 %v436
          %v1911 = vunpack.c.h.b16 %v436
          %v1912 = vunpack.c.l.b16 %v437
          %v1913 = vunpack.c.h.b16 %v437
          %v1914 = vunpack.c.l.b16 %v438
          %v1915 = vunpack.c.h.b16 %v438
          %v1916 = vunpack.c.l.b16 %v439
          %v1917 = vunpack.c.h.b16 %v439
          %v1918 = vunpack.c.l.b16 %v440
          %v1919 = vunpack.c.h.b16 %v440
          %v1920 = vunpack.c.l.b16 %v441
          %v1921 = vunpack.c.h.b16 %v441
          %v1922 = vunpack.c.l.b16 %v442
          %v1923 = vunpack.c.h.b16 %v442
          %v1924 = vunpack.c.l.b16 %v443
          %v1925 = vunpack.c.h.b16 %v443
          %v1926 = vunpack.c.l.b16 %v444
          %v1927 = vunpack.c.h.b16 %v444
          %v1928 = vunpack.c.l.b16 %v445
          %v1929 = vunpack.c.h.b16 %v445
          %v1930 = vunpack.c.l.b16 %v446
          %v1931 = vunpack.c.h.b16 %v446
          %v1932 = vunpack.c.l.b16 %v447
          %v1933 = vunpack.c.h.b16 %v447
          %v1934 = vunpack.c.l.b16 %v448
          %v1935 = vunpack.c.h.b16 %v448
          %v1936 = vunpack.c.l.b16 %v449
          %v1937 = vunpack.c.h.b16 %v449
          %v1938 = vunpack.c.l.b16 %v450
          %v1939 = vunpack.c.h.b16 %v450
          %v1940 = vunpack.c.l.b16 %v451
          %v1941 = vunpack.c.h.b16 %v451
          %v1942 = vunpack.c.l.b16 %v452
          %v1943 = vunpack.c.h.b16 %v452
          %v1944 = vunpack.c.l.b16 %v453
          %v1945 = vunpack.c.h.b16 %v453
          %v1946 = vunpack.c.l.b16 %v454
          %v1947 = vunpack.c.h.b16 %v454
          %v1948 = vunpack.c.l.b16 %v455
          %v1949 = vunpack.c.h.b16 %v455
          %v1950 = vunpack.c.l.b16 %v456
          %v1951 = vunpack.c.h.b16 %v456
          %v1952 = vunpack.c.l.b16 %v457
          %v1953 = vunpack.c.h.b16 %v457
          %v1954 = vunpack.c.l.b16 %v458
          %v1955 = vunpack.c.h.b16 %v458
          %v1956 = vunpack.c.l.b16 %v459
          %v1957 = vunpack.c.h.b16 %v459
          %v1958 = vunpack.c.l.b16 %v460
          %v1959 = vunpack.c.h.b16 %v460
          %v1960 = vpack.c.b16 %v1900, %v1896
          %v1961 = vpack.c.b16 %v1901, %v1897
          %v1962 = vpack.c.b16 %v1902, %v1898
          %v1963 = vpack.c.b16 %v1903, %v1899
          %v1964 = vpack.c.b16 %v1908, %v1904
          %v1965 = vpack.c.b16 %v1909, %v1905
          %v1966 = vpack.c.b16 %v1910, %v1906
          %v1967 = vpack.c.b16 %v1911, %v1907
          %v1968 = vpack.c.b16 %v1916, %v1912
          %v1969 = vpack.c.b16 %v1917, %v1913
          %v1970 = vpack.c.b16 %v1918, %v1914
          %v1971 = vpack.c.b16 %v1919, %v1915
          %v1972 = vpack.c.b16 %v1924, %v1920
          %v1973 = vpack.c.b16 %v1925, %v1921
          %v1974 = vpack.c.b16 %v1926, %v1922
          %v1975 = vpack.c.b16 %v1927, %v1923
          %v1976 = vpack.c.b16 %v1932, %v1928
          %v1977 = vpack.c.b16 %v1933, %v1929
          %v1978 = vpack.c.b16 %v1934, %v1930
          %v1979 = vpack.c.b16 %v1935, %v1931
          %v1980 = vpack.c.b16 %v1940, %v1936
          %v1981 = vpack.c.b16 %v1941, %v1937
          %v1982 = vpack.c.b16 %v1942, %v1938
          %v1983 = vpack.c.b16 %v1943, %v1939
          %v1984 = vpack.c.b16 %v1948, %v1944
          %v1985 = vpack.c.b16 %v1949, %v1945
          %v1986 = vpack.c.b16 %v1950, %v1946
          %v1987 = vpack.c.b16 %v1951, %v1947
          %v1988 = vpack.c.b16 %v1956, %v1952
          %v1989 = vpack.c.b16 %v1957, %v1953
          %v1990 = vpack.c.b16 %v1958, %v1954
          %v1991 = vpack.c.b16 %v1959, %v1955
          %2024 = vmatpush.bf16.msra.mxu0 %v1988
          %2025 = vmatpush.bf16.msra.mxu0 %v1984
          %2026 = vmatpush.bf16.msra.mxu0 %v1980
          %2027 = vmatpush.bf16.msra.mxu0 %v1976
          %2028 = vmatpush.bf16.msra.mxu0 %v1972
          %2029 = vmatpush.bf16.msra.mxu0 %v1968
          %2030 = vmatpush.bf16.msra.mxu0 %v1964
          %2031 = vmatpush.bf16.msra.mxu0 %v1960
          %2032 = vmatmul.bf16.gmra.mxu0 %v1863
          %v2033 = vpop.f32.mrf.mxu0
          %v2034 = vadd.f32 0.0, %v2033
          %v2035 = vpop.f32.mrf.mxu0
          %2036 = vdwg.mxu0
          %2037 = vmatpush.bf16.msra.mxu0 %v1989
          %2038 = vmatpush.bf16.msra.mxu0 %v1985
          %2039 = vmatpush.bf16.msra.mxu0 %v1981
          %2040 = vmatpush.bf16.msra.mxu0 %v1977
          %2041 = vmatpush.bf16.msra.mxu0 %v1973
          %2042 = vmatpush.bf16.msra.mxu0 %v1969
          %2043 = vmatpush.bf16.msra.mxu0 %v1965
          %2044 = vmatpush.bf16.msra.mxu0 %v1961
          %2045 = vmatmul.bf16.gmra.mxu0 %v1863
          %v2046 = vpop.f32.mrf.mxu0
          %v2047 = vadd.f32 0.0, %v2046
          %v2048 = vpop.f32.mrf.mxu0
          %2049 = vdwg.mxu0
          %2050 = vmatpush.bf16.msra.mxu0 %v1990
          %2051 = vmatpush.bf16.msra.mxu0 %v1986
          %2052 = vmatpush.bf16.msra.mxu0 %v1982
          %2053 = vmatpush.bf16.msra.mxu0 %v1978
          %2054 = vmatpush.bf16.msra.mxu0 %v1974
          %2055 = vmatpush.bf16.msra.mxu0 %v1970
          %2056 = vmatpush.bf16.msra.mxu0 %v1966
          %2057 = vmatpush.bf16.msra.mxu0 %v1962
          %2058 = vmatmul.bf16.gmra.mxu0 %v1863
          %v2059 = vpop.f32.mrf.mxu0
          %v2060 = vadd.f32 0.0, %v2059
          %v2061 = vpop.f32.mrf.mxu0
          %2062 = vdwg.mxu0
          %2063 = vmatpush.bf16.msra.mxu0 %v1991
          %2064 = vmatpush.bf16.msra.mxu0 %v1987
          %2065 = vmatpush.bf16.msra.mxu0 %v1983
          %2066 = vmatpush.bf16.msra.mxu0 %v1979
          %2067 = vmatpush.bf16.msra.mxu0 %v1975
          %2068 = vmatpush.bf16.msra.mxu0 %v1971
          %2069 = vmatpush.bf16.msra.mxu0 %v1967
          %2070 = vmatpush.bf16.msra.mxu0 %v1963
          %2071 = vmatmul.bf16.gmra.mxu0 %v1863
          %v2072 = vpop.f32.mrf.mxu0
          %v2073 = vadd.f32 0.0, %v2072
          %v2074 = vpop.f32.mrf.mxu0
          %2075 = vdwg.mxu0
          %v2076 = vadd.f32 %v1821, %v2034
          %v2077 = vadd.f32 %v1834, %v2047
          %v2078 = vadd.f32 %v1847, %v2060
          %v2079 = vadd.f32 %v1860, %v2073
          %v2080 = vmul.f32 %v2076, 0.5
          %v2081 = vtanh.pop %v2080
          %v2082 = vadd.f32 %v2081, 1.0
          %v2083 = vmul.f32 %v2082, 0.5
          %v2084 = vmul.f32 %v2077, 0.5
          %v2085 = vtanh.pop %v2084
          %v2086 = vadd.f32 %v2085, 1.0
          %v2087 = vmul.f32 %v2086, 0.5
          %v2088 = vtanh.pop %v2078
          %v2089 = vmul.f32 %v2079, 0.5
          %v2090 = vtanh.pop %v2089
          %v2091 = vadd.f32 %v2090, 1.0
          %v2092 = vmul.f32 %v2091, 0.5
          %v2093 = vmul.f32 %v2087, %v1755
          %v2094 = vmul.f32 %v2083, %v2088
          %v2095 = vadd.f32 %v2093, %v2094
          %v2096 = vtanh.pop %v2095
          %v2097 = vmul.f32 %v2092, %v2096
          %s2098 = scalar_lea.vmem %s368, 56 [#allocation7]
          %2099 = vst [vmem:[%s2098] sm:$0xff] %v2097
          %s2100 = scalar_lea.vmem %s392, 24
          %v2101 = vld [vmem:[%s2100] sm:$0xf]
          %v2103 = vsel %vm1807, %v2101, 0
          %2105 = vmatpush.bf16.msra.mxu0 0
          %2106 = vmatpush.bf16.msra.mxu0 0
          %2107 = vmatpush.bf16.msra.mxu0 0
          %2108 = vmatpush.bf16.msra.mxu0 0
          %2109 = vmatpush.bf16.msra.mxu0 0
          %2110 = vmatpush.bf16.msra.mxu0 0
          %2111 = vmatpush.bf16.msra.mxu0 %v1795
          %2112 = vmatpush.bf16.msra.mxu0 %v1791
          %2113 = vmatmul.bf16.gmra.mxu0 %v2103
          %v2114 = vpop.f32.mrf.mxu0
          %v2115 = vadd.f32 %v1759, %v2114
          %v2116 = vpop.f32.mrf.mxu0
          %2117 = vdwg.mxu0
          %2118 = vmatpush.bf16.msra.mxu0 0
          %2119 = vmatpush.bf16.msra.mxu0 0
          %2120 = vmatpush.bf16.msra.mxu0 0
          %2121 = vmatpush.bf16.msra.mxu0 0
          %2122 = vmatpush.bf16.msra.mxu0 0
          %2123 = vmatpush.bf16.msra.mxu0 0
          %2124 = vmatpush.bf16.msra.mxu0 %v1796
          %2125 = vmatpush.bf16.msra.mxu0 %v1792
          %2126 = vmatmul.bf16.gmra.mxu0 %v2103
          %v2127 = vpop.f32.mrf.mxu0
          %v2128 = vadd.f32 %v1760, %v2127
          %v2129 = vpop.f32.mrf.mxu0
          %2130 = vdwg.mxu0
          %2131 = vmatpush.bf16.msra.mxu0 0
          %2132 = vmatpush.bf16.msra.mxu0 0
          %2133 = vmatpush.bf16.msra.mxu0 0
          %2134 = vmatpush.bf16.msra.mxu0 0
          %2135 = vmatpush.bf16.msra.mxu0 0
          %2136 = vmatpush.bf16.msra.mxu0 0
          %2137 = vmatpush.bf16.msra.mxu0 %v1797
          %2138 = vmatpush.bf16.msra.mxu0 %v1793
          %2139 = vmatmul.bf16.gmra.mxu0 %v2103
          %v2140 = vpop.f32.mrf.mxu0
          %v2141 = vadd.f32 %v1761, %v2140
          %v2142 = vpop.f32.mrf.mxu0
          %2143 = vdwg.mxu0
          %2144 = vmatpush.bf16.msra.mxu0 0
          %2145 = vmatpush.bf16.msra.mxu0 0
          %2146 = vmatpush.bf16.msra.mxu0 0
          %2147 = vmatpush.bf16.msra.mxu0 0
          %2148 = vmatpush.bf16.msra.mxu0 0
          %2149 = vmatpush.bf16.msra.mxu0 0
          %2150 = vmatpush.bf16.msra.mxu0 %v1798
          %2151 = vmatpush.bf16.msra.mxu0 %v1794
          %2152 = vmatmul.bf16.gmra.mxu0 %v2103
          %v2153 = vpop.f32.mrf.mxu0
          %v2154 = vadd.f32 %v1762, %v2153
          %v2155 = vpop.f32.mrf.mxu0
          %2156 = vdwg.mxu0
          %v2157 = vpack.c.bf16 %v2097, %v2097
          %2158 = vmatpush.bf16.msra.mxu0 %v1988
          %2159 = vmatpush.bf16.msra.mxu0 %v1984
          %2160 = vmatpush.bf16.msra.mxu0 %v1980
          %2161 = vmatpush.bf16.msra.mxu0 %v1976
          %2162 = vmatpush.bf16.msra.mxu0 %v1972
          %2163 = vmatpush.bf16.msra.mxu0 %v1968
          %2164 = vmatpush.bf16.msra.mxu0 %v1964
          %2165 = vmatpush.bf16.msra.mxu0 %v1960
          %2166 = vmatmul.bf16.gmra.mxu0 %v2157
          %v2167 = vpop.f32.mrf.mxu0
          %v2168 = vadd.f32 0.0, %v2167
          %v2169 = vpop.f32.mrf.mxu0
          %2170 = vdwg.mxu0
          %2171 = vmatpush.bf16.msra.mxu0 %v1989
          %2172 = vmatpush.bf16.msra.mxu0 %v1985
          %2173 = vmatpush.bf16.msra.mxu0 %v1981
          %2174 = vmatpush.bf16.msra.mxu0 %v1977
          %2175 = vmatpush.bf16.msra.mxu0 %v1973
          %2176 = vmatpush.bf16.msra.mxu0 %v1969
          %2177 = vmatpush.bf16.msra.mxu0 %v1965
          %2178 = vmatpush.bf16.msra.mxu0 %v1961
          %2179 = vmatmul.bf16.gmra.mxu0 %v2157
          %v2180 = vpop.f32.mrf.mxu0
          %v2181 = vadd.f32 0.0, %v2180
          %v2182 = vpop.f32.mrf.mxu0
          %2183 = vdwg.mxu0
          %2184 = vmatpush.bf16.msra.mxu0 %v1990
          %2185 = vmatpush.bf16.msra.mxu0 %v1986
          %2186 = vmatpush.bf16.msra.mxu0 %v1982
          %2187 = vmatpush.bf16.msra.mxu0 %v1978
          %2188 = vmatpush.bf16.msra.mxu0 %v1974
          %2189 = vmatpush.bf16.msra.mxu0 %v1970
          %2190 = vmatpush.bf16.msra.mxu0 %v1966
          %2191 = vmatpush.bf16.msra.mxu0 %v1962
          %2192 = vmatmul.bf16.gmra.mxu0 %v2157
          %v2193 = vpop.f32.mrf.mxu0
          %v2194 = vadd.f32 0.0, %v2193
          %v2195 = vpop.f32.mrf.mxu0
          %2196 = vdwg.mxu0
          %2197 = vmatpush.bf16.msra.mxu0 %v1991
          %2198 = vmatpush.bf16.msra.mxu0 %v1987
          %2199 = vmatpush.bf16.msra.mxu0 %v1983
          %2200 = vmatpush.bf16.msra.mxu0 %v1979
          %2201 = vmatpush.bf16.msra.mxu0 %v1975
          %2202 = vmatpush.bf16.msra.mxu0 %v1971
          %2203 = vmatpush.bf16.msra.mxu0 %v1967
          %2204 = vmatpush.bf16.msra.mxu0 %v1963
          %2205 = vmatmul.bf16.gmra.mxu0 %v2157
          %v2206 = vpop.f32.mrf.mxu0
          %v2207 = vadd.f32 0.0, %v2206
          %v2208 = vpop.f32.mrf.mxu0
          %2209 = vdwg.mxu0
          %v2210 = vadd.f32 %v2115, %v2168
          %v2211 = vadd.f32 %v2128, %v2181
          %v2212 = vadd.f32 %v2141, %v2194
          %v2213 = vadd.f32 %v2154, %v2207
          %v2214 = vmul.f32 %v2210, 0.5
          %v2215 = vtanh.pop %v2214
          %v2216 = vadd.f32 %v2215, 1.0
          %v2217 = vmul.f32 %v2216, 0.5
          %v2218 = vmul.f32 %v2211, 0.5
          %v2219 = vtanh.pop %v2218
          %v2220 = vadd.f32 %v2219, 1.0
          %v2221 = vmul.f32 %v2220, 0.5
          %v2222 = vtanh.pop %v2212
          %v2223 = vmul.f32 %v2213, 0.5
          %v2224 = vtanh.pop %v2223
          %v2225 = vadd.f32 %v2224, 1.0
          %v2226 = vmul.f32 %v2225, 0.5
          %v2227 = vmul.f32 %v2221, %v2095
          %v2228 = vmul.f32 %v2217, %v2222
          %v2229 = vadd.f32 %v2227, %v2228
          %v2230 = vtanh.pop %v2229
          %v2231 = vmul.f32 %v2226, %v2230
          %s2232 = scalar_lea.vmem %s368, 48 [#allocation7]
          %2233 = vst [vmem:[%s2232] sm:$0xff] %v2231
          %s2234 = scalar_lea.vmem %s392, 20
          %v2235 = vld [vmem:[%s2234] sm:$0xf]
          %v2237 = vsel %vm1807, %v2235, 0
          %2239 = vmatpush.bf16.msra.mxu0 0
          %2240 = vmatpush.bf16.msra.mxu0 0
          %2241 = vmatpush.bf16.msra.mxu0 0
          %2242 = vmatpush.bf16.msra.mxu0 0
          %2243 = vmatpush.bf16.msra.mxu0 0
          %2244 = vmatpush.bf16.msra.mxu0 0
          %2245 = vmatpush.bf16.msra.mxu0 %v1795
          %2246 = vmatpush.bf16.msra.mxu0 %v1791
          %2247 = vmatmul.bf16.gmra.mxu0 %v2237
          %v2248 = vpop.f32.mrf.mxu0
          %v2249 = vadd.f32 %v1759, %v2248
          %v2250 = vpop.f32.mrf.mxu0
          %2251 = vdwg.mxu0
          %2252 = vmatpush.bf16.msra.mxu0 0
          %2253 = vmatpush.bf16.msra.mxu0 0
          %2254 = vmatpush.bf16.msra.mxu0 0
          %2255 = vmatpush.bf16.msra.mxu0 0
          %2256 = vmatpush.bf16.msra.mxu0 0
          %2257 = vmatpush.bf16.msra.mxu0 0
          %2258 = vmatpush.bf16.msra.mxu0 %v1796
          %2259 = vmatpush.bf16.msra.mxu0 %v1792
          %2260 = vmatmul.bf16.gmra.mxu0 %v2237
          %v2261 = vpop.f32.mrf.mxu0
          %v2262 = vadd.f32 %v1760, %v2261
          %v2263 = vpop.f32.mrf.mxu0
          %2264 = vdwg.mxu0
          %2265 = vmatpush.bf16.msra.mxu0 0
          %2266 = vmatpush.bf16.msra.mxu0 0
          %2267 = vmatpush.bf16.msra.mxu0 0
          %2268 = vmatpush.bf16.msra.mxu0 0
          %2269 = vmatpush.bf16.msra.mxu0 0
          %2270 = vmatpush.bf16.msra.mxu0 0
          %2271 = vmatpush.bf16.msra.mxu0 %v1797
          %2272 = vmatpush.bf16.msra.mxu0 %v1793
          %2273 = vmatmul.bf16.gmra.mxu0 %v2237
          %v2274 = vpop.f32.mrf.mxu0
          %v2275 = vadd.f32 %v1761, %v2274
          %v2276 = vpop.f32.mrf.mxu0
          %2277 = vdwg.mxu0
          %2278 = vmatpush.bf16.msra.mxu0 0
          %2279 = vmatpush.bf16.msra.mxu0 0
          %2280 = vmatpush.bf16.msra.mxu0 0
          %2281 = vmatpush.bf16.msra.mxu0 0
          %2282 = vmatpush.bf16.msra.mxu0 0
          %2283 = vmatpush.bf16.msra.mxu0 0
          %2284 = vmatpush.bf16.msra.mxu0 %v1798
          %2285 = vmatpush.bf16.msra.mxu0 %v1794
          %2286 = vmatmul.bf16.gmra.mxu0 %v2237
          %v2287 = vpop.f32.mrf.mxu0
          %v2288 = vadd.f32 %v1762, %v2287
          %v2289 = vpop.f32.mrf.mxu0
          %2290 = vdwg.mxu0
          %v2291 = vpack.c.bf16 %v2231, %v2231
          %2292 = vmatpush.bf16.msra.mxu0 %v1988
          %2293 = vmatpush.bf16.msra.mxu0 %v1984
          %2294 = vmatpush.bf16.msra.mxu0 %v1980
          %2295 = vmatpush.bf16.msra.mxu0 %v1976
          %2296 = vmatpush.bf16.msra.mxu0 %v1972
          %2297 = vmatpush.bf16.msra.mxu0 %v1968
          %2298 = vmatpush.bf16.msra.mxu0 %v1964
          %2299 = vmatpush.bf16.msra.mxu0 %v1960
          %2300 = vmatmul.bf16.gmra.mxu0 %v2291
          %v2301 = vpop.f32.mrf.mxu0
          %v2302 = vadd.f32 0.0, %v2301
          %v2303 = vpop.f32.mrf.mxu0
          %2304 = vdwg.mxu0
          %2305 = vmatpush.bf16.msra.mxu0 %v1989
          %2306 = vmatpush.bf16.msra.mxu0 %v1985
          %2307 = vmatpush.bf16.msra.mxu0 %v1981
          %2308 = vmatpush.bf16.msra.mxu0 %v1977
          %2309 = vmatpush.bf16.msra.mxu0 %v1973
          %2310 = vmatpush.bf16.msra.mxu0 %v1969
          %2311 = vmatpush.bf16.msra.mxu0 %v1965
          %2312 = vmatpush.bf16.msra.mxu0 %v1961
          %2313 = vmatmul.bf16.gmra.mxu0 %v2291
          %v2314 = vpop.f32.mrf.mxu0
          %v2315 = vadd.f32 0.0, %v2314
          %v2316 = vpop.f32.mrf.mxu0
          %2317 = vdwg.mxu0
          %2318 = vmatpush.bf16.msra.mxu0 %v1990
          %2319 = vmatpush.bf16.msra.mxu0 %v1986
          %2320 = vmatpush.bf16.msra.mxu0 %v1982
          %2321 = vmatpush.bf16.msra.mxu0 %v1978
          %2322 = vmatpush.bf16.msra.mxu0 %v1974
          %2323 = vmatpush.bf16.msra.mxu0 %v1970
          %2324 = vmatpush.bf16.msra.mxu0 %v1966
          %2325 = vmatpush.bf16.msra.mxu0 %v1962
          %2326 = vmatmul.bf16.gmra.mxu0 %v2291
          %v2327 = vpop.f32.mrf.mxu0
          %v2328 = vadd.f32 0.0, %v2327
          %v2329 = vpop.f32.mrf.mxu0
          %2330 = vdwg.mxu0
          %2331 = vmatpush.bf16.msra.mxu0 %v1991
          %2332 = vmatpush.bf16.msra.mxu0 %v1987
          %2333 = vmatpush.bf16.msra.mxu0 %v1983
          %2334 = vmatpush.bf16.msra.mxu0 %v1979
          %2335 = vmatpush.bf16.msra.mxu0 %v1975
          %2336 = vmatpush.bf16.msra.mxu0 %v1971
          %2337 = vmatpush.bf16.msra.mxu0 %v1967
          %2338 = vmatpush.bf16.msra.mxu0 %v1963
          %2339 = vmatmul.bf16.gmra.mxu0 %v2291
          %v2340 = vpop.f32.mrf.mxu0
          %v2341 = vadd.f32 0.0, %v2340
          %v2342 = vpop.f32.mrf.mxu0
          %2343 = vdwg.mxu0
          %v2344 = vadd.f32 %v2249, %v2302
          %v2345 = vadd.f32 %v2262, %v2315
          %v2346 = vadd.f32 %v2275, %v2328
          %v2347 = vadd.f32 %v2288, %v2341
          %v2348 = vmul.f32 %v2344, 0.5
          %v2349 = vtanh.pop %v2348
          %v2350 = vadd.f32 %v2349, 1.0
          %v2351 = vmul.f32 %v2350, 0.5
          %v2352 = vmul.f32 %v2345, 0.5
          %v2353 = vtanh.pop %v2352
          %v2354 = vadd.f32 %v2353, 1.0
          %v2355 = vmul.f32 %v2354, 0.5
          %v2356 = vtanh.pop %v2346
          %v2357 = vmul.f32 %v2347, 0.5
          %v2358 = vtanh.pop %v2357
          %v2359 = vadd.f32 %v2358, 1.0
          %v2360 = vmul.f32 %v2359, 0.5
          %v2361 = vmul.f32 %v2355, %v2229
          %v2362 = vmul.f32 %v2351, %v2356
          %v2363 = vadd.f32 %v2361, %v2362
          %v2364 = vtanh.pop %v2363
          %v2365 = vmul.f32 %v2360, %v2364
          %s2366 = scalar_lea.vmem %s368, 40 [#allocation7]
          %2367 = vst [vmem:[%s2366] sm:$0xff] %v2365
          %s2368 = scalar_lea.vmem %s392, 16
          %v2369 = vld [vmem:[%s2368] sm:$0xf]
          %v2371 = vsel %vm1807, %v2369, 0
          %2373 = vmatpush.bf16.msra.mxu0 0
          %2374 = vmatpush.bf16.msra.mxu0 0
          %2375 = vmatpush.bf16.msra.mxu0 0
          %2376 = vmatpush.bf16.msra.mxu0 0
          %2377 = vmatpush.bf16.msra.mxu0 0
          %2378 = vmatpush.bf16.msra.mxu0 0
          %2379 = vmatpush.bf16.msra.mxu0 %v1795
          %2380 = vmatpush.bf16.msra.mxu0 %v1791
          %2381 = vmatmul.bf16.gmra.mxu0 %v2371
          %v2382 = vpop.f32.mrf.mxu0
          %v2383 = vadd.f32 %v1759, %v2382
          %v2384 = vpop.f32.mrf.mxu0
          %2385 = vdwg.mxu0
          %2386 = vmatpush.bf16.msra.mxu0 0
          %2387 = vmatpush.bf16.msra.mxu0 0
          %2388 = vmatpush.bf16.msra.mxu0 0
          %2389 = vmatpush.bf16.msra.mxu0 0
          %2390 = vmatpush.bf16.msra.mxu0 0
          %2391 = vmatpush.bf16.msra.mxu0 0
          %2392 = vmatpush.bf16.msra.mxu0 %v1796
          %2393 = vmatpush.bf16.msra.mxu0 %v1792
          %2394 = vmatmul.bf16.gmra.mxu0 %v2371
          %v2395 = vpop.f32.mrf.mxu0
          %v2396 = vadd.f32 %v1760, %v2395
          %v2397 = vpop.f32.mrf.mxu0
          %2398 = vdwg.mxu0
          %2399 = vmatpush.bf16.msra.mxu0 0
          %2400 = vmatpush.bf16.msra.mxu0 0
          %2401 = vmatpush.bf16.msra.mxu0 0
          %2402 = vmatpush.bf16.msra.mxu0 0
          %2403 = vmatpush.bf16.msra.mxu0 0
          %2404 = vmatpush.bf16.msra.mxu0 0
          %2405 = vmatpush.bf16.msra.mxu0 %v1797
          %2406 = vmatpush.bf16.msra.mxu0 %v1793
          %2407 = vmatmul.bf16.gmra.mxu0 %v2371
          %v2408 = vpop.f32.mrf.mxu0
          %v2409 = vadd.f32 %v1761, %v2408
          %v2410 = vpop.f32.mrf.mxu0
          %2411 = vdwg.mxu0
          %2412 = vmatpush.bf16.msra.mxu0 0
          %2413 = vmatpush.bf16.msra.mxu0 0
          %2414 = vmatpush.bf16.msra.mxu0 0
          %2415 = vmatpush.bf16.msra.mxu0 0
          %2416 = vmatpush.bf16.msra.mxu0 0
          %2417 = vmatpush.bf16.msra.mxu0 0
          %2418 = vmatpush.bf16.msra.mxu0 %v1798
          %2419 = vmatpush.bf16.msra.mxu0 %v1794
          %2420 = vmatmul.bf16.gmra.mxu0 %v2371
          %v2421 = vpop.f32.mrf.mxu0
          %v2422 = vadd.f32 %v1762, %v2421
          %v2423 = vpop.f32.mrf.mxu0
          %2424 = vdwg.mxu0
          %v2425 = vpack.c.bf16 %v2365, %v2365
          %2426 = vmatpush.bf16.msra.mxu0 %v1988
          %2427 = vmatpush.bf16.msra.mxu0 %v1984
          %2428 = vmatpush.bf16.msra.mxu0 %v1980
          %2429 = vmatpush.bf16.msra.mxu0 %v1976
          %2430 = vmatpush.bf16.msra.mxu0 %v1972
          %2431 = vmatpush.bf16.msra.mxu0 %v1968
          %2432 = vmatpush.bf16.msra.mxu0 %v1964
          %2433 = vmatpush.bf16.msra.mxu0 %v1960
          %2434 = vmatmul.bf16.gmra.mxu0 %v2425
          %v2435 = vpop.f32.mrf.mxu0
          %v2436 = vadd.f32 0.0, %v2435
          %v2437 = vpop.f32.mrf.mxu0
          %2438 = vdwg.mxu0
          %2439 = vmatpush.bf16.msra.mxu0 %v1989
          %2440 = vmatpush.bf16.msra.mxu0 %v1985
          %2441 = vmatpush.bf16.msra.mxu0 %v1981
          %2442 = vmatpush.bf16.msra.mxu0 %v1977
          %2443 = vmatpush.bf16.msra.mxu0 %v1973
          %2444 = vmatpush.bf16.msra.mxu0 %v1969
          %2445 = vmatpush.bf16.msra.mxu0 %v1965
          %2446 = vmatpush.bf16.msra.mxu0 %v1961
          %2447 = vmatmul.bf16.gmra.mxu0 %v2425
          %v2448 = vpop.f32.mrf.mxu0
          %v2449 = vadd.f32 0.0, %v2448
          %v2450 = vpop.f32.mrf.mxu0
          %2451 = vdwg.mxu0
          %2452 = vmatpush.bf16.msra.mxu0 %v1990
          %2453 = vmatpush.bf16.msra.mxu0 %v1986
          %2454 = vmatpush.bf16.msra.mxu0 %v1982
          %2455 = vmatpush.bf16.msra.mxu0 %v1978
          %2456 = vmatpush.bf16.msra.mxu0 %v1974
          %2457 = vmatpush.bf16.msra.mxu0 %v1970
          %2458 = vmatpush.bf16.msra.mxu0 %v1966
          %2459 = vmatpush.bf16.msra.mxu0 %v1962
          %2460 = vmatmul.bf16.gmra.mxu0 %v2425
          %v2461 = vpop.f32.mrf.mxu0
          %v2462 = vadd.f32 0.0, %v2461
          %v2463 = vpop.f32.mrf.mxu0
          %2464 = vdwg.mxu0
          %2465 = vmatpush.bf16.msra.mxu0 %v1991
          %2466 = vmatpush.bf16.msra.mxu0 %v1987
          %2467 = vmatpush.bf16.msra.mxu0 %v1983
          %2468 = vmatpush.bf16.msra.mxu0 %v1979
          %2469 = vmatpush.bf16.msra.mxu0 %v1975
          %2470 = vmatpush.bf16.msra.mxu0 %v1971
          %2471 = vmatpush.bf16.msra.mxu0 %v1967
          %2472 = vmatpush.bf16.msra.mxu0 %v1963
          %2473 = vmatmul.bf16.gmra.mxu0 %v2425
          %v2474 = vpop.f32.mrf.mxu0
          %v2475 = vadd.f32 0.0, %v2474
          %v2476 = vpop.f32.mrf.mxu0
          %2477 = vdwg.mxu0
          %v2478 = vadd.f32 %v2383, %v2436
          %v2479 = vadd.f32 %v2396, %v2449
          %v2480 = vadd.f32 %v2409, %v2462
          %v2481 = vadd.f32 %v2422, %v2475
          %v2482 = vmul.f32 %v2478, 0.5
          %v2483 = vtanh.pop %v2482
          %v2484 = vadd.f32 %v2483, 1.0
          %v2485 = vmul.f32 %v2484, 0.5
          %v2486 = vmul.f32 %v2479, 0.5
          %v2487 = vtanh.pop %v2486
          %v2488 = vadd.f32 %v2487, 1.0
          %v2489 = vmul.f32 %v2488, 0.5
          %v2490 = vtanh.pop %v2480
          %v2491 = vmul.f32 %v2481, 0.5
          %v2492 = vtanh.pop %v2491
          %v2493 = vadd.f32 %v2492, 1.0
          %v2494 = vmul.f32 %v2493, 0.5
          %v2495 = vmul.f32 %v2489, %v2363
          %v2496 = vmul.f32 %v2485, %v2490
          %v2497 = vadd.f32 %v2495, %v2496
          %v2498 = vtanh.pop %v2497
          %v2499 = vmul.f32 %v2494, %v2498
          %s2500 = scalar_lea.vmem %s368, 32 [#allocation7]
          %2501 = vst [vmem:[%s2500] sm:$0xff] %v2499
          %s2502 = scalar_lea.vmem %s392, 12
          %v2503 = vld [vmem:[%s2502] sm:$0xf]
          %v2505 = vsel %vm1807, %v2503, 0
          %2507 = vmatpush.bf16.msra.mxu0 0
          %2508 = vmatpush.bf16.msra.mxu0 0
          %2509 = vmatpush.bf16.msra.mxu0 0
          %2510 = vmatpush.bf16.msra.mxu0 0
          %2511 = vmatpush.bf16.msra.mxu0 0
          %2512 = vmatpush.bf16.msra.mxu0 0
          %2513 = vmatpush.bf16.msra.mxu0 %v1795
          %2514 = vmatpush.bf16.msra.mxu0 %v1791
          %2515 = vmatmul.bf16.gmra.mxu0 %v2505
          %v2516 = vpop.f32.mrf.mxu0
          %v2517 = vadd.f32 %v1759, %v2516
          %v2518 = vpop.f32.mrf.mxu0
          %2519 = vdwg.mxu0
          %2520 = vmatpush.bf16.msra.mxu0 0
          %2521 = vmatpush.bf16.msra.mxu0 0
          %2522 = vmatpush.bf16.msra.mxu0 0
          %2523 = vmatpush.bf16.msra.mxu0 0
          %2524 = vmatpush.bf16.msra.mxu0 0
          %2525 = vmatpush.bf16.msra.mxu0 0
          %2526 = vmatpush.bf16.msra.mxu0 %v1796
          %2527 = vmatpush.bf16.msra.mxu0 %v1792
          %2528 = vmatmul.bf16.gmra.mxu0 %v2505
          %v2529 = vpop.f32.mrf.mxu0
          %v2530 = vadd.f32 %v1760, %v2529
          %v2531 = vpop.f32.mrf.mxu0
          %2532 = vdwg.mxu0
          %2533 = vmatpush.bf16.msra.mxu0 0
          %2534 = vmatpush.bf16.msra.mxu0 0
          %2535 = vmatpush.bf16.msra.mxu0 0
          %2536 = vmatpush.bf16.msra.mxu0 0
          %2537 = vmatpush.bf16.msra.mxu0 0
          %2538 = vmatpush.bf16.msra.mxu0 0
          %2539 = vmatpush.bf16.msra.mxu0 %v1797
          %2540 = vmatpush.bf16.msra.mxu0 %v1793
          %2541 = vmatmul.bf16.gmra.mxu0 %v2505
          %v2542 = vpop.f32.mrf.mxu0
          %v2543 = vadd.f32 %v1761, %v2542
          %v2544 = vpop.f32.mrf.mxu0
          %2545 = vdwg.mxu0
          %2546 = vmatpush.bf16.msra.mxu0 0
          %2547 = vmatpush.bf16.msra.mxu0 0
          %2548 = vmatpush.bf16.msra.mxu0 0
          %2549 = vmatpush.bf16.msra.mxu0 0
          %2550 = vmatpush.bf16.msra.mxu0 0
          %2551 = vmatpush.bf16.msra.mxu0 0
          %2552 = vmatpush.bf16.msra.mxu0 %v1798
          %2553 = vmatpush.bf16.msra.mxu0 %v1794
          %2554 = vmatmul.bf16.gmra.mxu0 %v2505
          %v2555 = vpop.f32.mrf.mxu0
          %v2556 = vadd.f32 %v1762, %v2555
          %v2557 = vpop.f32.mrf.mxu0
          %2558 = vdwg.mxu0
          %v2559 = vpack.c.bf16 %v2499, %v2499
          %2560 = vmatpush.bf16.msra.mxu0 %v1988
          %2561 = vmatpush.bf16.msra.mxu0 %v1984
          %2562 = vmatpush.bf16.msra.mxu0 %v1980
          %2563 = vmatpush.bf16.msra.mxu0 %v1976
          %2564 = vmatpush.bf16.msra.mxu0 %v1972
          %2565 = vmatpush.bf16.msra.mxu0 %v1968
          %2566 = vmatpush.bf16.msra.mxu0 %v1964
          %2567 = vmatpush.bf16.msra.mxu0 %v1960
          %2568 = vmatmul.bf16.gmra.mxu0 %v2559
          %v2569 = vpop.f32.mrf.mxu0
          %v2570 = vadd.f32 0.0, %v2569
          %v2571 = vpop.f32.mrf.mxu0
          %2572 = vdwg.mxu0
          %2573 = vmatpush.bf16.msra.mxu0 %v1989
          %2574 = vmatpush.bf16.msra.mxu0 %v1985
          %2575 = vmatpush.bf16.msra.mxu0 %v1981
          %2576 = vmatpush.bf16.msra.mxu0 %v1977
          %2577 = vmatpush.bf16.msra.mxu0 %v1973
          %2578 = vmatpush.bf16.msra.mxu0 %v1969
          %2579 = vmatpush.bf16.msra.mxu0 %v1965
          %2580 = vmatpush.bf16.msra.mxu0 %v1961
          %2581 = vmatmul.bf16.gmra.mxu0 %v2559
          %v2582 = vpop.f32.mrf.mxu0
          %v2583 = vadd.f32 0.0, %v2582
          %v2584 = vpop.f32.mrf.mxu0
          %2585 = vdwg.mxu0
          %2586 = vmatpush.bf16.msra.mxu0 %v1990
          %2587 = vmatpush.bf16.msra.mxu0 %v1986
          %2588 = vmatpush.bf16.msra.mxu0 %v1982
          %2589 = vmatpush.bf16.msra.mxu0 %v1978
          %2590 = vmatpush.bf16.msra.mxu0 %v1974
          %2591 = vmatpush.bf16.msra.mxu0 %v1970
          %2592 = vmatpush.bf16.msra.mxu0 %v1966
          %2593 = vmatpush.bf16.msra.mxu0 %v1962
          %2594 = vmatmul.bf16.gmra.mxu0 %v2559
          %v2595 = vpop.f32.mrf.mxu0
          %v2596 = vadd.f32 0.0, %v2595
          %v2597 = vpop.f32.mrf.mxu0
          %2598 = vdwg.mxu0
          %2599 = vmatpush.bf16.msra.mxu0 %v1991
          %2600 = vmatpush.bf16.msra.mxu0 %v1987
          %2601 = vmatpush.bf16.msra.mxu0 %v1983
          %2602 = vmatpush.bf16.msra.mxu0 %v1979
          %2603 = vmatpush.bf16.msra.mxu0 %v1975
          %2604 = vmatpush.bf16.msra.mxu0 %v1971
          %2605 = vmatpush.bf16.msra.mxu0 %v1967
          %2606 = vmatpush.bf16.msra.mxu0 %v1963
          %2607 = vmatmul.bf16.gmra.mxu0 %v2559
          %v2608 = vpop.f32.mrf.mxu0
          %v2609 = vadd.f32 0.0, %v2608
          %v2610 = vpop.f32.mrf.mxu0
          %2611 = vdwg.mxu0
          %v2612 = vadd.f32 %v2517, %v2570
          %v2613 = vadd.f32 %v2530, %v2583
          %v2614 = vadd.f32 %v2543, %v2596
          %v2615 = vadd.f32 %v2556, %v2609
          %v2616 = vmul.f32 %v2612, 0.5
          %v2617 = vtanh.pop %v2616
          %v2618 = vadd.f32 %v2617, 1.0
          %v2619 = vmul.f32 %v2618, 0.5
          %v2620 = vmul.f32 %v2613, 0.5
          %v2621 = vtanh.pop %v2620
          %v2622 = vadd.f32 %v2621, 1.0
          %v2623 = vmul.f32 %v2622, 0.5
          %v2624 = vtanh.pop %v2614
          %v2625 = vmul.f32 %v2615, 0.5
          %v2626 = vtanh.pop %v2625
          %v2627 = vadd.f32 %v2626, 1.0
          %v2628 = vmul.f32 %v2627, 0.5
          %v2629 = vmul.f32 %v2623, %v2497
          %v2630 = vmul.f32 %v2619, %v2624
          %v2631 = vadd.f32 %v2629, %v2630
          %v2632 = vtanh.pop %v2631
          %v2633 = vmul.f32 %v2628, %v2632
          %s2634 = scalar_lea.vmem %s368, 24 [#allocation7]
          %2635 = vst [vmem:[%s2634] sm:$0xff] %v2633
          %s2636 = scalar_lea.vmem %s392, 8
          %v2637 = vld [vmem:[%s2636] sm:$0xf]
          %v2639 = vsel %vm1807, %v2637, 0
          %2641 = vmatpush.bf16.msra.mxu0 0
          %2642 = vmatpush.bf16.msra.mxu0 0
          %2643 = vmatpush.bf16.msra.mxu0 0
          %2644 = vmatpush.bf16.msra.mxu0 0
          %2645 = vmatpush.bf16.msra.mxu0 0
          %2646 = vmatpush.bf16.msra.mxu0 0
          %2647 = vmatpush.bf16.msra.mxu0 %v1795
          %2648 = vmatpush.bf16.msra.mxu0 %v1791
          %2649 = vmatmul.bf16.gmra.mxu0 %v2639
          %v2650 = vpop.f32.mrf.mxu0
          %v2651 = vadd.f32 %v1759, %v2650
          %v2652 = vpop.f32.mrf.mxu0
          %2653 = vdwg.mxu0
          %2654 = vmatpush.bf16.msra.mxu0 0
          %2655 = vmatpush.bf16.msra.mxu0 0
          %2656 = vmatpush.bf16.msra.mxu0 0
          %2657 = vmatpush.bf16.msra.mxu0 0
          %2658 = vmatpush.bf16.msra.mxu0 0
          %2659 = vmatpush.bf16.msra.mxu0 0
          %2660 = vmatpush.bf16.msra.mxu0 %v1796
          %2661 = vmatpush.bf16.msra.mxu0 %v1792
          %2662 = vmatmul.bf16.gmra.mxu0 %v2639
          %v2663 = vpop.f32.mrf.mxu0
          %v2664 = vadd.f32 %v1760, %v2663
          %v2665 = vpop.f32.mrf.mxu0
          %2666 = vdwg.mxu0
          %2667 = vmatpush.bf16.msra.mxu0 0
          %2668 = vmatpush.bf16.msra.mxu0 0
          %2669 = vmatpush.bf16.msra.mxu0 0
          %2670 = vmatpush.bf16.msra.mxu0 0
          %2671 = vmatpush.bf16.msra.mxu0 0
          %2672 = vmatpush.bf16.msra.mxu0 0
          %2673 = vmatpush.bf16.msra.mxu0 %v1797
          %2674 = vmatpush.bf16.msra.mxu0 %v1793
          %2675 = vmatmul.bf16.gmra.mxu0 %v2639
          %v2676 = vpop.f32.mrf.mxu0
          %v2677 = vadd.f32 %v1761, %v2676
          %v2678 = vpop.f32.mrf.mxu0
          %2679 = vdwg.mxu0
          %2680 = vmatpush.bf16.msra.mxu0 0
          %2681 = vmatpush.bf16.msra.mxu0 0
          %2682 = vmatpush.bf16.msra.mxu0 0
          %2683 = vmatpush.bf16.msra.mxu0 0
          %2684 = vmatpush.bf16.msra.mxu0 0
          %2685 = vmatpush.bf16.msra.mxu0 0
          %2686 = vmatpush.bf16.msra.mxu0 %v1798
          %2687 = vmatpush.bf16.msra.mxu0 %v1794
          %2688 = vmatmul.bf16.gmra.mxu0 %v2639
          %v2689 = vpop.f32.mrf.mxu0
          %v2690 = vadd.f32 %v1762, %v2689
          %v2691 = vpop.f32.mrf.mxu0
          %2692 = vdwg.mxu0
          %v2693 = vpack.c.bf16 %v2633, %v2633
          %2694 = vmatpush.bf16.msra.mxu0 %v1988
          %2695 = vmatpush.bf16.msra.mxu0 %v1984
          %2696 = vmatpush.bf16.msra.mxu0 %v1980
          %2697 = vmatpush.bf16.msra.mxu0 %v1976
          %2698 = vmatpush.bf16.msra.mxu0 %v1972
          %2699 = vmatpush.bf16.msra.mxu0 %v1968
          %2700 = vmatpush.bf16.msra.mxu0 %v1964
          %2701 = vmatpush.bf16.msra.mxu0 %v1960
          %2702 = vmatmul.bf16.gmra.mxu0 %v2693
          %v2703 = vpop.f32.mrf.mxu0
          %v2704 = vadd.f32 0.0, %v2703
          %v2705 = vpop.f32.mrf.mxu0
          %2706 = vdwg.mxu0
          %2707 = vmatpush.bf16.msra.mxu0 %v1989
          %2708 = vmatpush.bf16.msra.mxu0 %v1985
          %2709 = vmatpush.bf16.msra.mxu0 %v1981
          %2710 = vmatpush.bf16.msra.mxu0 %v1977
          %2711 = vmatpush.bf16.msra.mxu0 %v1973
          %2712 = vmatpush.bf16.msra.mxu0 %v1969
          %2713 = vmatpush.bf16.msra.mxu0 %v1965
          %2714 = vmatpush.bf16.msra.mxu0 %v1961
          %2715 = vmatmul.bf16.gmra.mxu0 %v2693
          %v2716 = vpop.f32.mrf.mxu0
          %v2717 = vadd.f32 0.0, %v2716
          %v2718 = vpop.f32.mrf.mxu0
          %2719 = vdwg.mxu0
          %2720 = vmatpush.bf16.msra.mxu0 %v1990
          %2721 = vmatpush.bf16.msra.mxu0 %v1986
          %2722 = vmatpush.bf16.msra.mxu0 %v1982
          %2723 = vmatpush.bf16.msra.mxu0 %v1978
          %2724 = vmatpush.bf16.msra.mxu0 %v1974
          %2725 = vmatpush.bf16.msra.mxu0 %v1970
          %2726 = vmatpush.bf16.msra.mxu0 %v1966
          %2727 = vmatpush.bf16.msra.mxu0 %v1962
          %2728 = vmatmul.bf16.gmra.mxu0 %v2693
          %v2729 = vpop.f32.mrf.mxu0
          %v2730 = vadd.f32 0.0, %v2729
          %v2731 = vpop.f32.mrf.mxu0
          %2732 = vdwg.mxu0
          %2733 = vmatpush.bf16.msra.mxu0 %v1991
          %2734 = vmatpush.bf16.msra.mxu0 %v1987
          %2735 = vmatpush.bf16.msra.mxu0 %v1983
          %2736 = vmatpush.bf16.msra.mxu0 %v1979
          %2737 = vmatpush.bf16.msra.mxu0 %v1975
          %2738 = vmatpush.bf16.msra.mxu0 %v1971
          %2739 = vmatpush.bf16.msra.mxu0 %v1967
          %2740 = vmatpush.bf16.msra.mxu0 %v1963
          %2741 = vmatmul.bf16.gmra.mxu0 %v2693
          %v2742 = vpop.f32.mrf.mxu0
          %v2743 = vadd.f32 0.0, %v2742
          %v2744 = vpop.f32.mrf.mxu0
          %2745 = vdwg.mxu0
          %v2746 = vadd.f32 %v2651, %v2704
          %v2747 = vadd.f32 %v2664, %v2717
          %v2748 = vadd.f32 %v2677, %v2730
          %v2749 = vadd.f32 %v2690, %v2743
          %v2750 = vmul.f32 %v2746, 0.5
          %v2751 = vtanh.pop %v2750
          %v2752 = vadd.f32 %v2751, 1.0
          %v2753 = vmul.f32 %v2752, 0.5
          %v2754 = vmul.f32 %v2747, 0.5
          %v2755 = vtanh.pop %v2754
          %v2756 = vadd.f32 %v2755, 1.0
          %v2757 = vmul.f32 %v2756, 0.5
          %v2758 = vtanh.pop %v2748
          %v2759 = vmul.f32 %v2749, 0.5
          %v2760 = vtanh.pop %v2759
          %v2761 = vadd.f32 %v2760, 1.0
          %v2762 = vmul.f32 %v2761, 0.5
          %v2763 = vmul.f32 %v2757, %v2631
          %v2764 = vmul.f32 %v2753, %v2758
          %v2765 = vadd.f32 %v2763, %v2764
          %v2766 = vtanh.pop %v2765
          %v2767 = vmul.f32 %v2762, %v2766
          %s2768 = scalar_lea.vmem %s368, 16 [#allocation7]
          %2769 = vst [vmem:[%s2768] sm:$0xff] %v2767
          %s2770 = scalar_lea.vmem %s392, 4
          %v2771 = vld [vmem:[%s2770] sm:$0xf]
          %v2773 = vsel %vm1807, %v2771, 0
          %2775 = vmatpush.bf16.msra.mxu0 0
          %2776 = vmatpush.bf16.msra.mxu0 0
          %2777 = vmatpush.bf16.msra.mxu0 0
          %2778 = vmatpush.bf16.msra.mxu0 0
          %2779 = vmatpush.bf16.msra.mxu0 0
          %2780 = vmatpush.bf16.msra.mxu0 0
          %2781 = vmatpush.bf16.msra.mxu0 %v1795
          %2782 = vmatpush.bf16.msra.mxu0 %v1791
          %2783 = vmatmul.bf16.gmra.mxu0 %v2773
          %v2784 = vpop.f32.mrf.mxu0
          %v2785 = vadd.f32 %v1759, %v2784
          %v2786 = vpop.f32.mrf.mxu0
          %2787 = vdwg.mxu0
          %2788 = vmatpush.bf16.msra.mxu0 0
          %2789 = vmatpush.bf16.msra.mxu0 0
          %2790 = vmatpush.bf16.msra.mxu0 0
          %2791 = vmatpush.bf16.msra.mxu0 0
          %2792 = vmatpush.bf16.msra.mxu0 0
          %2793 = vmatpush.bf16.msra.mxu0 0
          %2794 = vmatpush.bf16.msra.mxu0 %v1796
          %2795 = vmatpush.bf16.msra.mxu0 %v1792
          %2796 = vmatmul.bf16.gmra.mxu0 %v2773
          %v2797 = vpop.f32.mrf.mxu0
          %v2798 = vadd.f32 %v1760, %v2797
          %v2799 = vpop.f32.mrf.mxu0
          %2800 = vdwg.mxu0
          %2801 = vmatpush.bf16.msra.mxu0 0
          %2802 = vmatpush.bf16.msra.mxu0 0
          %2803 = vmatpush.bf16.msra.mxu0 0
          %2804 = vmatpush.bf16.msra.mxu0 0
          %2805 = vmatpush.bf16.msra.mxu0 0
          %2806 = vmatpush.bf16.msra.mxu0 0
          %2807 = vmatpush.bf16.msra.mxu0 %v1797
          %2808 = vmatpush.bf16.msra.mxu0 %v1793
          %2809 = vmatmul.bf16.gmra.mxu0 %v2773
          %v2810 = vpop.f32.mrf.mxu0
          %v2811 = vadd.f32 %v1761, %v2810
          %v2812 = vpop.f32.mrf.mxu0
          %2813 = vdwg.mxu0
          %2814 = vmatpush.bf16.msra.mxu0 0
          %2815 = vmatpush.bf16.msra.mxu0 0
          %2816 = vmatpush.bf16.msra.mxu0 0
          %2817 = vmatpush.bf16.msra.mxu0 0
          %2818 = vmatpush.bf16.msra.mxu0 0
          %2819 = vmatpush.bf16.msra.mxu0 0
          %2820 = vmatpush.bf16.msra.mxu0 %v1798
          %2821 = vmatpush.bf16.msra.mxu0 %v1794
          %2822 = vmatmul.bf16.gmra.mxu0 %v2773
          %v2823 = vpop.f32.mrf.mxu0
          %v2824 = vadd.f32 %v1762, %v2823
          %v2825 = vpop.f32.mrf.mxu0
          %2826 = vdwg.mxu0
          %v2827 = vpack.c.bf16 %v2767, %v2767
          %2828 = vmatpush.bf16.msra.mxu0 %v1988
          %2829 = vmatpush.bf16.msra.mxu0 %v1984
          %2830 = vmatpush.bf16.msra.mxu0 %v1980
          %2831 = vmatpush.bf16.msra.mxu0 %v1976
          %2832 = vmatpush.bf16.msra.mxu0 %v1972
          %2833 = vmatpush.bf16.msra.mxu0 %v1968
          %2834 = vmatpush.bf16.msra.mxu0 %v1964
          %2835 = vmatpush.bf16.msra.mxu0 %v1960
          %2836 = vmatmul.bf16.gmra.mxu0 %v2827
          %v2837 = vpop.f32.mrf.mxu0
          %v2838 = vadd.f32 0.0, %v2837
          %v2839 = vpop.f32.mrf.mxu0
          %2840 = vdwg.mxu0
          %2841 = vmatpush.bf16.msra.mxu0 %v1989
          %2842 = vmatpush.bf16.msra.mxu0 %v1985
          %2843 = vmatpush.bf16.msra.mxu0 %v1981
          %2844 = vmatpush.bf16.msra.mxu0 %v1977
          %2845 = vmatpush.bf16.msra.mxu0 %v1973
          %2846 = vmatpush.bf16.msra.mxu0 %v1969
          %2847 = vmatpush.bf16.msra.mxu0 %v1965
          %2848 = vmatpush.bf16.msra.mxu0 %v1961
          %2849 = vmatmul.bf16.gmra.mxu0 %v2827
          %v2850 = vpop.f32.mrf.mxu0
          %v2851 = vadd.f32 0.0, %v2850
          %v2852 = vpop.f32.mrf.mxu0
          %2853 = vdwg.mxu0
          %2854 = vmatpush.bf16.msra.mxu0 %v1990
          %2855 = vmatpush.bf16.msra.mxu0 %v1986
          %2856 = vmatpush.bf16.msra.mxu0 %v1982
          %2857 = vmatpush.bf16.msra.mxu0 %v1978
          %2858 = vmatpush.bf16.msra.mxu0 %v1974
          %2859 = vmatpush.bf16.msra.mxu0 %v1970
          %2860 = vmatpush.bf16.msra.mxu0 %v1966
          %2861 = vmatpush.bf16.msra.mxu0 %v1962
          %2862 = vmatmul.bf16.gmra.mxu0 %v2827
          %v2863 = vpop.f32.mrf.mxu0
          %v2864 = vadd.f32 0.0, %v2863
          %v2865 = vpop.f32.mrf.mxu0
          %2866 = vdwg.mxu0
          %2867 = vmatpush.bf16.msra.mxu0 %v1991
          %2868 = vmatpush.bf16.msra.mxu0 %v1987
          %2869 = vmatpush.bf16.msra.mxu0 %v1983
          %2870 = vmatpush.bf16.msra.mxu0 %v1979
          %2871 = vmatpush.bf16.msra.mxu0 %v1975
          %2872 = vmatpush.bf16.msra.mxu0 %v1971
          %2873 = vmatpush.bf16.msra.mxu0 %v1967
          %2874 = vmatpush.bf16.msra.mxu0 %v1963
          %2875 = vmatmul.bf16.gmra.mxu0 %v2827
          %v2876 = vpop.f32.mrf.mxu0
          %v2877 = vadd.f32 0.0, %v2876
          %v2878 = vpop.f32.mrf.mxu0
          %2879 = vdwg.mxu0
          %v2880 = vadd.f32 %v2785, %v2838
          %v2881 = vadd.f32 %v2798, %v2851
          %v2882 = vadd.f32 %v2811, %v2864
          %v2883 = vadd.f32 %v2824, %v2877
          %v2884 = vmul.f32 %v2880, 0.5
          %v2885 = vtanh.pop %v2884
          %v2886 = vadd.f32 %v2885, 1.0
          %v2887 = vmul.f32 %v2886, 0.5
          %v2888 = vmul.f32 %v2881, 0.5
          %v2889 = vtanh.pop %v2888
          %v2890 = vadd.f32 %v2889, 1.0
          %v2891 = vmul.f32 %v2890, 0.5
          %v2892 = vtanh.pop %v2882
          %v2893 = vmul.f32 %v2883, 0.5
          %v2894 = vtanh.pop %v2893
          %v2895 = vadd.f32 %v2894, 1.0
          %v2896 = vmul.f32 %v2895, 0.5
          %v2897 = vmul.f32 %v2891, %v2765
          %v2898 = vmul.f32 %v2887, %v2892
          %v2899 = vadd.f32 %v2897, %v2898
          %v2900 = vtanh.pop %v2899
          %v2901 = vmul.f32 %v2896, %v2900
          %s2902 = scalar_lea.vmem %s368, 8 [#allocation7]
          %2903 = vst [vmem:[%s2902] sm:$0xff] %v2901
          %v2904 = vld [vmem:[%s392] sm:$0xf]
          %v2906 = vsel %vm1807, %v2904, 0
          %2908 = vmatpush.bf16.msra.mxu0 0
          %2909 = vmatpush.bf16.msra.mxu0 0
          %2910 = vmatpush.bf16.msra.mxu0 0
          %2911 = vmatpush.bf16.msra.mxu0 0
          %2912 = vmatpush.bf16.msra.mxu0 0
          %2913 = vmatpush.bf16.msra.mxu0 0
          %2914 = vmatpush.bf16.msra.mxu0 %v1795
          %2915 = vmatpush.bf16.msra.mxu0 %v1791
          %2916 = vmatmul.bf16.gmra.mxu0 %v2906
          %v2917 = vpop.f32.mrf.mxu0
          %v2918 = vadd.f32 %v1759, %v2917
          %v2919 = vpop.f32.mrf.mxu0
          %2920 = vdwg.mxu0
          %2921 = vmatpush.bf16.msra.mxu0 0
          %2922 = vmatpush.bf16.msra.mxu0 0
          %2923 = vmatpush.bf16.msra.mxu0 0
          %2924 = vmatpush.bf16.msra.mxu0 0
          %2925 = vmatpush.bf16.msra.mxu0 0
          %2926 = vmatpush.bf16.msra.mxu0 0
          %2927 = vmatpush.bf16.msra.mxu0 %v1796
          %2928 = vmatpush.bf16.msra.mxu0 %v1792
          %2929 = vmatmul.bf16.gmra.mxu0 %v2906
          %v2930 = vpop.f32.mrf.mxu0
          %v2931 = vadd.f32 %v1760, %v2930
          %v2932 = vpop.f32.mrf.mxu0
          %2933 = vdwg.mxu0
          %2934 = vmatpush.bf16.msra.mxu0 0
          %2935 = vmatpush.bf16.msra.mxu0 0
          %2936 = vmatpush.bf16.msra.mxu0 0
          %2937 = vmatpush.bf16.msra.mxu0 0
          %2938 = vmatpush.bf16.msra.mxu0 0
          %2939 = vmatpush.bf16.msra.mxu0 0
          %2940 = vmatpush.bf16.msra.mxu0 %v1797
          %2941 = vmatpush.bf16.msra.mxu0 %v1793
          %2942 = vmatmul.bf16.gmra.mxu0 %v2906
          %v2943 = vpop.f32.mrf.mxu0
          %v2944 = vadd.f32 %v1761, %v2943
          %v2945 = vpop.f32.mrf.mxu0
          %2946 = vdwg.mxu0
          %2947 = vmatpush.bf16.msra.mxu0 0
          %2948 = vmatpush.bf16.msra.mxu0 0
          %2949 = vmatpush.bf16.msra.mxu0 0
          %2950 = vmatpush.bf16.msra.mxu0 0
          %2951 = vmatpush.bf16.msra.mxu0 0
          %2952 = vmatpush.bf16.msra.mxu0 0
          %2953 = vmatpush.bf16.msra.mxu0 %v1798
          %2954 = vmatpush.bf16.msra.mxu0 %v1794
          %2955 = vmatmul.bf16.gmra.mxu0 %v2906
          %v2956 = vpop.f32.mrf.mxu0
          %v2957 = vadd.f32 %v1762, %v2956
          %v2958 = vpop.f32.mrf.mxu0
          %2959 = vdwg.mxu0
          %v2960 = vpack.c.bf16 %v2901, %v2901
          %2961 = vmatpush.bf16.msra.mxu0 %v1988
          %2962 = vmatpush.bf16.msra.mxu0 %v1984
          %2963 = vmatpush.bf16.msra.mxu0 %v1980
          %2964 = vmatpush.bf16.msra.mxu0 %v1976
          %2965 = vmatpush.bf16.msra.mxu0 %v1972
          %2966 = vmatpush.bf16.msra.mxu0 %v1968
          %2967 = vmatpush.bf16.msra.mxu0 %v1964
          %2968 = vmatpush.bf16.msra.mxu0 %v1960
          %2969 = vmatmul.bf16.gmra.mxu0 %v2960
          %v2970 = vpop.f32.mrf.mxu0
          %v2971 = vadd.f32 0.0, %v2970
          %v2972 = vpop.f32.mrf.mxu0
          %2973 = vdwg.mxu0
          %2974 = vmatpush.bf16.msra.mxu0 %v1989
          %2975 = vmatpush.bf16.msra.mxu0 %v1985
          %2976 = vmatpush.bf16.msra.mxu0 %v1981
          %2977 = vmatpush.bf16.msra.mxu0 %v1977
          %2978 = vmatpush.bf16.msra.mxu0 %v1973
          %2979 = vmatpush.bf16.msra.mxu0 %v1969
          %2980 = vmatpush.bf16.msra.mxu0 %v1965
          %2981 = vmatpush.bf16.msra.mxu0 %v1961
          %2982 = vmatmul.bf16.gmra.mxu0 %v2960
          %v2983 = vpop.f32.mrf.mxu0
          %v2984 = vadd.f32 0.0, %v2983
          %v2985 = vpop.f32.mrf.mxu0
          %2986 = vdwg.mxu0
          %2987 = vmatpush.bf16.msra.mxu0 %v1990
          %2988 = vmatpush.bf16.msra.mxu0 %v1986
          %2989 = vmatpush.bf16.msra.mxu0 %v1982
          %2990 = vmatpush.bf16.msra.mxu0 %v1978
          %2991 = vmatpush.bf16.msra.mxu0 %v1974
          %2992 = vmatpush.bf16.msra.mxu0 %v1970
          %2993 = vmatpush.bf16.msra.mxu0 %v1966
          %2994 = vmatpush.bf16.msra.mxu0 %v1962
          %2995 = vmatmul.bf16.gmra.mxu0 %v2960
          %v2996 = vpop.f32.mrf.mxu0
          %v2997 = vadd.f32 0.0, %v2996
          %v2998 = vpop.f32.mrf.mxu0
          %2999 = vdwg.mxu0
          %3000 = vmatpush.bf16.msra.mxu0 %v1991
          %3001 = vmatpush.bf16.msra.mxu0 %v1987
          %3002 = vmatpush.bf16.msra.mxu0 %v1983
          %3003 = vmatpush.bf16.msra.mxu0 %v1979
          %3004 = vmatpush.bf16.msra.mxu0 %v1975
          %3005 = vmatpush.bf16.msra.mxu0 %v1971
          %3006 = vmatpush.bf16.msra.mxu0 %v1967
          %3007 = vmatpush.bf16.msra.mxu0 %v1963
          %3008 = vmatmul.bf16.gmra.mxu0 %v2960
          %v3009 = vpop.f32.mrf.mxu0
          %v3010 = vadd.f32 0.0, %v3009
          %v3011 = vpop.f32.mrf.mxu0
          %3012 = vdwg.mxu0
          %v3013 = vadd.f32 %v2918, %v2971
          %v3014 = vadd.f32 %v2931, %v2984
          %v3015 = vadd.f32 %v2944, %v2997
          %v3016 = vadd.f32 %v2957, %v3010
          %v3017 = vmul.f32 %v3013, 0.5
          %v3018 = vtanh.pop %v3017
          %v3019 = vadd.f32 %v3018, 1.0
          %v3020 = vmul.f32 %v3019, 0.5
          %v3021 = vmul.f32 %v3014, 0.5
          %v3022 = vtanh.pop %v3021
          %v3023 = vadd.f32 %v3022, 1.0
          %v3024 = vmul.f32 %v3023, 0.5
          %v3025 = vtanh.pop %v3015
          %v3026 = vmul.f32 %v3016, 0.5
          %v3027 = vtanh.pop %v3026
          %v3028 = vadd.f32 %v3027, 1.0
          %v3029 = vmul.f32 %v3028, 0.5
          %v3030 = vmul.f32 %v3024, %v2899
          %v3031 = vmul.f32 %v3020, %v3025
          %v3032 = vadd.f32 %v3030, %v3031
          %v3033 = vtanh.pop %v3032
          %v3034 = vmul.f32 %v3029, %v3033
          %3035 = vst [vmem:[%s368] sm:$0xff] %v3034
          %3036 = vst [vmem:[#allocation2] sm:$0xff] %v3034
          %3037 = vst [vmem:[#allocation3] sm:$0xff] %v3032
        $region52: #{encoder_forward.1} parent=35 // pred_fallthru
          _
        // Predicated region
        $region53: #{encoder_forward.1} parent=35 // pred_check
          %p3038 = pneg %p415
        $region54: #{encoder_forward.1} parent=35 // pred_check_branch
          %3040 = sbr.rel (%p3038) target = $region56
        $region55: #{encoder_forward.1} parent=35 // pred_region
          %v3041 = vld [vmem:[#allocation2] sm:$0xff]
          %3042 = vst [vmem:[%s375] sm:$0xff] %v3041
          %v3043 = vld [vmem:[#allocation3] sm:$0xff]
          %3044 = vst [vmem:[%s382] sm:$0xff] %v3043
        $region56: #{encoder_forward.1} parent=35 // pred_fallthru
          _
        %s3045 = sand.u32 %s173, 1
        %s3046 = scalar_lea.sflag [#allocation6], %s3045
        %s3047 = sand.u32 %s173, 1
        %s3048 = smul.addr %s3047, 64
        %s3049 = scalar_lea.vmem [#allocation7], %s3048
        %s3050 = sand.u32 %s27, 1
        %s3051 = scalar_lea.sflag [#allocation9], %s3050
        %s3052 = sand.u32 %s199, 1
        %s3053 = smul.addr %s3052, 8
        %s3054 = scalar_lea.vmem [#allocation8], %s3053
        %s3055 = sand.u32 %s27, 1
        %s3056 = scalar_lea.sflag [#allocation9], %s3055
        %s3057 = sand.u32 %s225, 1
        %s3058 = smul.addr %s3057, 8
        %s3059 = scalar_lea.vmem [#allocation10], %s3058
        // Predicated region
        $region57: #{encoder_forward.1} parent=35 // pred_check
          %p3060 = pneg %p183
        $region58: #{encoder_forward.1} parent=35 // pred_check_branch
          %3062 = sbr.rel (%p3060) target = $region60
        $region59: #{encoder_forward.1} parent=35 // pred_region
          %s3063 = ssub.s32 1, %s31
          %s3064 = smul.u32 %s3063, %s32
          %s3065 = ssub.s32 0, %s32
          %s3066 = smul.u32 %s31, %s3065
          %s3067 = sadd.s32 %s3064, %s3066
          %s3068 = smul.u32 8, %s3067
          %3070 = vsyncadd %s3046, 0
          %s3071 = smul.addr %s3068, 2
          %s3072 = sadd.s32 %s31, %s3071
          %s3073 = smul.addr %s3072, 8
          %s3074 = scalar_lea.hbm %s4, %s3073
          %s3075 = sshll.u32 %s3049, 4
          %s3076 = int_to_ptr.vmem [resolvable:$true] %s3075
          %s3077 = sshll.u32 %s3074, 4
          %s3078 = int_to_ptr.hbm [resolvable:$true] %s3077
          %3083 = dma.vmem_to_hbm [thread:$0]  %s3076, 1024, %s3078, %s3046, 128, 256, 8
        $region60: #{encoder_forward.1} parent=35 // pred_fallthru
          _
        // Predicated region
        $region61: #{encoder_forward.1} parent=35 // pred_check
          %p3084 = pneg %p209
        $region62: #{encoder_forward.1} parent=35 // pred_check_branch
          %3086 = sbr.rel (%p3084) target = $region64
        $region63: #{encoder_forward.1} parent=35 // pred_region
          %3088 = vsyncadd %s3051, 0
          %s3089 = smul.addr %s31, 8
          %s3090 = scalar_lea.hbm %s5, %s3089
          %s3092 = sshll.u32 %s3054, 4
          %s3093 = int_to_ptr.vmem [resolvable:$true] %s3092
          %s3094 = sshll.u32 %s3090, 4
          %s3095 = int_to_ptr.hbm [resolvable:$true] %s3094
          %3097 = dma.vmem_to_hbm [thread:$0]  %s3093, 128, %s3095, %s3051
        $region64: #{encoder_forward.1} parent=35 // pred_fallthru
          _
        // Predicated region
        $region65: #{encoder_forward.1} parent=35 // pred_check
          %p3098 = pneg %p235
        $region66: #{encoder_forward.1} parent=35 // pred_check_branch
          %3100 = sbr.rel (%p3098) target = $region68
        $region67: #{encoder_forward.1} parent=35 // pred_region
          %3102 = vsyncadd %s3056, 0
          %s3103 = smul.addr %s31, 8
          %s3104 = scalar_lea.hbm %s6, %s3103
          %s3106 = sshll.u32 %s3059, 4
          %s3107 = int_to_ptr.vmem [resolvable:$true] %s3106
          %s3108 = sshll.u32 %s3104, 4
          %s3109 = int_to_ptr.hbm [resolvable:$true] %s3108
          %3111 = dma.vmem_to_hbm [thread:$0]  %s3107, 128, %s3109, %s3056
        $region68: #{encoder_forward.1} parent=35 // pred_fallthru
          _
      $region36: #{encoder_forward.1} parent=5 // pred_fallthru
        _
      %p3112 = scmp.le.s32.totalorder 2, %s22
      // Predicated region
      $region69: #{encoder_forward.1} parent=5 // pred_check
        %p3113 = pneg %p3112
      $region70: #{encoder_forward.1} parent=5 // pred_check_branch
        %3115 = sbr.rel (%p3113) target = $region72
      $region71: #{encoder_forward.1} parent=5 // pred_region
        %s3116 = ssub.s32 %s22, 2
        // Predicated region
        $region73: #{encoder_forward.1} parent=71 // pred_check
          %p3117 = pneg %p189
        $region74: #{encoder_forward.1} parent=71 // pred_check_branch
          %3119 = sbr.rel (%p3117) target = $region76
        $region75: #{encoder_forward.1} parent=71 // pred_region
          %s3120 = sand.u32 %s174, 1
          %s3121 = scalar_lea.sflag [#allocation6], %s3120
          %s3122 = sand.u32 %s174, 1
          %s3123 = smul.addr %s3122, 64
          %s3124 = scalar_lea.vmem [#allocation7], %s3123
          %3126 = dma.done %s3121, 1024
        $region76: #{encoder_forward.1} parent=71 // pred_fallthru
          _
        // Predicated region
        $region77: #{encoder_forward.1} parent=71 // pred_check
          %p3127 = pneg %p215
        $region78: #{encoder_forward.1} parent=71 // pred_check_branch
          %3129 = sbr.rel (%p3127) target = $region80
        $region79: #{encoder_forward.1} parent=71 // pred_region
          %s3130 = sand.u32 %s28, 1
          %s3131 = scalar_lea.sflag [#allocation9], %s3130
          %s3132 = sand.u32 %s200, 1
          %s3133 = smul.addr %s3132, 8
          %s3134 = scalar_lea.vmem [#allocation8], %s3133
          %3136 = dma.done %s3131, 128
        $region80: #{encoder_forward.1} parent=71 // pred_fallthru
          _
        // Predicated region
        $region81: #{encoder_forward.1} parent=71 // pred_check
          %p3137 = pneg %p241
        $region82: #{encoder_forward.1} parent=71 // pred_check_branch
          %3139 = sbr.rel (%p3137) target = $region84
        $region83: #{encoder_forward.1} parent=71 // pred_region
          %s3140 = sand.u32 %s28, 1
          %s3141 = scalar_lea.sflag [#allocation9], %s3140
          %s3142 = sand.u32 %s226, 1
          %s3143 = smul.addr %s3142, 8
          %s3144 = scalar_lea.vmem [#allocation10], %s3143
          %3146 = dma.done %s3141, 128
        $region84: #{encoder_forward.1} parent=71 // pred_fallthru
          _
      $region72: #{encoder_forward.1} parent=5 // pred_fallthru
        _
    $region6: #{encoder_forward.1} parent=1 // loop_footer
      %s26 = sadd.s32 1, %s22
    $region7: #{encoder_forward.1} parent=1 // loop_footer_branch
      %21 = sbr.rel target = $region3
    $region8: #{encoder_forward.1} parent=1 // loop_exit
      _
    %3147 = vsyncpa [#allocation5], 1
    %s3148 = scalar_lea.sflag [#allocation5], 1
    %3149 = vsyncpa %s3148, 1
    %3150 = vsyncpa [#allocation6], 1
    %s3151 = scalar_lea.sflag [#allocation6], 1
    %3152 = vsyncpa %s3151, 1
    %3153 = vsyncpa [#allocation9], 1
    %s3154 = scalar_lea.sflag [#allocation9], 1
    %3155 = vsyncpa %s3154, 1

</llo_original>
